<compile_context>
chip_gen: v7x
topology: tpu7x:2x2x1
jax: 0.10.0
libtpu: 0.0.40
codegen_flags: <defaults>
</compile_context>

<pallas_src>
import functools

import jax
import jax.numpy as jnp
from jax.experimental import pallas as pl
from jax.experimental.pallas import tpu as pltpu


_TAPS = tuple((kh, kw) for kh in range(3) for kw in range(3))


# -----------------------------------------------------------------------------
# The single fused kernel: one image per grid step.
# -----------------------------------------------------------------------------
def _tiny_convnet_kernel(
    x_ref,                      # (1, 18, 18, 3)   zero-padded NHWC input image
    w0_ref, s0_ref, b0_ref,     # (27, 16), (1, 16), (1, 16)
    w1_ref, s1_ref, b1_ref,     # (144, 32), (1, 32), (1, 32)
    w2_ref, s2_ref, b2_ref,     # (288, 64), (1, 64), (1, 64)
    wfc1_ref, bfc1_ref,         # (1024, 128), (1, 128)  fc1 rows in p-major order
    wfc2_ref, bfc2_ref,         # (128, NC), (1, NC)
    o_ref,                      # (1, 1, NC)
    a0_ref,                     # VMEM (16, 16, 27)  conv0 im2col
    xp1_ref,                    # VMEM (10, 10, 16)  padded conv1 input
    a1_ref,                     # VMEM (8, 8, 144)   conv1 im2col
    xp2_ref,                    # VMEM (6, 6, 32)    padded conv2 input
    a2_ref,                     # VMEM (16, 288)     conv2 im2col
    flat_ref,                   # VMEM (1, 1024)     flattened features
):
    f32 = jnp.float32

    # ---------------- conv0: 3x3, 3 -> 16, pad=1, on 16x16 -------------------
    # Fold the 9 taps into the matmul K dimension: A0 is (H*W, 9*Cin) = (256, 27).
    for t, (kh, kw) in enumerate(_TAPS):
        a0_ref[:, :, t * 3:(t + 1) * 3] = x_ref[0, kh:kh + 16, kw:kw + 16, :]
    a0 = a0_ref[...].reshape(256, 27)
    y0 = jnp.dot(a0, w0_ref[...], preferred_element_type=f32)
    y0 = jnp.maximum(y0 * s0_ref[...] + b0_ref[...], 0.0)        # (256, 16)

    # ---------------- maxpool 2x2: 16x16 -> 8x8 ------------------------------
    # Pool H by regrouping rows (h*16+w) -> (ho, dh, w); pool W column-wise and
    # write straight into the zero-padded conv1 input scratch.
    xp1_ref[...] = jnp.zeros_like(xp1_ref)
    y0r = y0.reshape(8, 2, 16, 16)
    yh0 = jnp.maximum(y0r[:, 0], y0r[:, 1])                      # (8, 16, 16)
    for wo in range(8):
        xp1_ref[1:9, 1 + wo, :] = jnp.maximum(yh0[:, 2 * wo, :],
                                              yh0[:, 2 * wo + 1, :])

    # ---------------- conv1: 3x3, 16 -> 32, pad=1, on 8x8 --------------------
    for t, (kh, kw) in enumerate(_TAPS):
        a1_ref[:, :, t * 16:(t + 1) * 16] = xp1_ref[kh:kh + 8, kw:kw + 8, :]
    a1 = a1_ref[...].reshape(64, 144)
    y1 = jnp.dot(a1, w1_ref[...], preferred_element_type=f32)
    y1 = jnp.maximum(y1 * s1_ref[...] + b1_ref[...], 0.0)        # (64, 32)

    # ---------------- maxpool 2x2: 8x8 -> 4x4 --------------------------------
    xp2_ref[...] = jnp.zeros_like(xp2_ref)
    y1r = y1.reshape(4, 2, 8, 32)
    yh1 = jnp.maximum(y1r[:, 0], y1r[:, 1])                      # (4, 8, 32)
    for wo in range(4):
        xp2_ref[1:5, 1 + wo, :] = jnp.maximum(yh1[:, 2 * wo, :],
                                              yh1[:, 2 * wo + 1, :])

    # ---------------- conv2: 3x3, 32 -> 64, pad=1, on 4x4 --------------------
    # The 4-row spatial blocks are below the 8-sublane tile, so assemble the
    # (16, 288) im2col slab with per-row copies instead of a value reshape.
    for t, (kh, kw) in enumerate(_TAPS):
        for h in range(4):
            a2_ref[4 * h:4 * h + 4, t * 32:(t + 1) * 32] = (
                xp2_ref[kh + h, kw:kw + 4, :])
    y2 = jnp.dot(a2_ref[...], w2_ref[...], preferred_element_type=f32)
    y2 = jnp.maximum(y2 * s2_ref[...] + b2_ref[...], 0.0)        # (16, 64)
    # AdaptiveAvgPool2d((4, 4)) applied to a 4x4 feature map is the identity.

    # ------------- classifier: Linear(1024,128) -> ReLU -> Linear(128,NC) ----
    # Flatten to a single lane-dense (1, 1024) row; the PyTorch NCHW flatten
    # order (c*16 + p) is folded into the fc1 weight permutation host-side.
    for p in range(16):
        flat_ref[0:1, p * 64:(p + 1) * 64] = y2[p:p + 1, :]
    h1 = jnp.dot(flat_ref[...], wfc1_ref[...], preferred_element_type=f32)
    h1 = jnp.maximum(h1 + bfc1_ref[...], 0.0)                    # (1, 128)
    # TODO(synk): Dropout(0.2) is the identity in eval mode; training-mode
    # dropout (and BatchNorm batch statistics) are not implemented.
    out = jnp.dot(h1, wfc2_ref[...], preferred_element_type=f32) + bfc2_ref[...]
    o_ref[0] = out.astype(o_ref.dtype)


# -----------------------------------------------------------------------------
# Wrapper: layout prep (transpose/pad/weight reshapes) + the single pallas_call.
# -----------------------------------------------------------------------------
def tiny_convnet_forward(params, x_nchw):
    """Eval-mode TinyConvNet forward.  x_nchw: (N, 3, 16, 16) float32."""
    N, C, H, W = x_nchw.shape
    # TODO(synk): the fused kernel is specialized to 16x16x3 inputs (the size at
    # which AdaptiveAvgPool2d((4, 4)) is the identity); other sizes unsupported.
    assert (C, H, W) == (3, 16, 16), "fused kernel expects (N, 3, 16, 16) input"
    nc = params["fc2_w"].shape[1]

    x = jnp.transpose(x_nchw, (0, 2, 3, 1))                       # NHWC
    xpad = jnp.pad(x, ((0, 0), (1, 1), (1, 1), (0, 0)))           # (N, 18, 18, 3)

    # Conv weights reshaped so the 9 taps live in the matmul K dimension.
    w0 = params["conv0_w"].reshape(9 * 3, 16)
    w1 = params["conv1_w"].reshape(9 * 16, 32)
    w2 = params["conv2_w"].reshape(9 * 32, 64)
    s0 = params["conv0_scale"].reshape(1, 16)
    b0 = params["conv0_bias"].reshape(1, 16)
    s1 = params["conv1_scale"].reshape(1, 32)
    b1 = params["conv1_bias"].reshape(1, 32)
    s2 = params["conv2_scale"].reshape(1, 64)
    b2 = params["conv2_bias"].reshape(1, 64)
    # fc1 rows permuted from PyTorch flatten order (c*16 + p) to the kernel's
    # spatial-major flatten order (p*64 + c).
    wfc1 = params["fc1_w"].reshape(64, 16, 128).transpose(1, 0, 2).reshape(1024, 128)
    bfc1 = params["fc1_b"].reshape(1, 128)
    wfc2 = params["fc2_w"]
    bfc2 = params["fc2_b"].reshape(1, nc)

    out = pl.pallas_call(
        _tiny_convnet_kernel,
        out_shape=jax.ShapeDtypeStruct((N, 1, nc), x_nchw.dtype),
        grid_spec=pltpu.PrefetchScalarGridSpec(
            num_scalar_prefetch=0,
            grid=(N,),
            in_specs=[
                pl.BlockSpec((1, 18, 18, 3), lambda n: (n, 0, 0, 0)),
                pl.BlockSpec((27, 16), lambda n: (0, 0)),
                pl.BlockSpec((1, 16), lambda n: (0, 0)),
                pl.BlockSpec((1, 16), lambda n: (0, 0)),
                pl.BlockSpec((144, 32), lambda n: (0, 0)),
                pl.BlockSpec((1, 32), lambda n: (0, 0)),
                pl.BlockSpec((1, 32), lambda n: (0, 0)),
                pl.BlockSpec((288, 64), lambda n: (0, 0)),
                pl.BlockSpec((1, 64), lambda n: (0, 0)),
                pl.BlockSpec((1, 64), lambda n: (0, 0)),
                pl.BlockSpec((1024, 128), lambda n: (0, 0)),
                pl.BlockSpec((1, 128), lambda n: (0, 0)),
                pl.BlockSpec((128, nc), lambda n: (0, 0)),
                pl.BlockSpec((1, nc), lambda n: (0, 0)),
            ],
            out_specs=pl.BlockSpec((1, 1, nc), lambda n: (n, 0, 0)),
            scratch_shapes=[
                pltpu.VMEM((16, 16, 27), jnp.float32),   # conv0 im2col
                pltpu.VMEM((10, 10, 16), jnp.float32),   # padded conv1 input
                pltpu.VMEM((8, 8, 144), jnp.float32),    # conv1 im2col
                pltpu.VMEM((6, 6, 32), jnp.float32),     # padded conv2 input
                pltpu.VMEM((16, 288), jnp.float32),      # conv2 im2col
                pltpu.VMEM((1, 1024), jnp.float32),      # flattened features
            ],
        ),
        compiler_params=pltpu.CompilerParams(
            dimension_semantics=("parallel",)),
    )(xpad, w0, s0, b0, w1, s1, b1, w2, s2, b2, wfc1, bfc1, wfc2, bfc2)
    return out.reshape(N, nc)


# -----------------------------------------------------------------------------
# Deterministic synthetic parameters (BN folded to scale/bias, eval mode).
# -----------------------------------------------------------------------------
def init_params(key, input_channels=3, num_classes=2):
    eps = 1e-5
    dims = [(input_channels, 16), (16, 32), (32, 64)]
    keys = iter(jax.random.split(key, 32))
    params = {}
    for li, (cin, cout) in enumerate(dims):
        w = jax.random.normal(next(keys), (3, 3, cin, cout), jnp.float32) * 0.1
        b = jax.random.normal(next(keys), (cout,), jnp.float32) * 0.05
        gamma = jax.random.uniform(next(keys), (cout,), jnp.float32, 0.5, 1.5)
        beta = jax.random.normal(next(keys), (cout,), jnp.float32) * 0.05
        r_mean = jax.random.normal(next(keys), (cout,), jnp.float32) * 0.05
        r_var = jax.random.uniform(next(keys), (cout,), jnp.float32, 0.5, 1.5)
        scale = gamma / jnp.sqrt(r_var + eps)
        params[f"conv{li}_w"] = w
        params[f"conv{li}_scale"] = scale
        params[f"conv{li}_bias"] = (b - r_mean) * scale + beta
    params["fc1_w"] = jax.random.normal(next(keys), (1024, 128), jnp.float32) * 0.03
    params["fc1_b"] = jax.random.normal(next(keys), (128,), jnp.float32) * 0.05
    params["fc2_w"] = jax.random.normal(next(keys), (128, num_classes), jnp.float32) * 0.05
    params["fc2_b"] = jax.random.normal(next(keys), (num_classes,), jnp.float32) * 0.05
    return params


# -----------------------------------------------------------------------------
# Plain-JAX reference (independent path) for a correctness cross-check.
# -----------------------------------------------------------------------------
def tiny_convnet_reference(params, x_nchw):
    x = jnp.transpose(x_nchw, (0, 2, 3, 1))

    def conv_bn_relu(x, w, s, b):
        y = jax.lax.conv_general_dilated(
            x, w, window_strides=(1, 1), padding=((1, 1), (1, 1)),
            dimension_numbers=("NHWC", "HWIO", "NHWC"))
        return jnp.maximum(y * s + b, 0.0)

    def max_pool_2x2(x):
        n, h, w, c = x.shape
        return jnp.max(x.reshape(n, h // 2, 2, w // 2, 2, c), axis=(2, 4))

    x = max_pool_2x2(conv_bn_relu(x, params["conv0_w"],
                                  params["conv0_scale"], params["conv0_bias"]))
    x = max_pool_2x2(conv_bn_relu(x, params["conv1_w"],
                                  params["conv1_scale"], params["conv1_bias"]))
    x = conv_bn_relu(x, params["conv2_w"],
                     params["conv2_scale"], params["conv2_bias"])
    # AdaptiveAvgPool2d((4,4)) on 4x4 is identity; nn.Flatten flattens (C, H, W).
    n = x.shape[0]
    f = jnp.transpose(x, (0, 3, 1, 2)).reshape(n, -1)
    h = jnp.maximum(f @ params["fc1_w"] + params["fc1_b"], 0.0)
    return h @ params["fc2_w"] + params["fc2_b"]


if __name__ == "__main__":
    key = jax.random.PRNGKey(0)
    pkey, xkey = jax.random.split(key)
    params = init_params(pkey, input_channels=3, num_classes=2)
    x = jax.random.normal(xkey, (2, 3, 16, 16), jnp.float32)   # NCHW like PyTorch

    fwd = jax.jit(functools.partial(tiny_convnet_forward, params))
    out = fwd(x)
    jax.block_until_ready(out)
    assert out.shape == (2, 2) and out.dtype == jnp.float32

    ref = jax.jit(functools.partial(tiny_convnet_reference, params))(x)
    jax.block_until_ready(ref)
    assert bool(jnp.allclose(out, ref, rtol=1e-3, atol=1e-3)), (out, ref)

    print("KERNEL_OK")
</pallas_src>

<mosaic_0001>
module attributes {stable_mosaic.version = 11 : i64} {
  func.func @_tiny_convnet_kernel(%arg0: i32, %arg1: memref<1x18x18x3xf32, #tpu.memory_space<vmem>>, %arg2: memref<27x16xf32, #tpu.memory_space<vmem>>, %arg3: memref<1x16xf32, #tpu.memory_space<vmem>>, %arg4: memref<1x16xf32, #tpu.memory_space<vmem>>, %arg5: memref<144x32xf32, #tpu.memory_space<vmem>>, %arg6: memref<1x32xf32, #tpu.memory_space<vmem>>, %arg7: memref<1x32xf32, #tpu.memory_space<vmem>>, %arg8: memref<288x64xf32, #tpu.memory_space<vmem>>, %arg9: memref<1x64xf32, #tpu.memory_space<vmem>>, %arg10: memref<1x64xf32, #tpu.memory_space<vmem>>, %arg11: memref<1024x128xf32, #tpu.memory_space<vmem>>, %arg12: memref<1x128xf32, #tpu.memory_space<vmem>>, %arg13: memref<128x2xf32, #tpu.memory_space<vmem>>, %arg14: memref<1x2xf32, #tpu.memory_space<vmem>>, %arg15: memref<1x1x2xf32, #tpu.memory_space<vmem>>, %arg16: memref<16x16x27xf32, #tpu.memory_space<vmem>>, %arg17: memref<10x10x16xf32, #tpu.memory_space<vmem>>, %arg18: memref<8x8x144xf32, #tpu.memory_space<vmem>>, %arg19: memref<6x6x32xf32, #tpu.memory_space<vmem>>, %arg20: memref<16x288xf32, #tpu.memory_space<vmem>>, %arg21: memref<1x1024xf32, #tpu.memory_space<vmem>>) attributes {dimension_semantics = [#tpu.dimension_semantics<parallel>], iteration_bounds = array<i64: 2>, scalar_prefetch = 0 : i64, scratch_operands = 6 : i64, tpu.core_type = #tpu.core_type<tc>, window_params = [{transform_indices = @transform_0, window_bounds = array<i64: 1, 18, 18, 3>}, {pipeline_mode = #tpu.pipeline_mode<synchronous>, transform_indices = @transform_1, window_bounds = array<i64: 27, 16>}, {pipeline_mode = #tpu.pipeline_mode<synchronous>, transform_indices = @transform_2, window_bounds = array<i64: 1, 16>}, {pipeline_mode = #tpu.pipeline_mode<synchronous>, transform_indices = @transform_3, window_bounds = array<i64: 1, 16>}, {pipeline_mode = #tpu.pipeline_mode<synchronous>, transform_indices = @transform_4, window_bounds = array<i64: 144, 32>}, {pipeline_mode = #tpu.pipeline_mode<synchronous>, transform_indices = @transform_5, window_bounds = array<i64: 1, 32>}, {pipeline_mode = #tpu.pipeline_mode<synchronous>, transform_indices = @transform_6, window_bounds = array<i64: 1, 32>}, {pipeline_mode = #tpu.pipeline_mode<synchronous>, transform_indices = @transform_7, window_bounds = array<i64: 288, 64>}, {pipeline_mode = #tpu.pipeline_mode<synchronous>, transform_indices = @transform_8, window_bounds = array<i64: 1, 64>}, {pipeline_mode = #tpu.pipeline_mode<synchronous>, transform_indices = @transform_9, window_bounds = array<i64: 1, 64>}, {pipeline_mode = #tpu.pipeline_mode<synchronous>, transform_indices = @transform_10, window_bounds = array<i64: 1024, 128>}, {pipeline_mode = #tpu.pipeline_mode<synchronous>, transform_indices = @transform_11, window_bounds = array<i64: 1, 128>}, {pipeline_mode = #tpu.pipeline_mode<synchronous>, transform_indices = @transform_12, window_bounds = array<i64: 128, 2>}, {pipeline_mode = #tpu.pipeline_mode<synchronous>, transform_indices = @transform_13, window_bounds = array<i64: 1, 2>}, {transform_indices = @transform_14, window_bounds = array<i64: 1, 1, 2>}]} {
    %c0 = arith.constant 0 : index
    %c0_0 = arith.constant 0 : index
    %c0_1 = arith.constant 0 : index
    %c0_2 = arith.constant 0 : index
    %0 = vector.load %arg1[%c0, %c0_0, %c0_1, %c0_2] : memref<1x18x18x3xf32, #tpu.memory_space<vmem>>, vector<1x16x16x3xf32>
    %1 = vector.shape_cast %0 : vector<1x16x16x3xf32> to vector<16x16x3xf32>
    %c0_3 = arith.constant 0 : index
    %c0_4 = arith.constant 0 : index
    %c0_5 = arith.constant 0 : index
    %2 = vector.load %arg16[%c0_3, %c0_4, %c0_5] : memref<16x16x27xf32, #tpu.memory_space<vmem>>, vector<16x16x3xf32>
    tpu.vector_store %arg16[%c0_3, %c0_4, %c0_5], %1 {strides = array<i32>} : memref<16x16x27xf32, #tpu.memory_space<vmem>>, vector<16x16x3xf32>,
    %c0_6 = arith.constant 0 : index
    %c0_7 = arith.constant 0 : index
    %c1 = arith.constant 1 : index
    %c0_8 = arith.constant 0 : index
    %3 = vector.load %arg1[%c0_6, %c0_7, %c1, %c0_8] : memref<1x18x18x3xf32, #tpu.memory_space<vmem>>, vector<1x16x16x3xf32>
    %4 = vector.shape_cast %3 : vector<1x16x16x3xf32> to vector<16x16x3xf32>
    %c0_9 = arith.constant 0 : index
    %c0_10 = arith.constant 0 : index
    %c3 = arith.constant 3 : index
    %5 = vector.load %arg16[%c0_9, %c0_10, %c3] : memref<16x16x27xf32, #tpu.memory_space<vmem>>, vector<16x16x3xf32>
    tpu.vector_store %arg16[%c0_9, %c0_10, %c3], %4 {strides = array<i32>} : memref<16x16x27xf32, #tpu.memory_space<vmem>>, vector<16x16x3xf32>,
    %c0_11 = arith.constant 0 : index
    %c0_12 = arith.constant 0 : index
    %c2 = arith.constant 2 : index
    %c0_13 = arith.constant 0 : index
    %6 = vector.load %arg1[%c0_11, %c0_12, %c2, %c0_13] : memref<1x18x18x3xf32, #tpu.memory_space<vmem>>, vector<1x16x16x3xf32>
    %7 = vector.shape_cast %6 : vector<1x16x16x3xf32> to vector<16x16x3xf32>
    %c0_14 = arith.constant 0 : index
    %c0_15 = arith.constant 0 : index
    %c6 = arith.constant 6 : index
    %8 = vector.load %arg16[%c0_14, %c0_15, %c6] : memref<16x16x27xf32, #tpu.memory_space<vmem>>, vector<16x16x3xf32>
    tpu.vector_store %arg16[%c0_14, %c0_15, %c6], %7 {strides = array<i32>} : memref<16x16x27xf32, #tpu.memory_space<vmem>>, vector<16x16x3xf32>,
    %c0_16 = arith.constant 0 : index
    %c1_17 = arith.constant 1 : index
    %c0_18 = arith.constant 0 : index
    %c0_19 = arith.constant 0 : index
    %9 = vector.load %arg1[%c0_16, %c1_17, %c0_18, %c0_19] : memref<1x18x18x3xf32, #tpu.memory_space<vmem>>, vector<1x16x16x3xf32>
    %10 = vector.shape_cast %9 : vector<1x16x16x3xf32> to vector<16x16x3xf32>
    %c0_20 = arith.constant 0 : index
    %c0_21 = arith.constant 0 : index
    %c9 = arith.constant 9 : index
    %11 = vector.load %arg16[%c0_20, %c0_21, %c9] : memref<16x16x27xf32, #tpu.memory_space<vmem>>, vector<16x16x3xf32>
    tpu.vector_store %arg16[%c0_20, %c0_21, %c9], %10 {strides = array<i32>} : memref<16x16x27xf32, #tpu.memory_space<vmem>>, vector<16x16x3xf32>,
    %c0_22 = arith.constant 0 : index
    %c1_23 = arith.constant 1 : index
    %c1_24 = arith.constant 1 : index
    %c0_25 = arith.constant 0 : index
    %12 = vector.load %arg1[%c0_22, %c1_23, %c1_24, %c0_25] : memref<1x18x18x3xf32, #tpu.memory_space<vmem>>, vector<1x16x16x3xf32>
    %13 = vector.shape_cast %12 : vector<1x16x16x3xf32> to vector<16x16x3xf32>
    %c0_26 = arith.constant 0 : index
    %c0_27 = arith.constant 0 : index
    %c12 = arith.constant 12 : index
    %14 = vector.load %arg16[%c0_26, %c0_27, %c12] : memref<16x16x27xf32, #tpu.memory_space<vmem>>, vector<16x16x3xf32>
    tpu.vector_store %arg16[%c0_26, %c0_27, %c12], %13 {strides = array<i32>} : memref<16x16x27xf32, #tpu.memory_space<vmem>>, vector<16x16x3xf32>,
    %c0_28 = arith.constant 0 : index
    %c1_29 = arith.constant 1 : index
    %c2_30 = arith.constant 2 : index
    %c0_31 = arith.constant 0 : index
    %15 = vector.load %arg1[%c0_28, %c1_29, %c2_30, %c0_31] : memref<1x18x18x3xf32, #tpu.memory_space<vmem>>, vector<1x16x16x3xf32>
    %16 = vector.shape_cast %15 : vector<1x16x16x3xf32> to vector<16x16x3xf32>
    %c0_32 = arith.constant 0 : index
    %c0_33 = arith.constant 0 : index
    %c15 = arith.constant 15 : index
    %17 = vector.load %arg16[%c0_32, %c0_33, %c15] : memref<16x16x27xf32, #tpu.memory_space<vmem>>, vector<16x16x3xf32>
    tpu.vector_store %arg16[%c0_32, %c0_33, %c15], %16 {strides = array<i32>} : memref<16x16x27xf32, #tpu.memory_space<vmem>>, vector<16x16x3xf32>,
    %c0_34 = arith.constant 0 : index
    %c2_35 = arith.constant 2 : index
    %c0_36 = arith.constant 0 : index
    %c0_37 = arith.constant 0 : index
    %18 = vector.load %arg1[%c0_34, %c2_35, %c0_36, %c0_37] : memref<1x18x18x3xf32, #tpu.memory_space<vmem>>, vector<1x16x16x3xf32>
    %19 = vector.shape_cast %18 : vector<1x16x16x3xf32> to vector<16x16x3xf32>
    %c0_38 = arith.constant 0 : index
    %c0_39 = arith.constant 0 : index
    %c18 = arith.constant 18 : index
    %20 = vector.load %arg16[%c0_38, %c0_39, %c18] : memref<16x16x27xf32, #tpu.memory_space<vmem>>, vector<16x16x3xf32>
    tpu.vector_store %arg16[%c0_38, %c0_39, %c18], %19 {strides = array<i32>} : memref<16x16x27xf32, #tpu.memory_space<vmem>>, vector<16x16x3xf32>,
    %c0_40 = arith.constant 0 : index
    %c2_41 = arith.constant 2 : index
    %c1_42 = arith.constant 1 : index
    %c0_43 = arith.constant 0 : index
    %21 = vector.load %arg1[%c0_40, %c2_41, %c1_42, %c0_43] : memref<1x18x18x3xf32, #tpu.memory_space<vmem>>, vector<1x16x16x3xf32>
    %22 = vector.shape_cast %21 : vector<1x16x16x3xf32> to vector<16x16x3xf32>
    %c0_44 = arith.constant 0 : index
    %c0_45 = arith.constant 0 : index
    %c21 = arith.constant 21 : index
    %23 = vector.load %arg16[%c0_44, %c0_45, %c21] : memref<16x16x27xf32, #tpu.memory_space<vmem>>, vector<16x16x3xf32>
    tpu.vector_store %arg16[%c0_44, %c0_45, %c21], %22 {strides = array<i32>} : memref<16x16x27xf32, #tpu.memory_space<vmem>>, vector<16x16x3xf32>,
    %c0_46 = arith.constant 0 : index
    %c2_47 = arith.constant 2 : index
    %c2_48 = arith.constant 2 : index
    %c0_49 = arith.constant 0 : index
    %24 = vector.load %arg1[%c0_46, %c2_47, %c2_48, %c0_49] : memref<1x18x18x3xf32, #tpu.memory_space<vmem>>, vector<1x16x16x3xf32>
    %25 = vector.shape_cast %24 : vector<1x16x16x3xf32> to vector<16x16x3xf32>
    %c0_50 = arith.constant 0 : index
    %c0_51 = arith.constant 0 : index
    %c24 = arith.constant 24 : index
    %26 = vector.load %arg16[%c0_50, %c0_51, %c24] : memref<16x16x27xf32, #tpu.memory_space<vmem>>, vector<16x16x3xf32>
    tpu.vector_store %arg16[%c0_50, %c0_51, %c24], %25 {strides = array<i32>} : memref<16x16x27xf32, #tpu.memory_space<vmem>>, vector<16x16x3xf32>,
    %c0_52 = arith.constant 0 : index
    %c0_53 = arith.constant 0 : index
    %c0_54 = arith.constant 0 : index
    %27 = vector.load %arg16[%c0_52, %c0_53, %c0_54] : memref<16x16x27xf32, #tpu.memory_space<vmem>>, vector<16x16x27xf32>
    %28 = vector.shape_cast %27 : vector<16x16x27xf32> to vector<256x27xf32>
    %c0_55 = arith.constant 0 : index
    %c0_56 = arith.constant 0 : index
    %29 = vector.load %arg2[%c0_55, %c0_56] : memref<27x16xf32, #tpu.memory_space<vmem>>, vector<27x16xf32>
    %cst = arith.constant dense<0.000000e+00> : vector<256x16xf32>
    %30 = tpu.matmul %28, %29, %cst {dimension_numbers = #tpu.dot_dimension_numbers<[1], [0], [0], [1], [0, 0, 1, 1], [], []>} : vector<256x27xf32>, vector<27x16xf32>, vector<256x16xf32> -> vector<256x16xf32>
    %c0_57 = arith.constant 0 : index
    %c0_58 = arith.constant 0 : index
    %31 = vector.load %arg3[%c0_57, %c0_58] : memref<1x16xf32, #tpu.memory_space<vmem>>, vector<1x16xf32>
    %32 = vector.broadcast %31 : vector<1x16xf32> to vector<256x16xf32>
    %33 = arith.mulf %30, %32 : vector<256x16xf32>
    %c0_59 = arith.constant 0 : index
    %c0_60 = arith.constant 0 : index
    %34 = vector.load %arg4[%c0_59, %c0_60] : memref<1x16xf32, #tpu.memory_space<vmem>>, vector<1x16xf32>
    %35 = vector.broadcast %34 : vector<1x16xf32> to vector<256x16xf32>
    %36 = arith.addf %33, %35 : vector<256x16xf32>
    %cst_61 = arith.constant 0.000000e+00 : f32
    %37 = vector.broadcast %cst_61 : f32 to vector<256x16xf32>
    %38 = arith.maximumf %36, %37 : vector<256x16xf32>
    %cst_62 = arith.constant 0.000000e+00 : f32
    %39 = vector.broadcast %cst_62 : f32 to vector<10x10x16xf32>
    %c0_63 = arith.constant 0 : index
    %c0_64 = arith.constant 0 : index
    %c0_65 = arith.constant 0 : index
    %40 = vector.load %arg17[%c0_63, %c0_64, %c0_65] : memref<10x10x16xf32, #tpu.memory_space<vmem>>, vector<10x10x16xf32>
    tpu.vector_store %arg17[%c0_63, %c0_64, %c0_65], %39 {strides = array<i32>} : memref<10x10x16xf32, #tpu.memory_space<vmem>>, vector<10x10x16xf32>,
    %41 = vector.shape_cast %38 : vector<256x16xf32> to vector<8x2x16x16xf32>
    %42 = vector.extract_strided_slice %41 {offsets = [0, 0, 0, 0], sizes = [8, 1, 16, 16], strides = [1, 1, 1, 1]} : vector<8x2x16x16xf32> to vector<8x1x16x16xf32>
    %43 = vector.shape_cast %42 : vector<8x1x16x16xf32> to vector<8x16x16xf32>
    %44 = vector.extract_strided_slice %41 {offsets = [0, 1, 0, 0], sizes = [8, 1, 16, 16], strides = [1, 1, 1, 1]} : vector<8x2x16x16xf32> to vector<8x1x16x16xf32>
    %45 = vector.shape_cast %44 : vector<8x1x16x16xf32> to vector<8x16x16xf32>
    %46 = arith.maximumf %43, %45 : vector<8x16x16xf32>
    %47 = vector.extract_strided_slice %46 {offsets = [0, 0, 0], sizes = [8, 1, 16], strides = [1, 1, 1]} : vector<8x16x16xf32> to vector<8x1x16xf32>
    %48 = vector.shape_cast %47 : vector<8x1x16xf32> to vector<8x16xf32>
    %49 = vector.extract_strided_slice %46 {offsets = [0, 1, 0], sizes = [8, 1, 16], strides = [1, 1, 1]} : vector<8x16x16xf32> to vector<8x1x16xf32>
    %50 = vector.shape_cast %49 : vector<8x1x16xf32> to vector<8x16xf32>
    %51 = arith.maximumf %48, %50 : vector<8x16xf32>
    %c1_66 = arith.constant 1 : index
    %c1_67 = arith.constant 1 : index
    %c0_68 = arith.constant 0 : index
    %52 = vector.load %arg17[%c1_66, %c1_67, %c0_68] : memref<10x10x16xf32, #tpu.memory_space<vmem>>, vector<8x1x16xf32>
    %53 = vector.shape_cast %52 : vector<8x1x16xf32> to vector<8x16xf32>
    %54 = vector.shape_cast %51 : vector<8x16xf32> to vector<8x1x16xf32>
    tpu.vector_store %arg17[%c1_66, %c1_67, %c0_68], %54 {strides = array<i32>} : memref<10x10x16xf32, #tpu.memory_space<vmem>>, vector<8x1x16xf32>,
    %55 = vector.extract_strided_slice %46 {offsets = [0, 2, 0], sizes = [8, 1, 16], strides = [1, 1, 1]} : vector<8x16x16xf32> to vector<8x1x16xf32>
    %56 = vector.shape_cast %55 : vector<8x1x16xf32> to vector<8x16xf32>
    %57 = vector.extract_strided_slice %46 {offsets = [0, 3, 0], sizes = [8, 1, 16], strides = [1, 1, 1]} : vector<8x16x16xf32> to vector<8x1x16xf32>
    %58 = vector.shape_cast %57 : vector<8x1x16xf32> to vector<8x16xf32>
    %59 = arith.maximumf %56, %58 : vector<8x16xf32>
    %c1_69 = arith.constant 1 : index
    %c2_70 = arith.constant 2 : index
    %c0_71 = arith.constant 0 : index
    %60 = vector.load %arg17[%c1_69, %c2_70, %c0_71] : memref<10x10x16xf32, #tpu.memory_space<vmem>>, vector<8x1x16xf32>
    %61 = vector.shape_cast %60 : vector<8x1x16xf32> to vector<8x16xf32>
    %62 = vector.shape_cast %59 : vector<8x16xf32> to vector<8x1x16xf32>
    tpu.vector_store %arg17[%c1_69, %c2_70, %c0_71], %62 {strides = array<i32>} : memref<10x10x16xf32, #tpu.memory_space<vmem>>, vector<8x1x16xf32>,
    %63 = vector.extract_strided_slice %46 {offsets = [0, 4, 0], sizes = [8, 1, 16], strides = [1, 1, 1]} : vector<8x16x16xf32> to vector<8x1x16xf32>
    %64 = vector.shape_cast %63 : vector<8x1x16xf32> to vector<8x16xf32>
    %65 = vector.extract_strided_slice %46 {offsets = [0, 5, 0], sizes = [8, 1, 16], strides = [1, 1, 1]} : vector<8x16x16xf32> to vector<8x1x16xf32>
    %66 = vector.shape_cast %65 : vector<8x1x16xf32> to vector<8x16xf32>
    %67 = arith.maximumf %64, %66 : vector<8x16xf32>
    %c1_72 = arith.constant 1 : index
    %c3_73 = arith.constant 3 : index
    %c0_74 = arith.constant 0 : index
    %68 = vector.load %arg17[%c1_72, %c3_73, %c0_74] : memref<10x10x16xf32, #tpu.memory_space<vmem>>, vector<8x1x16xf32>
    %69 = vector.shape_cast %68 : vector<8x1x16xf32> to vector<8x16xf32>
    %70 = vector.shape_cast %67 : vector<8x16xf32> to vector<8x1x16xf32>
    tpu.vector_store %arg17[%c1_72, %c3_73, %c0_74], %70 {strides = array<i32>} : memref<10x10x16xf32, #tpu.memory_space<vmem>>, vector<8x1x16xf32>,
    %71 = vector.extract_strided_slice %46 {offsets = [0, 6, 0], sizes = [8, 1, 16], strides = [1, 1, 1]} : vector<8x16x16xf32> to vector<8x1x16xf32>
    %72 = vector.shape_cast %71 : vector<8x1x16xf32> to vector<8x16xf32>
    %73 = vector.extract_strided_slice %46 {offsets = [0, 7, 0], sizes = [8, 1, 16], strides = [1, 1, 1]} : vector<8x16x16xf32> to vector<8x1x16xf32>
    %74 = vector.shape_cast %73 : vector<8x1x16xf32> to vector<8x16xf32>
    %75 = arith.maximumf %72, %74 : vector<8x16xf32>
    %c1_75 = arith.constant 1 : index
    %c4 = arith.constant 4 : index
    %c0_76 = arith.constant 0 : index
    %76 = vector.load %arg17[%c1_75, %c4, %c0_76] : memref<10x10x16xf32, #tpu.memory_space<vmem>>, vector<8x1x16xf32>
    %77 = vector.shape_cast %76 : vector<8x1x16xf32> to vector<8x16xf32>
    %78 = vector.shape_cast %75 : vector<8x16xf32> to vector<8x1x16xf32>
    tpu.vector_store %arg17[%c1_75, %c4, %c0_76], %78 {strides = array<i32>} : memref<10x10x16xf32, #tpu.memory_space<vmem>>, vector<8x1x16xf32>,
    %79 = vector.extract_strided_slice %46 {offsets = [0, 8, 0], sizes = [8, 1, 16], strides = [1, 1, 1]} : vector<8x16x16xf32> to vector<8x1x16xf32>
    %80 = vector.shape_cast %79 : vector<8x1x16xf32> to vector<8x16xf32>
    %81 = vector.extract_strided_slice %46 {offsets = [0, 9, 0], sizes = [8, 1, 16], strides = [1, 1, 1]} : vector<8x16x16xf32> to vector<8x1x16xf32>
    %82 = vector.shape_cast %81 : vector<8x1x16xf32> to vector<8x16xf32>
    %83 = arith.maximumf %80, %82 : vector<8x16xf32>
    %c1_77 = arith.constant 1 : index
    %c5 = arith.constant 5 : index
    %c0_78 = arith.constant 0 : index
    %84 = vector.load %arg17[%c1_77, %c5, %c0_78] : memref<10x10x16xf32, #tpu.memory_space<vmem>>, vector<8x1x16xf32>
    %85 = vector.shape_cast %84 : vector<8x1x16xf32> to vector<8x16xf32>
    %86 = vector.shape_cast %83 : vector<8x16xf32> to vector<8x1x16xf32>
    tpu.vector_store %arg17[%c1_77, %c5, %c0_78], %86 {strides = array<i32>} : memref<10x10x16xf32, #tpu.memory_space<vmem>>, vector<8x1x16xf32>,
    %87 = vector.extract_strided_slice %46 {offsets = [0, 10, 0], sizes = [8, 1, 16], strides = [1, 1, 1]} : vector<8x16x16xf32> to vector<8x1x16xf32>
    %88 = vector.shape_cast %87 : vector<8x1x16xf32> to vector<8x16xf32>
    %89 = vector.extract_strided_slice %46 {offsets = [0, 11, 0], sizes = [8, 1, 16], strides = [1, 1, 1]} : vector<8x16x16xf32> to vector<8x1x16xf32>
    %90 = vector.shape_cast %89 : vector<8x1x16xf32> to vector<8x16xf32>
    %91 = arith.maximumf %88, %90 : vector<8x16xf32>
    %c1_79 = arith.constant 1 : index
    %c6_80 = arith.constant 6 : index
    %c0_81 = arith.constant 0 : index
    %92 = vector.load %arg17[%c1_79, %c6_80, %c0_81] : memref<10x10x16xf32, #tpu.memory_space<vmem>>, vector<8x1x16xf32>
    %93 = vector.shape_cast %92 : vector<8x1x16xf32> to vector<8x16xf32>
    %94 = vector.shape_cast %91 : vector<8x16xf32> to vector<8x1x16xf32>
    tpu.vector_store %arg17[%c1_79, %c6_80, %c0_81], %94 {strides = array<i32>} : memref<10x10x16xf32, #tpu.memory_space<vmem>>, vector<8x1x16xf32>,
    %95 = vector.extract_strided_slice %46 {offsets = [0, 12, 0], sizes = [8, 1, 16], strides = [1, 1, 1]} : vector<8x16x16xf32> to vector<8x1x16xf32>
    %96 = vector.shape_cast %95 : vector<8x1x16xf32> to vector<8x16xf32>
    %97 = vector.extract_strided_slice %46 {offsets = [0, 13, 0], sizes = [8, 1, 16], strides = [1, 1, 1]} : vector<8x16x16xf32> to vector<8x1x16xf32>
    %98 = vector.shape_cast %97 : vector<8x1x16xf32> to vector<8x16xf32>
    %99 = arith.maximumf %96, %98 : vector<8x16xf32>
    %c1_82 = arith.constant 1 : index
    %c7 = arith.constant 7 : index
    %c0_83 = arith.constant 0 : index
    %100 = vector.load %arg17[%c1_82, %c7, %c0_83] : memref<10x10x16xf32, #tpu.memory_space<vmem>>, vector<8x1x16xf32>
    %101 = vector.shape_cast %100 : vector<8x1x16xf32> to vector<8x16xf32>
    %102 = vector.shape_cast %99 : vector<8x16xf32> to vector<8x1x16xf32>
    tpu.vector_store %arg17[%c1_82, %c7, %c0_83], %102 {strides = array<i32>} : memref<10x10x16xf32, #tpu.memory_space<vmem>>, vector<8x1x16xf32>,
    %103 = vector.extract_strided_slice %46 {offsets = [0, 14, 0], sizes = [8, 1, 16], strides = [1, 1, 1]} : vector<8x16x16xf32> to vector<8x1x16xf32>
    %104 = vector.shape_cast %103 : vector<8x1x16xf32> to vector<8x16xf32>
    %105 = vector.extract_strided_slice %46 {offsets = [0, 15, 0], sizes = [8, 1, 16], strides = [1, 1, 1]} : vector<8x16x16xf32> to vector<8x1x16xf32>
    %106 = vector.shape_cast %105 : vector<8x1x16xf32> to vector<8x16xf32>
    %107 = arith.maximumf %104, %106 : vector<8x16xf32>
    %c1_84 = arith.constant 1 : index
    %c8 = arith.constant 8 : index
    %c0_85 = arith.constant 0 : index
    %108 = vector.load %arg17[%c1_84, %c8, %c0_85] : memref<10x10x16xf32, #tpu.memory_space<vmem>>, vector<8x1x16xf32>
    %109 = vector.shape_cast %108 : vector<8x1x16xf32> to vector<8x16xf32>
    %110 = vector.shape_cast %107 : vector<8x16xf32> to vector<8x1x16xf32>
    tpu.vector_store %arg17[%c1_84, %c8, %c0_85], %110 {strides = array<i32>} : memref<10x10x16xf32, #tpu.memory_space<vmem>>, vector<8x1x16xf32>,
    %c0_86 = arith.constant 0 : index
    %c0_87 = arith.constant 0 : index
    %c0_88 = arith.constant 0 : index
    %111 = vector.load %arg17[%c0_86, %c0_87, %c0_88] : memref<10x10x16xf32, #tpu.memory_space<vmem>>, vector<8x8x16xf32>
    %c0_89 = arith.constant 0 : index
    %c0_90 = arith.constant 0 : index
    %c0_91 = arith.constant 0 : index
    %112 = vector.load %arg18[%c0_89, %c0_90, %c0_91] : memref<8x8x144xf32, #tpu.memory_space<vmem>>, vector<8x8x16xf32>
    tpu.vector_store %arg18[%c0_89, %c0_90, %c0_91], %111 {strides = array<i32>} : memref<8x8x144xf32, #tpu.memory_space<vmem>>, vector<8x8x16xf32>,
    %c0_92 = arith.constant 0 : index
    %c1_93 = arith.constant 1 : index
    %c0_94 = arith.constant 0 : index
    %113 = vector.load %arg17[%c0_92, %c1_93, %c0_94] : memref<10x10x16xf32, #tpu.memory_space<vmem>>, vector<8x8x16xf32>
    %c0_95 = arith.constant 0 : index
    %c0_96 = arith.constant 0 : index
    %c16 = arith.constant 16 : index
    %114 = vector.load %arg18[%c0_95, %c0_96, %c16] : memref<8x8x144xf32, #tpu.memory_space<vmem>>, vector<8x8x16xf32>
    tpu.vector_store %arg18[%c0_95, %c0_96, %c16], %113 {strides = array<i32>} : memref<8x8x144xf32, #tpu.memory_space<vmem>>, vector<8x8x16xf32>,
    %c0_97 = arith.constant 0 : index
    %c2_98 = arith.constant 2 : index
    %c0_99 = arith.constant 0 : index
    %115 = vector.load %arg17[%c0_97, %c2_98, %c0_99] : memref<10x10x16xf32, #tpu.memory_space<vmem>>, vector<8x8x16xf32>
    %c0_100 = arith.constant 0 : index
    %c0_101 = arith.constant 0 : index
    %c32 = arith.constant 32 : index
    %116 = vector.load %arg18[%c0_100, %c0_101, %c32] : memref<8x8x144xf32, #tpu.memory_space<vmem>>, vector<8x8x16xf32>
    tpu.vector_store %arg18[%c0_100, %c0_101, %c32], %115 {strides = array<i32>} : memref<8x8x144xf32, #tpu.memory_space<vmem>>, vector<8x8x16xf32>,
    %c1_102 = arith.constant 1 : index
    %c0_103 = arith.constant 0 : index
    %c0_104 = arith.constant 0 : index
    %117 = vector.load %arg17[%c1_102, %c0_103, %c0_104] : memref<10x10x16xf32, #tpu.memory_space<vmem>>, vector<8x8x16xf32>
    %c0_105 = arith.constant 0 : index
    %c0_106 = arith.constant 0 : index
    %c48 = arith.constant 48 : index
    %118 = vector.load %arg18[%c0_105, %c0_106, %c48] : memref<8x8x144xf32, #tpu.memory_space<vmem>>, vector<8x8x16xf32>
    tpu.vector_store %arg18[%c0_105, %c0_106, %c48], %117 {strides = array<i32>} : memref<8x8x144xf32, #tpu.memory_space<vmem>>, vector<8x8x16xf32>,
    %c1_107 = arith.constant 1 : index
    %c1_108 = arith.constant 1 : index
    %c0_109 = arith.constant 0 : index
    %119 = vector.load %arg17[%c1_107, %c1_108, %c0_109] : memref<10x10x16xf32, #tpu.memory_space<vmem>>, vector<8x8x16xf32>
    %c0_110 = arith.constant 0 : index
    %c0_111 = arith.constant 0 : index
    %c64 = arith.constant 64 : index
    %120 = vector.load %arg18[%c0_110, %c0_111, %c64] : memref<8x8x144xf32, #tpu.memory_space<vmem>>, vector<8x8x16xf32>
    tpu.vector_store %arg18[%c0_110, %c0_111, %c64], %119 {strides = array<i32>} : memref<8x8x144xf32, #tpu.memory_space<vmem>>, vector<8x8x16xf32>,
    %c1_112 = arith.constant 1 : index
    %c2_113 = arith.constant 2 : index
    %c0_114 = arith.constant 0 : index
    %121 = vector.load %arg17[%c1_112, %c2_113, %c0_114] : memref<10x10x16xf32, #tpu.memory_space<vmem>>, vector<8x8x16xf32>
    %c0_115 = arith.constant 0 : index
    %c0_116 = arith.constant 0 : index
    %c80 = arith.constant 80 : index
    %122 = vector.load %arg18[%c0_115, %c0_116, %c80] : memref<8x8x144xf32, #tpu.memory_space<vmem>>, vector<8x8x16xf32>
    tpu.vector_store %arg18[%c0_115, %c0_116, %c80], %121 {strides = array<i32>} : memref<8x8x144xf32, #tpu.memory_space<vmem>>, vector<8x8x16xf32>,
    %c2_117 = arith.constant 2 : index
    %c0_118 = arith.constant 0 : index
    %c0_119 = arith.constant 0 : index
    %123 = vector.load %arg17[%c2_117, %c0_118, %c0_119] : memref<10x10x16xf32, #tpu.memory_space<vmem>>, vector<8x8x16xf32>
    %c0_120 = arith.constant 0 : index
    %c0_121 = arith.constant 0 : index
    %c96 = arith.constant 96 : index
    %124 = vector.load %arg18[%c0_120, %c0_121, %c96] : memref<8x8x144xf32, #tpu.memory_space<vmem>>, vector<8x8x16xf32>
    tpu.vector_store %arg18[%c0_120, %c0_121, %c96], %123 {strides = array<i32>} : memref<8x8x144xf32, #tpu.memory_space<vmem>>, vector<8x8x16xf32>,
    %c2_122 = arith.constant 2 : index
    %c1_123 = arith.constant 1 : index
    %c0_124 = arith.constant 0 : index
    %125 = vector.load %arg17[%c2_122, %c1_123, %c0_124] : memref<10x10x16xf32, #tpu.memory_space<vmem>>, vector<8x8x16xf32>
    %c0_125 = arith.constant 0 : index
    %c0_126 = arith.constant 0 : index
    %c112 = arith.constant 112 : index
    %126 = vector.load %arg18[%c0_125, %c0_126, %c112] : memref<8x8x144xf32, #tpu.memory_space<vmem>>, vector<8x8x16xf32>
    tpu.vector_store %arg18[%c0_125, %c0_126, %c112], %125 {strides = array<i32>} : memref<8x8x144xf32, #tpu.memory_space<vmem>>, vector<8x8x16xf32>,
    %c2_127 = arith.constant 2 : index
    %c2_128 = arith.constant 2 : index
    %c0_129 = arith.constant 0 : index
    %127 = vector.load %arg17[%c2_127, %c2_128, %c0_129] : memref<10x10x16xf32, #tpu.memory_space<vmem>>, vector<8x8x16xf32>
    %c0_130 = arith.constant 0 : index
    %c0_131 = arith.constant 0 : index
    %c128 = arith.constant 128 : index
    %128 = vector.load %arg18[%c0_130, %c0_131, %c128] : memref<8x8x144xf32, #tpu.memory_space<vmem>>, vector<8x8x16xf32>
    tpu.vector_store %arg18[%c0_130, %c0_131, %c128], %127 {strides = array<i32>} : memref<8x8x144xf32, #tpu.memory_space<vmem>>, vector<8x8x16xf32>,
    %c0_132 = arith.constant 0 : index
    %c0_133 = arith.constant 0 : index
    %c0_134 = arith.constant 0 : index
    %129 = vector.load %arg18[%c0_132, %c0_133, %c0_134] : memref<8x8x144xf32, #tpu.memory_space<vmem>>, vector<8x8x144xf32>
    %130 = vector.shape_cast %129 : vector<8x8x144xf32> to vector<64x144xf32>
    %c0_135 = arith.constant 0 : index
    %c0_136 = arith.constant 0 : index
    %131 = vector.load %arg5[%c0_135, %c0_136] : memref<144x32xf32, #tpu.memory_space<vmem>>, vector<144x32xf32>
    %cst_137 = arith.constant dense<0.000000e+00> : vector<64x32xf32>
    %132 = tpu.matmul %130, %131, %cst_137 {dimension_numbers = #tpu.dot_dimension_numbers<[1], [0], [0], [1], [0, 0, 1, 1], [], []>} : vector<64x144xf32>, vector<144x32xf32>, vector<64x32xf32> -> vector<64x32xf32>
    %c0_138 = arith.constant 0 : index
    %c0_139 = arith.constant 0 : index
    %133 = vector.load %arg6[%c0_138, %c0_139] : memref<1x32xf32, #tpu.memory_space<vmem>>, vector<1x32xf32>
    %134 = vector.broadcast %133 : vector<1x32xf32> to vector<64x32xf32>
    %135 = arith.mulf %132, %134 : vector<64x32xf32>
    %c0_140 = arith.constant 0 : index
    %c0_141 = arith.constant 0 : index
    %136 = vector.load %arg7[%c0_140, %c0_141] : memref<1x32xf32, #tpu.memory_space<vmem>>, vector<1x32xf32>
    %137 = vector.broadcast %136 : vector<1x32xf32> to vector<64x32xf32>
    %138 = arith.addf %135, %137 : vector<64x32xf32>
    %cst_142 = arith.constant 0.000000e+00 : f32
    %139 = vector.broadcast %cst_142 : f32 to vector<64x32xf32>
    %140 = arith.maximumf %138, %139 : vector<64x32xf32>
    %cst_143 = arith.constant 0.000000e+00 : f32
    %141 = vector.broadcast %cst_143 : f32 to vector<6x6x32xf32>
    %c0_144 = arith.constant 0 : index
    %c0_145 = arith.constant 0 : index
    %c0_146 = arith.constant 0 : index
    %142 = vector.load %arg19[%c0_144, %c0_145, %c0_146] : memref<6x6x32xf32, #tpu.memory_space<vmem>>, vector<6x6x32xf32>
    tpu.vector_store %arg19[%c0_144, %c0_145, %c0_146], %141 {strides = array<i32>} : memref<6x6x32xf32, #tpu.memory_space<vmem>>, vector<6x6x32xf32>,
    %143 = vector.shape_cast %140 : vector<64x32xf32> to vector<4x2x8x32xf32>
    %144 = vector.extract_strided_slice %143 {offsets = [0, 0, 0, 0], sizes = [4, 1, 8, 32], strides = [1, 1, 1, 1]} : vector<4x2x8x32xf32> to vector<4x1x8x32xf32>
    %145 = vector.shape_cast %144 : vector<4x1x8x32xf32> to vector<4x8x32xf32>
    %146 = vector.extract_strided_slice %143 {offsets = [0, 1, 0, 0], sizes = [4, 1, 8, 32], strides = [1, 1, 1, 1]} : vector<4x2x8x32xf32> to vector<4x1x8x32xf32>
    %147 = vector.shape_cast %146 : vector<4x1x8x32xf32> to vector<4x8x32xf32>
    %148 = arith.maximumf %145, %147 : vector<4x8x32xf32>
    %149 = vector.extract_strided_slice %148 {offsets = [0, 0, 0], sizes = [4, 1, 32], strides = [1, 1, 1]} : vector<4x8x32xf32> to vector<4x1x32xf32>
    %150 = vector.shape_cast %149 : vector<4x1x32xf32> to vector<4x32xf32>
    %151 = vector.extract_strided_slice %148 {offsets = [0, 1, 0], sizes = [4, 1, 32], strides = [1, 1, 1]} : vector<4x8x32xf32> to vector<4x1x32xf32>
    %152 = vector.shape_cast %151 : vector<4x1x32xf32> to vector<4x32xf32>
    %153 = arith.maximumf %150, %152 : vector<4x32xf32>
    %c1_147 = arith.constant 1 : index
    %c1_148 = arith.constant 1 : index
    %c0_149 = arith.constant 0 : index
    %154 = vector.load %arg19[%c1_147, %c1_148, %c0_149] : memref<6x6x32xf32, #tpu.memory_space<vmem>>, vector<4x1x32xf32>
    %155 = vector.shape_cast %154 : vector<4x1x32xf32> to vector<4x32xf32>
    %156 = vector.shape_cast %153 : vector<4x32xf32> to vector<4x1x32xf32>
    tpu.vector_store %arg19[%c1_147, %c1_148, %c0_149], %156 {strides = array<i32>} : memref<6x6x32xf32, #tpu.memory_space<vmem>>, vector<4x1x32xf32>,
    %157 = vector.extract_strided_slice %148 {offsets = [0, 2, 0], sizes = [4, 1, 32], strides = [1, 1, 1]} : vector<4x8x32xf32> to vector<4x1x32xf32>
    %158 = vector.shape_cast %157 : vector<4x1x32xf32> to vector<4x32xf32>
    %159 = vector.extract_strided_slice %148 {offsets = [0, 3, 0], sizes = [4, 1, 32], strides = [1, 1, 1]} : vector<4x8x32xf32> to vector<4x1x32xf32>
    %160 = vector.shape_cast %159 : vector<4x1x32xf32> to vector<4x32xf32>
    %161 = arith.maximumf %158, %160 : vector<4x32xf32>
    %c1_150 = arith.constant 1 : index
    %c2_151 = arith.constant 2 : index
    %c0_152 = arith.constant 0 : index
    %162 = vector.load %arg19[%c1_150, %c2_151, %c0_152] : memref<6x6x32xf32, #tpu.memory_space<vmem>>, vector<4x1x32xf32>
    %163 = vector.shape_cast %162 : vector<4x1x32xf32> to vector<4x32xf32>
    %164 = vector.shape_cast %161 : vector<4x32xf32> to vector<4x1x32xf32>
    tpu.vector_store %arg19[%c1_150, %c2_151, %c0_152], %164 {strides = array<i32>} : memref<6x6x32xf32, #tpu.memory_space<vmem>>, vector<4x1x32xf32>,
    %165 = vector.extract_strided_slice %148 {offsets = [0, 4, 0], sizes = [4, 1, 32], strides = [1, 1, 1]} : vector<4x8x32xf32> to vector<4x1x32xf32>
    %166 = vector.shape_cast %165 : vector<4x1x32xf32> to vector<4x32xf32>
    %167 = vector.extract_strided_slice %148 {offsets = [0, 5, 0], sizes = [4, 1, 32], strides = [1, 1, 1]} : vector<4x8x32xf32> to vector<4x1x32xf32>
    %168 = vector.shape_cast %167 : vector<4x1x32xf32> to vector<4x32xf32>
    %169 = arith.maximumf %166, %168 : vector<4x32xf32>
    %c1_153 = arith.constant 1 : index
    %c3_154 = arith.constant 3 : index
    %c0_155 = arith.constant 0 : index
    %170 = vector.load %arg19[%c1_153, %c3_154, %c0_155] : memref<6x6x32xf32, #tpu.memory_space<vmem>>, vector<4x1x32xf32>
    %171 = vector.shape_cast %170 : vector<4x1x32xf32> to vector<4x32xf32>
    %172 = vector.shape_cast %169 : vector<4x32xf32> to vector<4x1x32xf32>
    tpu.vector_store %arg19[%c1_153, %c3_154, %c0_155], %172 {strides = array<i32>} : memref<6x6x32xf32, #tpu.memory_space<vmem>>, vector<4x1x32xf32>,
    %173 = vector.extract_strided_slice %148 {offsets = [0, 6, 0], sizes = [4, 1, 32], strides = [1, 1, 1]} : vector<4x8x32xf32> to vector<4x1x32xf32>
    %174 = vector.shape_cast %173 : vector<4x1x32xf32> to vector<4x32xf32>
    %175 = vector.extract_strided_slice %148 {offsets = [0, 7, 0], sizes = [4, 1, 32], strides = [1, 1, 1]} : vector<4x8x32xf32> to vector<4x1x32xf32>
    %176 = vector.shape_cast %175 : vector<4x1x32xf32> to vector<4x32xf32>
    %177 = arith.maximumf %174, %176 : vector<4x32xf32>
    %c1_156 = arith.constant 1 : index
    %c4_157 = arith.constant 4 : index
    %c0_158 = arith.constant 0 : index
    %178 = vector.load %arg19[%c1_156, %c4_157, %c0_158] : memref<6x6x32xf32, #tpu.memory_space<vmem>>, vector<4x1x32xf32>
    %179 = vector.shape_cast %178 : vector<4x1x32xf32> to vector<4x32xf32>
    %180 = vector.shape_cast %177 : vector<4x32xf32> to vector<4x1x32xf32>
    tpu.vector_store %arg19[%c1_156, %c4_157, %c0_158], %180 {strides = array<i32>} : memref<6x6x32xf32, #tpu.memory_space<vmem>>, vector<4x1x32xf32>,
    %c0_159 = arith.constant 0 : index
    %c0_160 = arith.constant 0 : index
    %c0_161 = arith.constant 0 : index
    %181 = vector.load %arg19[%c0_159, %c0_160, %c0_161] : memref<6x6x32xf32, #tpu.memory_space<vmem>>, vector<1x4x32xf32>
    %182 = vector.shape_cast %181 : vector<1x4x32xf32> to vector<4x32xf32>
    %c0_162 = arith.constant 0 : index
    %c0_163 = arith.constant 0 : index
    %183 = vector.load %arg20[%c0_162, %c0_163] : memref<16x288xf32, #tpu.memory_space<vmem>>, vector<4x32xf32>
    tpu.vector_store %arg20[%c0_162, %c0_163], %182 {strides = array<i32>} : memref<16x288xf32, #tpu.memory_space<vmem>>, vector<4x32xf32>,
    %c1_164 = arith.constant 1 : index
    %c0_165 = arith.constant 0 : index
    %c0_166 = arith.constant 0 : index
    %184 = vector.load %arg19[%c1_164, %c0_165, %c0_166] : memref<6x6x32xf32, #tpu.memory_space<vmem>>, vector<1x4x32xf32>
    %185 = vector.shape_cast %184 : vector<1x4x32xf32> to vector<4x32xf32>
    %c4_167 = arith.constant 4 : index
    %c0_168 = arith.constant 0 : index
    %186 = vector.load %arg20[%c4_167, %c0_168] : memref<16x288xf32, #tpu.memory_space<vmem>>, vector<4x32xf32>
    tpu.vector_store %arg20[%c4_167, %c0_168], %185 {strides = array<i32>} : memref<16x288xf32, #tpu.memory_space<vmem>>, vector<4x32xf32>,
    %c2_169 = arith.constant 2 : index
    %c0_170 = arith.constant 0 : index
    %c0_171 = arith.constant 0 : index
    %187 = vector.load %arg19[%c2_169, %c0_170, %c0_171] : memref<6x6x32xf32, #tpu.memory_space<vmem>>, vector<1x4x32xf32>
    %188 = vector.shape_cast %187 : vector<1x4x32xf32> to vector<4x32xf32>
    %c8_172 = arith.constant 8 : index
    %c0_173 = arith.constant 0 : index
    %189 = vector.load %arg20[%c8_172, %c0_173] : memref<16x288xf32, #tpu.memory_space<vmem>>, vector<4x32xf32>
    tpu.vector_store %arg20[%c8_172, %c0_173], %188 {strides = array<i32>} : memref<16x288xf32, #tpu.memory_space<vmem>>, vector<4x32xf32>,
    %c3_174 = arith.constant 3 : index
    %c0_175 = arith.constant 0 : index
    %c0_176 = arith.constant 0 : index
    %190 = vector.load %arg19[%c3_174, %c0_175, %c0_176] : memref<6x6x32xf32, #tpu.memory_space<vmem>>, vector<1x4x32xf32>
    %191 = vector.shape_cast %190 : vector<1x4x32xf32> to vector<4x32xf32>
    %c12_177 = arith.constant 12 : index
    %c0_178 = arith.constant 0 : index
    %192 = vector.load %arg20[%c12_177, %c0_178] : memref<16x288xf32, #tpu.memory_space<vmem>>, vector<4x32xf32>
    tpu.vector_store %arg20[%c12_177, %c0_178], %191 {strides = array<i32>} : memref<16x288xf32, #tpu.memory_space<vmem>>, vector<4x32xf32>,
    %c0_179 = arith.constant 0 : index
    %c1_180 = arith.constant 1 : index
    %c0_181 = arith.constant 0 : index
    %193 = vector.load %arg19[%c0_179, %c1_180, %c0_181] : memref<6x6x32xf32, #tpu.memory_space<vmem>>, vector<1x4x32xf32>
    %194 = vector.shape_cast %193 : vector<1x4x32xf32> to vector<4x32xf32>
    %c0_182 = arith.constant 0 : index
    %c32_183 = arith.constant 32 : index
    %195 = vector.load %arg20[%c0_182, %c32_183] : memref<16x288xf32, #tpu.memory_space<vmem>>, vector<4x32xf32>
    tpu.vector_store %arg20[%c0_182, %c32_183], %194 {strides = array<i32>} : memref<16x288xf32, #tpu.memory_space<vmem>>, vector<4x32xf32>,
    %c1_184 = arith.constant 1 : index
    %c1_185 = arith.constant 1 : index
    %c0_186 = arith.constant 0 : index
    %196 = vector.load %arg19[%c1_184, %c1_185, %c0_186] : memref<6x6x32xf32, #tpu.memory_space<vmem>>, vector<1x4x32xf32>
    %197 = vector.shape_cast %196 : vector<1x4x32xf32> to vector<4x32xf32>
    %c4_187 = arith.constant 4 : index
    %c32_188 = arith.constant 32 : index
    %198 = vector.load %arg20[%c4_187, %c32_188] : memref<16x288xf32, #tpu.memory_space<vmem>>, vector<4x32xf32>
    tpu.vector_store %arg20[%c4_187, %c32_188], %197 {strides = array<i32>} : memref<16x288xf32, #tpu.memory_space<vmem>>, vector<4x32xf32>,
    %c2_189 = arith.constant 2 : index
    %c1_190 = arith.constant 1 : index
    %c0_191 = arith.constant 0 : index
    %199 = vector.load %arg19[%c2_189, %c1_190, %c0_191] : memref<6x6x32xf32, #tpu.memory_space<vmem>>, vector<1x4x32xf32>
    %200 = vector.shape_cast %199 : vector<1x4x32xf32> to vector<4x32xf32>
    %c8_192 = arith.constant 8 : index
    %c32_193 = arith.constant 32 : index
    %201 = vector.load %arg20[%c8_192, %c32_193] : memref<16x288xf32, #tpu.memory_space<vmem>>, vector<4x32xf32>
    tpu.vector_store %arg20[%c8_192, %c32_193], %200 {strides = array<i32>} : memref<16x288xf32, #tpu.memory_space<vmem>>, vector<4x32xf32>,
    %c3_194 = arith.constant 3 : index
    %c1_195 = arith.constant 1 : index
    %c0_196 = arith.constant 0 : index
    %202 = vector.load %arg19[%c3_194, %c1_195, %c0_196] : memref<6x6x32xf32, #tpu.memory_space<vmem>>, vector<1x4x32xf32>
    %203 = vector.shape_cast %202 : vector<1x4x32xf32> to vector<4x32xf32>
    %c12_197 = arith.constant 12 : index
    %c32_198 = arith.constant 32 : index
    %204 = vector.load %arg20[%c12_197, %c32_198] : memref<16x288xf32, #tpu.memory_space<vmem>>, vector<4x32xf32>
    tpu.vector_store %arg20[%c12_197, %c32_198], %203 {strides = array<i32>} : memref<16x288xf32, #tpu.memory_space<vmem>>, vector<4x32xf32>,
    %c0_199 = arith.constant 0 : index
    %c2_200 = arith.constant 2 : index
    %c0_201 = arith.constant 0 : index
    %205 = vector.load %arg19[%c0_199, %c2_200, %c0_201] : memref<6x6x32xf32, #tpu.memory_space<vmem>>, vector<1x4x32xf32>
    %206 = vector.shape_cast %205 : vector<1x4x32xf32> to vector<4x32xf32>
    %c0_202 = arith.constant 0 : index
    %c64_203 = arith.constant 64 : index
    %207 = vector.load %arg20[%c0_202, %c64_203] : memref<16x288xf32, #tpu.memory_space<vmem>>, vector<4x32xf32>
    tpu.vector_store %arg20[%c0_202, %c64_203], %206 {strides = array<i32>} : memref<16x288xf32, #tpu.memory_space<vmem>>, vector<4x32xf32>,
    %c1_204 = arith.constant 1 : index
    %c2_205 = arith.constant 2 : index
    %c0_206 = arith.constant 0 : index
    %208 = vector.load %arg19[%c1_204, %c2_205, %c0_206] : memref<6x6x32xf32, #tpu.memory_space<vmem>>, vector<1x4x32xf32>
    %209 = vector.shape_cast %208 : vector<1x4x32xf32> to vector<4x32xf32>
    %c4_207 = arith.constant 4 : index
    %c64_208 = arith.constant 64 : index
    %210 = vector.load %arg20[%c4_207, %c64_208] : memref<16x288xf32, #tpu.memory_space<vmem>>, vector<4x32xf32>
    tpu.vector_store %arg20[%c4_207, %c64_208], %209 {strides = array<i32>} : memref<16x288xf32, #tpu.memory_space<vmem>>, vector<4x32xf32>,
    %c2_209 = arith.constant 2 : index
    %c2_210 = arith.constant 2 : index
    %c0_211 = arith.constant 0 : index
    %211 = vector.load %arg19[%c2_209, %c2_210, %c0_211] : memref<6x6x32xf32, #tpu.memory_space<vmem>>, vector<1x4x32xf32>
    %212 = vector.shape_cast %211 : vector<1x4x32xf32> to vector<4x32xf32>
    %c8_212 = arith.constant 8 : index
    %c64_213 = arith.constant 64 : index
    %213 = vector.load %arg20[%c8_212, %c64_213] : memref<16x288xf32, #tpu.memory_space<vmem>>, vector<4x32xf32>
    tpu.vector_store %arg20[%c8_212, %c64_213], %212 {strides = array<i32>} : memref<16x288xf32, #tpu.memory_space<vmem>>, vector<4x32xf32>,
    %c3_214 = arith.constant 3 : index
    %c2_215 = arith.constant 2 : index
    %c0_216 = arith.constant 0 : index
    %214 = vector.load %arg19[%c3_214, %c2_215, %c0_216] : memref<6x6x32xf32, #tpu.memory_space<vmem>>, vector<1x4x32xf32>
    %215 = vector.shape_cast %214 : vector<1x4x32xf32> to vector<4x32xf32>
    %c12_217 = arith.constant 12 : index
    %c64_218 = arith.constant 64 : index
    %216 = vector.load %arg20[%c12_217, %c64_218] : memref<16x288xf32, #tpu.memory_space<vmem>>, vector<4x32xf32>
    tpu.vector_store %arg20[%c12_217, %c64_218], %215 {strides = array<i32>} : memref<16x288xf32, #tpu.memory_space<vmem>>, vector<4x32xf32>,
    %c1_219 = arith.constant 1 : index
    %c0_220 = arith.constant 0 : index
    %c0_221 = arith.constant 0 : index
    %217 = vector.load %arg19[%c1_219, %c0_220, %c0_221] : memref<6x6x32xf32, #tpu.memory_space<vmem>>, vector<1x4x32xf32>
    %218 = vector.shape_cast %217 : vector<1x4x32xf32> to vector<4x32xf32>
    %c0_222 = arith.constant 0 : index
    %c96_223 = arith.constant 96 : index
    %219 = vector.load %arg20[%c0_222, %c96_223] : memref<16x288xf32, #tpu.memory_space<vmem>>, vector<4x32xf32>
    tpu.vector_store %arg20[%c0_222, %c96_223], %218 {strides = array<i32>} : memref<16x288xf32, #tpu.memory_space<vmem>>, vector<4x32xf32>,
    %c2_224 = arith.constant 2 : index
    %c0_225 = arith.constant 0 : index
    %c0_226 = arith.constant 0 : index
    %220 = vector.load %arg19[%c2_224, %c0_225, %c0_226] : memref<6x6x32xf32, #tpu.memory_space<vmem>>, vector<1x4x32xf32>
    %221 = vector.shape_cast %220 : vector<1x4x32xf32> to vector<4x32xf32>
    %c4_227 = arith.constant 4 : index
    %c96_228 = arith.constant 96 : index
    %222 = vector.load %arg20[%c4_227, %c96_228] : memref<16x288xf32, #tpu.memory_space<vmem>>, vector<4x32xf32>
    tpu.vector_store %arg20[%c4_227, %c96_228], %221 {strides = array<i32>} : memref<16x288xf32, #tpu.memory_space<vmem>>, vector<4x32xf32>,
    %c3_229 = arith.constant 3 : index
    %c0_230 = arith.constant 0 : index
    %c0_231 = arith.constant 0 : index
    %223 = vector.load %arg19[%c3_229, %c0_230, %c0_231] : memref<6x6x32xf32, #tpu.memory_space<vmem>>, vector<1x4x32xf32>
    %224 = vector.shape_cast %223 : vector<1x4x32xf32> to vector<4x32xf32>
    %c8_232 = arith.constant 8 : index
    %c96_233 = arith.constant 96 : index
    %225 = vector.load %arg20[%c8_232, %c96_233] : memref<16x288xf32, #tpu.memory_space<vmem>>, vector<4x32xf32>
    tpu.vector_store %arg20[%c8_232, %c96_233], %224 {strides = array<i32>} : memref<16x288xf32, #tpu.memory_space<vmem>>, vector<4x32xf32>,
    %c4_234 = arith.constant 4 : index
    %c0_235 = arith.constant 0 : index
    %c0_236 = arith.constant 0 : index
    %226 = vector.load %arg19[%c4_234, %c0_235, %c0_236] : memref<6x6x32xf32, #tpu.memory_space<vmem>>, vector<1x4x32xf32>
    %227 = vector.shape_cast %226 : vector<1x4x32xf32> to vector<4x32xf32>
    %c12_237 = arith.constant 12 : index
    %c96_238 = arith.constant 96 : index
    %228 = vector.load %arg20[%c12_237, %c96_238] : memref<16x288xf32, #tpu.memory_space<vmem>>, vector<4x32xf32>
    tpu.vector_store %arg20[%c12_237, %c96_238], %227 {strides = array<i32>} : memref<16x288xf32, #tpu.memory_space<vmem>>, vector<4x32xf32>,
    %c1_239 = arith.constant 1 : index
    %c1_240 = arith.constant 1 : index
    %c0_241 = arith.constant 0 : index
    %229 = vector.load %arg19[%c1_239, %c1_240, %c0_241] : memref<6x6x32xf32, #tpu.memory_space<vmem>>, vector<1x4x32xf32>
    %230 = vector.shape_cast %229 : vector<1x4x32xf32> to vector<4x32xf32>
    %c0_242 = arith.constant 0 : index
    %c128_243 = arith.constant 128 : index
    %231 = vector.load %arg20[%c0_242, %c128_243] : memref<16x288xf32, #tpu.memory_space<vmem>>, vector<4x32xf32>
    tpu.vector_store %arg20[%c0_242, %c128_243], %230 {strides = array<i32>} : memref<16x288xf32, #tpu.memory_space<vmem>>, vector<4x32xf32>,
    %c2_244 = arith.constant 2 : index
    %c1_245 = arith.constant 1 : index
    %c0_246 = arith.constant 0 : index
    %232 = vector.load %arg19[%c2_244, %c1_245, %c0_246] : memref<6x6x32xf32, #tpu.memory_space<vmem>>, vector<1x4x32xf32>
    %233 = vector.shape_cast %232 : vector<1x4x32xf32> to vector<4x32xf32>
    %c4_247 = arith.constant 4 : index
    %c128_248 = arith.constant 128 : index
    %234 = vector.load %arg20[%c4_247, %c128_248] : memref<16x288xf32, #tpu.memory_space<vmem>>, vector<4x32xf32>
    tpu.vector_store %arg20[%c4_247, %c128_248], %233 {strides = array<i32>} : memref<16x288xf32, #tpu.memory_space<vmem>>, vector<4x32xf32>,
    %c3_249 = arith.constant 3 : index
    %c1_250 = arith.constant 1 : index
    %c0_251 = arith.constant 0 : index
    %235 = vector.load %arg19[%c3_249, %c1_250, %c0_251] : memref<6x6x32xf32, #tpu.memory_space<vmem>>, vector<1x4x32xf32>
    %236 = vector.shape_cast %235 : vector<1x4x32xf32> to vector<4x32xf32>
    %c8_252 = arith.constant 8 : index
    %c128_253 = arith.constant 128 : index
    %237 = vector.load %arg20[%c8_252, %c128_253] : memref<16x288xf32, #tpu.memory_space<vmem>>, vector<4x32xf32>
    tpu.vector_store %arg20[%c8_252, %c128_253], %236 {strides = array<i32>} : memref<16x288xf32, #tpu.memory_space<vmem>>, vector<4x32xf32>,
    %c4_254 = arith.constant 4 : index
    %c1_255 = arith.constant 1 : index
    %c0_256 = arith.constant 0 : index
    %238 = vector.load %arg19[%c4_254, %c1_255, %c0_256] : memref<6x6x32xf32, #tpu.memory_space<vmem>>, vector<1x4x32xf32>
    %239 = vector.shape_cast %238 : vector<1x4x32xf32> to vector<4x32xf32>
    %c12_257 = arith.constant 12 : index
    %c128_258 = arith.constant 128 : index
    %240 = vector.load %arg20[%c12_257, %c128_258] : memref<16x288xf32, #tpu.memory_space<vmem>>, vector<4x32xf32>
    tpu.vector_store %arg20[%c12_257, %c128_258], %239 {strides = array<i32>} : memref<16x288xf32, #tpu.memory_space<vmem>>, vector<4x32xf32>,
    %c1_259 = arith.constant 1 : index
    %c2_260 = arith.constant 2 : index
    %c0_261 = arith.constant 0 : index
    %241 = vector.load %arg19[%c1_259, %c2_260, %c0_261] : memref<6x6x32xf32, #tpu.memory_space<vmem>>, vector<1x4x32xf32>
    %242 = vector.shape_cast %241 : vector<1x4x32xf32> to vector<4x32xf32>
    %c0_262 = arith.constant 0 : index
    %c160 = arith.constant 160 : index
    %243 = vector.load %arg20[%c0_262, %c160] : memref<16x288xf32, #tpu.memory_space<vmem>>, vector<4x32xf32>
    tpu.vector_store %arg20[%c0_262, %c160], %242 {strides = array<i32>} : memref<16x288xf32, #tpu.memory_space<vmem>>, vector<4x32xf32>,
    %c2_263 = arith.constant 2 : index
    %c2_264 = arith.constant 2 : index
    %c0_265 = arith.constant 0 : index
    %244 = vector.load %arg19[%c2_263, %c2_264, %c0_265] : memref<6x6x32xf32, #tpu.memory_space<vmem>>, vector<1x4x32xf32>
    %245 = vector.shape_cast %244 : vector<1x4x32xf32> to vector<4x32xf32>
    %c4_266 = arith.constant 4 : index
    %c160_267 = arith.constant 160 : index
    %246 = vector.load %arg20[%c4_266, %c160_267] : memref<16x288xf32, #tpu.memory_space<vmem>>, vector<4x32xf32>
    tpu.vector_store %arg20[%c4_266, %c160_267], %245 {strides = array<i32>} : memref<16x288xf32, #tpu.memory_space<vmem>>, vector<4x32xf32>,
    %c3_268 = arith.constant 3 : index
    %c2_269 = arith.constant 2 : index
    %c0_270 = arith.constant 0 : index
    %247 = vector.load %arg19[%c3_268, %c2_269, %c0_270] : memref<6x6x32xf32, #tpu.memory_space<vmem>>, vector<1x4x32xf32>
    %248 = vector.shape_cast %247 : vector<1x4x32xf32> to vector<4x32xf32>
    %c8_271 = arith.constant 8 : index
    %c160_272 = arith.constant 160 : index
    %249 = vector.load %arg20[%c8_271, %c160_272] : memref<16x288xf32, #tpu.memory_space<vmem>>, vector<4x32xf32>
    tpu.vector_store %arg20[%c8_271, %c160_272], %248 {strides = array<i32>} : memref<16x288xf32, #tpu.memory_space<vmem>>, vector<4x32xf32>,
    %c4_273 = arith.constant 4 : index
    %c2_274 = arith.constant 2 : index
    %c0_275 = arith.constant 0 : index
    %250 = vector.load %arg19[%c4_273, %c2_274, %c0_275] : memref<6x6x32xf32, #tpu.memory_space<vmem>>, vector<1x4x32xf32>
    %251 = vector.shape_cast %250 : vector<1x4x32xf32> to vector<4x32xf32>
    %c12_276 = arith.constant 12 : index
    %c160_277 = arith.constant 160 : index
    %252 = vector.load %arg20[%c12_276, %c160_277] : memref<16x288xf32, #tpu.memory_space<vmem>>, vector<4x32xf32>
    tpu.vector_store %arg20[%c12_276, %c160_277], %251 {strides = array<i32>} : memref<16x288xf32, #tpu.memory_space<vmem>>, vector<4x32xf32>,
    %c2_278 = arith.constant 2 : index
    %c0_279 = arith.constant 0 : index
    %c0_280 = arith.constant 0 : index
    %253 = vector.load %arg19[%c2_278, %c0_279, %c0_280] : memref<6x6x32xf32, #tpu.memory_space<vmem>>, vector<1x4x32xf32>
    %254 = vector.shape_cast %253 : vector<1x4x32xf32> to vector<4x32xf32>
    %c0_281 = arith.constant 0 : index
    %c192 = arith.constant 192 : index
    %255 = vector.load %arg20[%c0_281, %c192] : memref<16x288xf32, #tpu.memory_space<vmem>>, vector<4x32xf32>
    tpu.vector_store %arg20[%c0_281, %c192], %254 {strides = array<i32>} : memref<16x288xf32, #tpu.memory_space<vmem>>, vector<4x32xf32>,
    %c3_282 = arith.constant 3 : index
    %c0_283 = arith.constant 0 : index
    %c0_284 = arith.constant 0 : index
    %256 = vector.load %arg19[%c3_282, %c0_283, %c0_284] : memref<6x6x32xf32, #tpu.memory_space<vmem>>, vector<1x4x32xf32>
    %257 = vector.shape_cast %256 : vector<1x4x32xf32> to vector<4x32xf32>
    %c4_285 = arith.constant 4 : index
    %c192_286 = arith.constant 192 : index
    %258 = vector.load %arg20[%c4_285, %c192_286] : memref<16x288xf32, #tpu.memory_space<vmem>>, vector<4x32xf32>
    tpu.vector_store %arg20[%c4_285, %c192_286], %257 {strides = array<i32>} : memref<16x288xf32, #tpu.memory_space<vmem>>, vector<4x32xf32>,
    %c4_287 = arith.constant 4 : index
    %c0_288 = arith.constant 0 : index
    %c0_289 = arith.constant 0 : index
    %259 = vector.load %arg19[%c4_287, %c0_288, %c0_289] : memref<6x6x32xf32, #tpu.memory_space<vmem>>, vector<1x4x32xf32>
    %260 = vector.shape_cast %259 : vector<1x4x32xf32> to vector<4x32xf32>
    %c8_290 = arith.constant 8 : index
    %c192_291 = arith.constant 192 : index
    %261 = vector.load %arg20[%c8_290, %c192_291] : memref<16x288xf32, #tpu.memory_space<vmem>>, vector<4x32xf32>
    tpu.vector_store %arg20[%c8_290, %c192_291], %260 {strides = array<i32>} : memref<16x288xf32, #tpu.memory_space<vmem>>, vector<4x32xf32>,
    %c5_292 = arith.constant 5 : index
    %c0_293 = arith.constant 0 : index
    %c0_294 = arith.constant 0 : index
    %262 = vector.load %arg19[%c5_292, %c0_293, %c0_294] : memref<6x6x32xf32, #tpu.memory_space<vmem>>, vector<1x4x32xf32>
    %263 = vector.shape_cast %262 : vector<1x4x32xf32> to vector<4x32xf32>
    %c12_295 = arith.constant 12 : index
    %c192_296 = arith.constant 192 : index
    %264 = vector.load %arg20[%c12_295, %c192_296] : memref<16x288xf32, #tpu.memory_space<vmem>>, vector<4x32xf32>
    tpu.vector_store %arg20[%c12_295, %c192_296], %263 {strides = array<i32>} : memref<16x288xf32, #tpu.memory_space<vmem>>, vector<4x32xf32>,
    %c2_297 = arith.constant 2 : index
    %c1_298 = arith.constant 1 : index
    %c0_299 = arith.constant 0 : index
    %265 = vector.load %arg19[%c2_297, %c1_298, %c0_299] : memref<6x6x32xf32, #tpu.memory_space<vmem>>, vector<1x4x32xf32>
    %266 = vector.shape_cast %265 : vector<1x4x32xf32> to vector<4x32xf32>
    %c0_300 = arith.constant 0 : index
    %c224 = arith.constant 224 : index
    %267 = vector.load %arg20[%c0_300, %c224] : memref<16x288xf32, #tpu.memory_space<vmem>>, vector<4x32xf32>
    tpu.vector_store %arg20[%c0_300, %c224], %266 {strides = array<i32>} : memref<16x288xf32, #tpu.memory_space<vmem>>, vector<4x32xf32>,
    %c3_301 = arith.constant 3 : index
    %c1_302 = arith.constant 1 : index
    %c0_303 = arith.constant 0 : index
    %268 = vector.load %arg19[%c3_301, %c1_302, %c0_303] : memref<6x6x32xf32, #tpu.memory_space<vmem>>, vector<1x4x32xf32>
    %269 = vector.shape_cast %268 : vector<1x4x32xf32> to vector<4x32xf32>
    %c4_304 = arith.constant 4 : index
    %c224_305 = arith.constant 224 : index
    %270 = vector.load %arg20[%c4_304, %c224_305] : memref<16x288xf32, #tpu.memory_space<vmem>>, vector<4x32xf32>
    tpu.vector_store %arg20[%c4_304, %c224_305], %269 {strides = array<i32>} : memref<16x288xf32, #tpu.memory_space<vmem>>, vector<4x32xf32>,
    %c4_306 = arith.constant 4 : index
    %c1_307 = arith.constant 1 : index
    %c0_308 = arith.constant 0 : index
    %271 = vector.load %arg19[%c4_306, %c1_307, %c0_308] : memref<6x6x32xf32, #tpu.memory_space<vmem>>, vector<1x4x32xf32>
    %272 = vector.shape_cast %271 : vector<1x4x32xf32> to vector<4x32xf32>
    %c8_309 = arith.constant 8 : index
    %c224_310 = arith.constant 224 : index
    %273 = vector.load %arg20[%c8_309, %c224_310] : memref<16x288xf32, #tpu.memory_space<vmem>>, vector<4x32xf32>
    tpu.vector_store %arg20[%c8_309, %c224_310], %272 {strides = array<i32>} : memref<16x288xf32, #tpu.memory_space<vmem>>, vector<4x32xf32>,
    %c5_311 = arith.constant 5 : index
    %c1_312 = arith.constant 1 : index
    %c0_313 = arith.constant 0 : index
    %274 = vector.load %arg19[%c5_311, %c1_312, %c0_313] : memref<6x6x32xf32, #tpu.memory_space<vmem>>, vector<1x4x32xf32>
    %275 = vector.shape_cast %274 : vector<1x4x32xf32> to vector<4x32xf32>
    %c12_314 = arith.constant 12 : index
    %c224_315 = arith.constant 224 : index
    %276 = vector.load %arg20[%c12_314, %c224_315] : memref<16x288xf32, #tpu.memory_space<vmem>>, vector<4x32xf32>
    tpu.vector_store %arg20[%c12_314, %c224_315], %275 {strides = array<i32>} : memref<16x288xf32, #tpu.memory_space<vmem>>, vector<4x32xf32>,
    %c2_316 = arith.constant 2 : index
    %c2_317 = arith.constant 2 : index
    %c0_318 = arith.constant 0 : index
    %277 = vector.load %arg19[%c2_316, %c2_317, %c0_318] : memref<6x6x32xf32, #tpu.memory_space<vmem>>, vector<1x4x32xf32>
    %278 = vector.shape_cast %277 : vector<1x4x32xf32> to vector<4x32xf32>
    %c0_319 = arith.constant 0 : index
    %c256 = arith.constant 256 : index
    %279 = vector.load %arg20[%c0_319, %c256] : memref<16x288xf32, #tpu.memory_space<vmem>>, vector<4x32xf32>
    tpu.vector_store %arg20[%c0_319, %c256], %278 {strides = array<i32>} : memref<16x288xf32, #tpu.memory_space<vmem>>, vector<4x32xf32>,
    %c3_320 = arith.constant 3 : index
    %c2_321 = arith.constant 2 : index
    %c0_322 = arith.constant 0 : index
    %280 = vector.load %arg19[%c3_320, %c2_321, %c0_322] : memref<6x6x32xf32, #tpu.memory_space<vmem>>, vector<1x4x32xf32>
    %281 = vector.shape_cast %280 : vector<1x4x32xf32> to vector<4x32xf32>
    %c4_323 = arith.constant 4 : index
    %c256_324 = arith.constant 256 : index
    %282 = vector.load %arg20[%c4_323, %c256_324] : memref<16x288xf32, #tpu.memory_space<vmem>>, vector<4x32xf32>
    tpu.vector_store %arg20[%c4_323, %c256_324], %281 {strides = array<i32>} : memref<16x288xf32, #tpu.memory_space<vmem>>, vector<4x32xf32>,
    %c4_325 = arith.constant 4 : index
    %c2_326 = arith.constant 2 : index
    %c0_327 = arith.constant 0 : index
    %283 = vector.load %arg19[%c4_325, %c2_326, %c0_327] : memref<6x6x32xf32, #tpu.memory_space<vmem>>, vector<1x4x32xf32>
    %284 = vector.shape_cast %283 : vector<1x4x32xf32> to vector<4x32xf32>
    %c8_328 = arith.constant 8 : index
    %c256_329 = arith.constant 256 : index
    %285 = vector.load %arg20[%c8_328, %c256_329] : memref<16x288xf32, #tpu.memory_space<vmem>>, vector<4x32xf32>
    tpu.vector_store %arg20[%c8_328, %c256_329], %284 {strides = array<i32>} : memref<16x288xf32, #tpu.memory_space<vmem>>, vector<4x32xf32>,
    %c5_330 = arith.constant 5 : index
    %c2_331 = arith.constant 2 : index
    %c0_332 = arith.constant 0 : index
    %286 = vector.load %arg19[%c5_330, %c2_331, %c0_332] : memref<6x6x32xf32, #tpu.memory_space<vmem>>, vector<1x4x32xf32>
    %287 = vector.shape_cast %286 : vector<1x4x32xf32> to vector<4x32xf32>
    %c12_333 = arith.constant 12 : index
    %c256_334 = arith.constant 256 : index
    %288 = vector.load %arg20[%c12_333, %c256_334] : memref<16x288xf32, #tpu.memory_space<vmem>>, vector<4x32xf32>
    tpu.vector_store %arg20[%c12_333, %c256_334], %287 {strides = array<i32>} : memref<16x288xf32, #tpu.memory_space<vmem>>, vector<4x32xf32>,
    %c0_335 = arith.constant 0 : index
    %c0_336 = arith.constant 0 : index
    %289 = vector.load %arg20[%c0_335, %c0_336] : memref<16x288xf32, #tpu.memory_space<vmem>>, vector<16x288xf32>
    %c0_337 = arith.constant 0 : index
    %c0_338 = arith.constant 0 : index
    %290 = vector.load %arg8[%c0_337, %c0_338] : memref<288x64xf32, #tpu.memory_space<vmem>>, vector<288x64xf32>
    %cst_339 = arith.constant dense<0.000000e+00> : vector<16x64xf32>
    %291 = tpu.matmul %289, %290, %cst_339 {dimension_numbers = #tpu.dot_dimension_numbers<[1], [0], [0], [1], [0, 0, 1, 1], [], []>} : vector<16x288xf32>, vector<288x64xf32>, vector<16x64xf32> -> vector<16x64xf32>
    %c0_340 = arith.constant 0 : index
    %c0_341 = arith.constant 0 : index
    %292 = vector.load %arg9[%c0_340, %c0_341] : memref<1x64xf32, #tpu.memory_space<vmem>>, vector<1x64xf32>
    %293 = vector.broadcast %292 : vector<1x64xf32> to vector<16x64xf32>
    %294 = arith.mulf %291, %293 : vector<16x64xf32>
    %c0_342 = arith.constant 0 : index
    %c0_343 = arith.constant 0 : index
    %295 = vector.load %arg10[%c0_342, %c0_343] : memref<1x64xf32, #tpu.memory_space<vmem>>, vector<1x64xf32>
    %296 = vector.broadcast %295 : vector<1x64xf32> to vector<16x64xf32>
    %297 = arith.addf %294, %296 : vector<16x64xf32>
    %cst_344 = arith.constant 0.000000e+00 : f32
    %298 = vector.broadcast %cst_344 : f32 to vector<16x64xf32>
    %299 = arith.maximumf %297, %298 : vector<16x64xf32>
    %300 = vector.extract_strided_slice %299 {offsets = [0, 0], sizes = [1, 64], strides = [1, 1]} : vector<16x64xf32> to vector<1x64xf32>
    %c0_345 = arith.constant 0 : index
    %c0_346 = arith.constant 0 : index
    %301 = vector.load %arg21[%c0_345, %c0_346] : memref<1x1024xf32, #tpu.memory_space<vmem>>, vector<1x64xf32>
    tpu.vector_store %arg21[%c0_345, %c0_346], %300 {strides = array<i32>} : memref<1x1024xf32, #tpu.memory_space<vmem>>, vector<1x64xf32>,
    %302 = vector.extract_strided_slice %299 {offsets = [1, 0], sizes = [1, 64], strides = [1, 1]} : vector<16x64xf32> to vector<1x64xf32>
    %c0_347 = arith.constant 0 : index
    %c64_348 = arith.constant 64 : index
    %303 = vector.load %arg21[%c0_347, %c64_348] : memref<1x1024xf32, #tpu.memory_space<vmem>>, vector<1x64xf32>
    tpu.vector_store %arg21[%c0_347, %c64_348], %302 {strides = array<i32>} : memref<1x1024xf32, #tpu.memory_space<vmem>>, vector<1x64xf32>,
    %304 = vector.extract_strided_slice %299 {offsets = [2, 0], sizes = [1, 64], strides = [1, 1]} : vector<16x64xf32> to vector<1x64xf32>
    %c0_349 = arith.constant 0 : index
    %c128_350 = arith.constant 128 : index
    %305 = vector.load %arg21[%c0_349, %c128_350] : memref<1x1024xf32, #tpu.memory_space<vmem>>, vector<1x64xf32>
    tpu.vector_store %arg21[%c0_349, %c128_350], %304 {strides = array<i32>} : memref<1x1024xf32, #tpu.memory_space<vmem>>, vector<1x64xf32>,
    %306 = vector.extract_strided_slice %299 {offsets = [3, 0], sizes = [1, 64], strides = [1, 1]} : vector<16x64xf32> to vector<1x64xf32>
    %c0_351 = arith.constant 0 : index
    %c192_352 = arith.constant 192 : index
    %307 = vector.load %arg21[%c0_351, %c192_352] : memref<1x1024xf32, #tpu.memory_space<vmem>>, vector<1x64xf32>
    tpu.vector_store %arg21[%c0_351, %c192_352], %306 {strides = array<i32>} : memref<1x1024xf32, #tpu.memory_space<vmem>>, vector<1x64xf32>,
    %308 = vector.extract_strided_slice %299 {offsets = [4, 0], sizes = [1, 64], strides = [1, 1]} : vector<16x64xf32> to vector<1x64xf32>
    %c0_353 = arith.constant 0 : index
    %c256_354 = arith.constant 256 : index
    %309 = vector.load %arg21[%c0_353, %c256_354] : memref<1x1024xf32, #tpu.memory_space<vmem>>, vector<1x64xf32>
    tpu.vector_store %arg21[%c0_353, %c256_354], %308 {strides = array<i32>} : memref<1x1024xf32, #tpu.memory_space<vmem>>, vector<1x64xf32>,
    %310 = vector.extract_strided_slice %299 {offsets = [5, 0], sizes = [1, 64], strides = [1, 1]} : vector<16x64xf32> to vector<1x64xf32>
    %c0_355 = arith.constant 0 : index
    %c320 = arith.constant 320 : index
    %311 = vector.load %arg21[%c0_355, %c320] : memref<1x1024xf32, #tpu.memory_space<vmem>>, vector<1x64xf32>
    tpu.vector_store %arg21[%c0_355, %c320], %310 {strides = array<i32>} : memref<1x1024xf32, #tpu.memory_space<vmem>>, vector<1x64xf32>,
    %312 = vector.extract_strided_slice %299 {offsets = [6, 0], sizes = [1, 64], strides = [1, 1]} : vector<16x64xf32> to vector<1x64xf32>
    %c0_356 = arith.constant 0 : index
    %c384 = arith.constant 384 : index
    %313 = vector.load %arg21[%c0_356, %c384] : memref<1x1024xf32, #tpu.memory_space<vmem>>, vector<1x64xf32>
    tpu.vector_store %arg21[%c0_356, %c384], %312 {strides = array<i32>} : memref<1x1024xf32, #tpu.memory_space<vmem>>, vector<1x64xf32>,
    %314 = vector.extract_strided_slice %299 {offsets = [7, 0], sizes = [1, 64], strides = [1, 1]} : vector<16x64xf32> to vector<1x64xf32>
    %c0_357 = arith.constant 0 : index
    %c448 = arith.constant 448 : index
    %315 = vector.load %arg21[%c0_357, %c448] : memref<1x1024xf32, #tpu.memory_space<vmem>>, vector<1x64xf32>
    tpu.vector_store %arg21[%c0_357, %c448], %314 {strides = array<i32>} : memref<1x1024xf32, #tpu.memory_space<vmem>>, vector<1x64xf32>,
    %316 = vector.extract_strided_slice %299 {offsets = [8, 0], sizes = [1, 64], strides = [1, 1]} : vector<16x64xf32> to vector<1x64xf32>
    %c0_358 = arith.constant 0 : index
    %c512 = arith.constant 512 : index
    %317 = vector.load %arg21[%c0_358, %c512] : memref<1x1024xf32, #tpu.memory_space<vmem>>, vector<1x64xf32>
    tpu.vector_store %arg21[%c0_358, %c512], %316 {strides = array<i32>} : memref<1x1024xf32, #tpu.memory_space<vmem>>, vector<1x64xf32>,
    %318 = vector.extract_strided_slice %299 {offsets = [9, 0], sizes = [1, 64], strides = [1, 1]} : vector<16x64xf32> to vector<1x64xf32>
    %c0_359 = arith.constant 0 : index
    %c576 = arith.constant 576 : index
    %319 = vector.load %arg21[%c0_359, %c576] : memref<1x1024xf32, #tpu.memory_space<vmem>>, vector<1x64xf32>
    tpu.vector_store %arg21[%c0_359, %c576], %318 {strides = array<i32>} : memref<1x1024xf32, #tpu.memory_space<vmem>>, vector<1x64xf32>,
    %320 = vector.extract_strided_slice %299 {offsets = [10, 0], sizes = [1, 64], strides = [1, 1]} : vector<16x64xf32> to vector<1x64xf32>
    %c0_360 = arith.constant 0 : index
    %c640 = arith.constant 640 : index
    %321 = vector.load %arg21[%c0_360, %c640] : memref<1x1024xf32, #tpu.memory_space<vmem>>, vector<1x64xf32>
    tpu.vector_store %arg21[%c0_360, %c640], %320 {strides = array<i32>} : memref<1x1024xf32, #tpu.memory_space<vmem>>, vector<1x64xf32>,
    %322 = vector.extract_strided_slice %299 {offsets = [11, 0], sizes = [1, 64], strides = [1, 1]} : vector<16x64xf32> to vector<1x64xf32>
    %c0_361 = arith.constant 0 : index
    %c704 = arith.constant 704 : index
    %323 = vector.load %arg21[%c0_361, %c704] : memref<1x1024xf32, #tpu.memory_space<vmem>>, vector<1x64xf32>
    tpu.vector_store %arg21[%c0_361, %c704], %322 {strides = array<i32>} : memref<1x1024xf32, #tpu.memory_space<vmem>>, vector<1x64xf32>,
    %324 = vector.extract_strided_slice %299 {offsets = [12, 0], sizes = [1, 64], strides = [1, 1]} : vector<16x64xf32> to vector<1x64xf32>
    %c0_362 = arith.constant 0 : index
    %c768 = arith.constant 768 : index
    %325 = vector.load %arg21[%c0_362, %c768] : memref<1x1024xf32, #tpu.memory_space<vmem>>, vector<1x64xf32>
    tpu.vector_store %arg21[%c0_362, %c768], %324 {strides = array<i32>} : memref<1x1024xf32, #tpu.memory_space<vmem>>, vector<1x64xf32>,
    %326 = vector.extract_strided_slice %299 {offsets = [13, 0], sizes = [1, 64], strides = [1, 1]} : vector<16x64xf32> to vector<1x64xf32>
    %c0_363 = arith.constant 0 : index
    %c832 = arith.constant 832 : index
    %327 = vector.load %arg21[%c0_363, %c832] : memref<1x1024xf32, #tpu.memory_space<vmem>>, vector<1x64xf32>
    tpu.vector_store %arg21[%c0_363, %c832], %326 {strides = array<i32>} : memref<1x1024xf32, #tpu.memory_space<vmem>>, vector<1x64xf32>,
    %328 = vector.extract_strided_slice %299 {offsets = [14, 0], sizes = [1, 64], strides = [1, 1]} : vector<16x64xf32> to vector<1x64xf32>
    %c0_364 = arith.constant 0 : index
    %c896 = arith.constant 896 : index
    %329 = vector.load %arg21[%c0_364, %c896] : memref<1x1024xf32, #tpu.memory_space<vmem>>, vector<1x64xf32>
    tpu.vector_store %arg21[%c0_364, %c896], %328 {strides = array<i32>} : memref<1x1024xf32, #tpu.memory_space<vmem>>, vector<1x64xf32>,
    %330 = vector.extract_strided_slice %299 {offsets = [15, 0], sizes = [1, 64], strides = [1, 1]} : vector<16x64xf32> to vector<1x64xf32>
    %c0_365 = arith.constant 0 : index
    %c960 = arith.constant 960 : index
    %331 = vector.load %arg21[%c0_365, %c960] : memref<1x1024xf32, #tpu.memory_space<vmem>>, vector<1x64xf32>
    tpu.vector_store %arg21[%c0_365, %c960], %330 {strides = array<i32>} : memref<1x1024xf32, #tpu.memory_space<vmem>>, vector<1x64xf32>,
    %c0_366 = arith.constant 0 : index
    %c0_367 = arith.constant 0 : index
    %332 = vector.load %arg21[%c0_366, %c0_367] : memref<1x1024xf32, #tpu.memory_space<vmem>>, vector<1x1024xf32>
    %c0_368 = arith.constant 0 : index
    %c0_369 = arith.constant 0 : index
    %333 = vector.load %arg11[%c0_368, %c0_369] : memref<1024x128xf32, #tpu.memory_space<vmem>>, vector<1024x128xf32>
    %cst_370 = arith.constant dense<0.000000e+00> : vector<1x128xf32>
    %334 = tpu.matmul %332, %333, %cst_370 {dimension_numbers = #tpu.dot_dimension_numbers<[1], [0], [0], [1], [0, 0, 1, 1], [], []>} : vector<1x1024xf32>, vector<1024x128xf32>, vector<1x128xf32> -> vector<1x128xf32>
    %c0_371 = arith.constant 0 : index
    %c0_372 = arith.constant 0 : index
    %335 = vector.load %arg12[%c0_371, %c0_372] : memref<1x128xf32, #tpu.memory_space<vmem>>, vector<1x128xf32>
    %336 = arith.addf %334, %335 : vector<1x128xf32>
    %cst_373 = arith.constant 0.000000e+00 : f32
    %337 = vector.broadcast %cst_373 : f32 to vector<1x128xf32>
    %338 = arith.maximumf %336, %337 : vector<1x128xf32>
    %c0_374 = arith.constant 0 : index
    %c0_375 = arith.constant 0 : index
    %339 = vector.load %arg13[%c0_374, %c0_375] : memref<128x2xf32, #tpu.memory_space<vmem>>, vector<128x2xf32>
    %cst_376 = arith.constant dense<0.000000e+00> : vector<1x2xf32>
    %340 = tpu.matmul %338, %339, %cst_376 {dimension_numbers = #tpu.dot_dimension_numbers<[1], [0], [0], [1], [0, 0, 1, 1], [], []>} : vector<1x128xf32>, vector<128x2xf32>, vector<1x2xf32> -> vector<1x2xf32>
    %c0_377 = arith.constant 0 : index
    %c0_378 = arith.constant 0 : index
    %341 = vector.load %arg14[%c0_377, %c0_378] : memref<1x2xf32, #tpu.memory_space<vmem>>, vector<1x2xf32>
    %342 = arith.addf %340, %341 : vector<1x2xf32>
    %c0_379 = arith.constant 0 : index
    %c0_380 = arith.constant 0 : index
    %c0_381 = arith.constant 0 : index
    %343 = vector.load %arg15[%c0_379, %c0_380, %c0_381] : memref<1x1x2xf32, #tpu.memory_space<vmem>>, vector<1x1x2xf32>
    %344 = vector.shape_cast %343 : vector<1x1x2xf32> to vector<1x2xf32>
    %345 = vector.shape_cast %342 : vector<1x2xf32> to vector<1x1x2xf32>
    tpu.vector_store %arg15[%c0_379, %c0_380, %c0_381], %345 {strides = array<i32>} : memref<1x1x2xf32, #tpu.memory_space<vmem>>, vector<1x1x2xf32>,
    return
  }
  func.func @transform_0(%arg0: i32) -> (i32, i32, i32, i32) {
    %c0_i32 = arith.constant 0 : i32
    %c0_i32_0 = arith.constant 0 : i32
    %c0_i32_1 = arith.constant 0 : i32
    %c0_i32_2 = arith.constant 0 : i32
    return %arg0, %c0_i32, %c0_i32_0, %c0_i32_1 : i32, i32, i32, i32
  }
  func.func @transform_1(%arg0: i32) -> (i32, i32) {
    %c0_i32 = arith.constant 0 : i32
    %c0_i32_0 = arith.constant 0 : i32
    %c0_i32_1 = arith.constant 0 : i32
    return %c0_i32, %c0_i32_0 : i32, i32
  }
  func.func @transform_2(%arg0: i32) -> (i32, i32) {
    %c0_i32 = arith.constant 0 : i32
    %c0_i32_0 = arith.constant 0 : i32
    %c0_i32_1 = arith.constant 0 : i32
    return %c0_i32, %c0_i32_0 : i32, i32
  }
  func.func @transform_3(%arg0: i32) -> (i32, i32) {
    %c0_i32 = arith.constant 0 : i32
    %c0_i32_0 = arith.constant 0 : i32
    %c0_i32_1 = arith.constant 0 : i32
    return %c0_i32, %c0_i32_0 : i32, i32
  }
  func.func @transform_4(%arg0: i32) -> (i32, i32) {
    %c0_i32 = arith.constant 0 : i32
    %c0_i32_0 = arith.constant 0 : i32
    %c0_i32_1 = arith.constant 0 : i32
    return %c0_i32, %c0_i32_0 : i32, i32
  }
  func.func @transform_5(%arg0: i32) -> (i32, i32) {
    %c0_i32 = arith.constant 0 : i32
    %c0_i32_0 = arith.constant 0 : i32
    %c0_i32_1 = arith.constant 0 : i32
    return %c0_i32, %c0_i32_0 : i32, i32
  }
  func.func @transform_6(%arg0: i32) -> (i32, i32) {
    %c0_i32 = arith.constant 0 : i32
    %c0_i32_0 = arith.constant 0 : i32
    %c0_i32_1 = arith.constant 0 : i32
    return %c0_i32, %c0_i32_0 : i32, i32
  }
  func.func @transform_7(%arg0: i32) -> (i32, i32) {
    %c0_i32 = arith.constant 0 : i32
    %c0_i32_0 = arith.constant 0 : i32
    %c0_i32_1 = arith.constant 0 : i32
    return %c0_i32, %c0_i32_0 : i32, i32
  }
  func.func @transform_8(%arg0: i32) -> (i32, i32) {
    %c0_i32 = arith.constant 0 : i32
    %c0_i32_0 = arith.constant 0 : i32
    %c0_i32_1 = arith.constant 0 : i32
    return %c0_i32, %c0_i32_0 : i32, i32
  }
  func.func @transform_9(%arg0: i32) -> (i32, i32) {
    %c0_i32 = arith.constant 0 : i32
    %c0_i32_0 = arith.constant 0 : i32
    %c0_i32_1 = arith.constant 0 : i32
    return %c0_i32, %c0_i32_0 : i32, i32
  }
  func.func @transform_10(%arg0: i32) -> (i32, i32) {
    %c0_i32 = arith.constant 0 : i32
    %c0_i32_0 = arith.constant 0 : i32
    %c0_i32_1 = arith.constant 0 : i32
    return %c0_i32, %c0_i32_0 : i32, i32
  }
  func.func @transform_11(%arg0: i32) -> (i32, i32) {
    %c0_i32 = arith.constant 0 : i32
    %c0_i32_0 = arith.constant 0 : i32
    %c0_i32_1 = arith.constant 0 : i32
    return %c0_i32, %c0_i32_0 : i32, i32
  }
  func.func @transform_12(%arg0: i32) -> (i32, i32) {
    %c0_i32 = arith.constant 0 : i32
    %c0_i32_0 = arith.constant 0 : i32
    %c0_i32_1 = arith.constant 0 : i32
    return %c0_i32, %c0_i32_0 : i32, i32
  }
  func.func @transform_13(%arg0: i32) -> (i32, i32) {
    %c0_i32 = arith.constant 0 : i32
    %c0_i32_0 = arith.constant 0 : i32
    %c0_i32_1 = arith.constant 0 : i32
    return %c0_i32, %c0_i32_0 : i32, i32
  }
  func.func @transform_14(%arg0: i32) -> (i32, i32, i32) {
    %c0_i32 = arith.constant 0 : i32
    %c0_i32_0 = arith.constant 0 : i32
    %c0_i32_1 = arith.constant 0 : i32
    return %arg0, %c0_i32, %c0_i32_0 : i32, i32, i32
  }
}

</mosaic_0001>

<llo_original>
// kernel: tiny_convnet_forward.1
$region0: #{tiny_convnet_forward.1}
  #allocation0 [shape = 'u32[]', space=smem, size = 0x4, offset = 0x4, fixed_abs, tag = 'smem constant byte address 0x4 - core index']
  #allocation1 [shape = 'u32[144,128]{1,0:T(1,128)}', space=vmem, size = 0x12000, scoped, tag = 'internal scratch']
  #allocation2 [shape = 'f32[16,16,27]{2,1,0:T(8,128)}', space=vmem, size = 0x20000, scoped, tag = 'scratch operand']
  #allocation3 [shape = 'f32[10,10,16]{2,1,0:T(8,128)}', space=vmem, size = 0x14000, scoped, tag = 'scratch operand']
  #allocation4 [shape = 'f32[8,8,144]{2,1,0:T(8,128)}', space=vmem, size = 0x10000, scoped, tag = 'scratch operand']
  #allocation5 [shape = 'f32[6,6,32]{2,1,0:T(8,128)}', space=vmem, size = 0x6000, scoped, tag = 'scratch operand']
  #allocation6 [shape = 'f32[16,288]{1,0:T(8,128)}', space=vmem, size = 0x6000, scoped, tag = 'scratch operand']
  #allocation7 [shape = 'f32[1,1024]{1,0:T(1,128)}', space=vmem, size = 0x1000, scoped, tag = 'scratch operand']
  %s0 = inlined_call_operand.vmem [shape: f32[2,18,18,3], index: 0, kind: input, shape index: {}]
  %s1 = inlined_call_operand.vmem [shape: f32[27,16], index: 1, kind: input, shape index: {}]
  %s2 = inlined_call_operand.vmem [shape: f32[1,16], index: 2, kind: input, shape index: {}]
  %s3 = inlined_call_operand.vmem [shape: f32[1,16], index: 3, kind: input, shape index: {}]
  %s4 = inlined_call_operand.vmem [shape: f32[144,32], index: 4, kind: input, shape index: {}]
  %s5 = inlined_call_operand.vmem [shape: f32[1,32], index: 5, kind: input, shape index: {}]
  %s6 = inlined_call_operand.vmem [shape: f32[1,32], index: 6, kind: input, shape index: {}]
  %s7 = inlined_call_operand.vmem [shape: f32[288,64], index: 7, kind: input, shape index: {}]
  %s8 = inlined_call_operand.vmem [shape: f32[1,64], index: 8, kind: input, shape index: {}]
  %s9 = inlined_call_operand.vmem [shape: f32[1,64], index: 9, kind: input, shape index: {}]
  %s10 = inlined_call_operand.vmem [shape: f32[1024,128], index: 10, kind: input, shape index: {}]
  %s11 = inlined_call_operand.vmem [shape: f32[1,128], index: 11, kind: input, shape index: {}]
  %s12 = inlined_call_operand.vmem [shape: f32[128,2], index: 12, kind: input, shape index: {}]
  %s13 = inlined_call_operand.vmem [shape: f32[1,2], index: 13, kind: input, shape index: {}]
  %s14 = inlined_call_operand.hbm [shape: f32[2,1,2], index: 14, kind: output, shape index: {}]
  %s15 = sld [smem:[#allocation0]]
  $region89: #{tiny_convnet_forward.1} parent=0
    _
  %s17 = ssub.s32 1, %s15
  %s18 = scalar_select 0, %s17, %s15
  $region1: #{tiny_convnet_forward.1} parent=0
    #allocation8 [shape = 'u8[1024]{0}', space=vmem, size = 0x400, scoped, tag = 'output window, operand 0']
    #allocation9 [shape = 's32[2]{0}', space=sflag, size = 0x8, scoped, tag = 'scoped memory for tiny_convnet_forward.1']
    %19 = vsyncpa [#allocation9], 0
    %s20 = scalar_lea.sflag [#allocation9], 1
    %21 = vsyncpa %s20, 0
    loop: start=0, step=1, limit=4
    $region2: #{tiny_convnet_forward.1} parent=1 // loop_pre_header
      _
    $region3: #{tiny_convnet_forward.1} parent=1 // loop_header
      %s23 = sphi 0, %s27
      %p24 = scmp.ge.s32.totalorder %s23, 4
      %s33 = sphi 0, %s35
      %s36 = sphi 0, %s33
      %s37 = sphi 0, %s36
      %s53 = sphi 0, %s37
      %s57 = sphi 0, %s57
      %s59 = sphi 0, %s57
      %s60 = sphi 0, %s59
      %s74 = sphi 0, %s60
      %s78 = sphi 0, %s78
      %s80 = sphi 0, %s78
      %s81 = sphi 0, %s80
      %s95 = sphi 0, %s81
      %s99 = sphi 0, %s99
      %s101 = sphi 0, %s99
      %s102 = sphi 0, %s101
      %s116 = sphi 0, %s102
      %s120 = sphi 0, %s120
      %s122 = sphi 0, %s120
      %s123 = sphi 0, %s122
      %s137 = sphi 0, %s123
      %s141 = sphi 0, %s141
      %s143 = sphi 0, %s141
      %s144 = sphi 0, %s143
      %s158 = sphi 0, %s144
      %s162 = sphi 0, %s162
      %s164 = sphi 0, %s162
      %s165 = sphi 0, %s164
      %s179 = sphi 0, %s165
      %s183 = sphi 0, %s183
      %s185 = sphi 0, %s183
      %s186 = sphi 0, %s185
      %s200 = sphi 0, %s186
      %s204 = sphi 0, %s204
      %s206 = sphi 0, %s204
      %s207 = sphi 0, %s206
      %s221 = sphi 0, %s207
      %s225 = sphi 0, %s225
      %s227 = sphi 0, %s225
      %s228 = sphi 0, %s227
      %s242 = sphi 0, %s228
      %s246 = sphi 0, %s246
      %s248 = sphi 0, %s246
      %s249 = sphi 0, %s248
      %s263 = sphi 0, %s249
      %s267 = sphi 0, %s267
      %s269 = sphi 0, %s267
      %s270 = sphi 0, %s269
      %s284 = sphi 0, %s270
      %s288 = sphi 0, %s288
      %s290 = sphi 0, %s288
      %s291 = sphi 0, %s290
      %s305 = sphi 0, %s291
      %s309 = sphi 0, %s309
      %s311 = sphi 0, %s309
      %s312 = sphi 0, %s311
      %s326 = sphi 0, %s312
      %s332 = sphi 0, %s334
      %s335 = sphi 0, %s332
      %s336 = sphi 0, %s335
      %s352 = sphi 0, %s336
    $region4: #{tiny_convnet_forward.1} parent=1 // loop_header_branch
      %26 = sbr.rel (%p24) target = $region8
    $region5: #{tiny_convnet_forward.1} parent=1 // loop_body
      %s28 = ssub.s32 %s23, 1
      %s29 = ssub.s32 %s23, 2
      %s30 = sadd.s32 %s23, 1
      %s31 = ssub.s32 %s23, %s30
      %p32 = scmp.eq.s32.totalorder %s31, 0
      %s34 = sadd.s32 %s33, 1
      %s35 = scalar_select %p32, %s33, %s34
      %p38 = pneg %p32
      %p39 = scmp.eq.s32.totalorder %s23, 1
      %p40 = por %p38, %p39
      %p41 = scmp.ne.s32.totalorder %s33, %s36
      %p42 = scmp.eq.s32.totalorder %s23, 0
      %p43 = por %p41, %p42
      %p44 = scmp.ne.s32.totalorder %s33, %s36
      %p45 = scmp.eq.s32.totalorder %s28, 1
      %p46 = por %p44, %p45
      %p47 = scmp.ne.s32.totalorder %s36, %s37
      %p48 = scmp.eq.s32.totalorder %s28, 0
      %p49 = por %p47, %p48
      %p50 = scmp.ne.s32.totalorder %s36, %s37
      %p51 = scmp.eq.s32.totalorder %s29, 1
      %p52 = por %p50, %p51
      %p54 = scmp.ne.s32.totalorder %s37, %s53
      %p55 = scmp.eq.s32.totalorder %s29, 0
      %p56 = por %p54, %p55
      %s58 = sadd.s32 %s57, 1
      %p61 = scmp.eq.s32.totalorder %s23, 1
      %p62 = scmp.ne.s32.totalorder %s57, %s59
      %p63 = scmp.eq.s32.totalorder %s23, 0
      %p64 = por %p62, %p63
      %p65 = scmp.ne.s32.totalorder %s57, %s59
      %p66 = scmp.eq.s32.totalorder %s28, 1
      %p67 = por %p65, %p66
      %p68 = scmp.ne.s32.totalorder %s59, %s60
      %p69 = scmp.eq.s32.totalorder %s28, 0
      %p70 = por %p68, %p69
      %p71 = scmp.ne.s32.totalorder %s59, %s60
      %p72 = scmp.eq.s32.totalorder %s29, 1
      %p73 = por %p71, %p72
      %p75 = scmp.ne.s32.totalorder %s60, %s74
      %p76 = scmp.eq.s32.totalorder %s29, 0
      %p77 = por %p75, %p76
      %s79 = sadd.s32 %s78, 1
      %p82 = scmp.eq.s32.totalorder %s23, 1
      %p83 = scmp.ne.s32.totalorder %s78, %s80
      %p84 = scmp.eq.s32.totalorder %s23, 0
      %p85 = por %p83, %p84
      %p86 = scmp.ne.s32.totalorder %s78, %s80
      %p87 = scmp.eq.s32.totalorder %s28, 1
      %p88 = por %p86, %p87
      %p89 = scmp.ne.s32.totalorder %s80, %s81
      %p90 = scmp.eq.s32.totalorder %s28, 0
      %p91 = por %p89, %p90
      %p92 = scmp.ne.s32.totalorder %s80, %s81
      %p93 = scmp.eq.s32.totalorder %s29, 1
      %p94 = por %p92, %p93
      %p96 = scmp.ne.s32.totalorder %s81, %s95
      %p97 = scmp.eq.s32.totalorder %s29, 0
      %p98 = por %p96, %p97
      %s100 = sadd.s32 %s99, 1
      %p103 = scmp.eq.s32.totalorder %s23, 1
      %p104 = scmp.ne.s32.totalorder %s99, %s101
      %p105 = scmp.eq.s32.totalorder %s23, 0
      %p106 = por %p104, %p105
      %p107 = scmp.ne.s32.totalorder %s99, %s101
      %p108 = scmp.eq.s32.totalorder %s28, 1
      %p109 = por %p107, %p108
      %p110 = scmp.ne.s32.totalorder %s101, %s102
      %p111 = scmp.eq.s32.totalorder %s28, 0
      %p112 = por %p110, %p111
      %p113 = scmp.ne.s32.totalorder %s101, %s102
      %p114 = scmp.eq.s32.totalorder %s29, 1
      %p115 = por %p113, %p114
      %p117 = scmp.ne.s32.totalorder %s102, %s116
      %p118 = scmp.eq.s32.totalorder %s29, 0
      %p119 = por %p117, %p118
      %s121 = sadd.s32 %s120, 1
      %p124 = scmp.eq.s32.totalorder %s23, 1
      %p125 = scmp.ne.s32.totalorder %s120, %s122
      %p126 = scmp.eq.s32.totalorder %s23, 0
      %p127 = por %p125, %p126
      %p128 = scmp.ne.s32.totalorder %s120, %s122
      %p129 = scmp.eq.s32.totalorder %s28, 1
      %p130 = por %p128, %p129
      %p131 = scmp.ne.s32.totalorder %s122, %s123
      %p132 = scmp.eq.s32.totalorder %s28, 0
      %p133 = por %p131, %p132
      %p134 = scmp.ne.s32.totalorder %s122, %s123
      %p135 = scmp.eq.s32.totalorder %s29, 1
      %p136 = por %p134, %p135
      %p138 = scmp.ne.s32.totalorder %s123, %s137
      %p139 = scmp.eq.s32.totalorder %s29, 0
      %p140 = por %p138, %p139
      %s142 = sadd.s32 %s141, 1
      %p145 = scmp.eq.s32.totalorder %s23, 1
      %p146 = scmp.ne.s32.totalorder %s141, %s143
      %p147 = scmp.eq.s32.totalorder %s23, 0
      %p148 = por %p146, %p147
      %p149 = scmp.ne.s32.totalorder %s141, %s143
      %p150 = scmp.eq.s32.totalorder %s28, 1
      %p151 = por %p149, %p150
      %p152 = scmp.ne.s32.totalorder %s143, %s144
      %p153 = scmp.eq.s32.totalorder %s28, 0
      %p154 = por %p152, %p153
      %p155 = scmp.ne.s32.totalorder %s143, %s144
      %p156 = scmp.eq.s32.totalorder %s29, 1
      %p157 = por %p155, %p156
      %p159 = scmp.ne.s32.totalorder %s144, %s158
      %p160 = scmp.eq.s32.totalorder %s29, 0
      %p161 = por %p159, %p160
      %s163 = sadd.s32 %s162, 1
      %p166 = scmp.eq.s32.totalorder %s23, 1
      %p167 = scmp.ne.s32.totalorder %s162, %s164
      %p168 = scmp.eq.s32.totalorder %s23, 0
      %p169 = por %p167, %p168
      %p170 = scmp.ne.s32.totalorder %s162, %s164
      %p171 = scmp.eq.s32.totalorder %s28, 1
      %p172 = por %p170, %p171
      %p173 = scmp.ne.s32.totalorder %s164, %s165
      %p174 = scmp.eq.s32.totalorder %s28, 0
      %p175 = por %p173, %p174
      %p176 = scmp.ne.s32.totalorder %s164, %s165
      %p177 = scmp.eq.s32.totalorder %s29, 1
      %p178 = por %p176, %p177
      %p180 = scmp.ne.s32.totalorder %s165, %s179
      %p181 = scmp.eq.s32.totalorder %s29, 0
      %p182 = por %p180, %p181
      %s184 = sadd.s32 %s183, 1
      %p187 = scmp.eq.s32.totalorder %s23, 1
      %p188 = scmp.ne.s32.totalorder %s183, %s185
      %p189 = scmp.eq.s32.totalorder %s23, 0
      %p190 = por %p188, %p189
      %p191 = scmp.ne.s32.totalorder %s183, %s185
      %p192 = scmp.eq.s32.totalorder %s28, 1
      %p193 = por %p191, %p192
      %p194 = scmp.ne.s32.totalorder %s185, %s186
      %p195 = scmp.eq.s32.totalorder %s28, 0
      %p196 = por %p194, %p195
      %p197 = scmp.ne.s32.totalorder %s185, %s186
      %p198 = scmp.eq.s32.totalorder %s29, 1
      %p199 = por %p197, %p198
      %p201 = scmp.ne.s32.totalorder %s186, %s200
      %p202 = scmp.eq.s32.totalorder %s29, 0
      %p203 = por %p201, %p202
      %s205 = sadd.s32 %s204, 1
      %p208 = scmp.eq.s32.totalorder %s23, 1
      %p209 = scmp.ne.s32.totalorder %s204, %s206
      %p210 = scmp.eq.s32.totalorder %s23, 0
      %p211 = por %p209, %p210
      %p212 = scmp.ne.s32.totalorder %s204, %s206
      %p213 = scmp.eq.s32.totalorder %s28, 1
      %p214 = por %p212, %p213
      %p215 = scmp.ne.s32.totalorder %s206, %s207
      %p216 = scmp.eq.s32.totalorder %s28, 0
      %p217 = por %p215, %p216
      %p218 = scmp.ne.s32.totalorder %s206, %s207
      %p219 = scmp.eq.s32.totalorder %s29, 1
      %p220 = por %p218, %p219
      %p222 = scmp.ne.s32.totalorder %s207, %s221
      %p223 = scmp.eq.s32.totalorder %s29, 0
      %p224 = por %p222, %p223
      %s226 = sadd.s32 %s225, 1
      %p229 = scmp.eq.s32.totalorder %s23, 1
      %p230 = scmp.ne.s32.totalorder %s225, %s227
      %p231 = scmp.eq.s32.totalorder %s23, 0
      %p232 = por %p230, %p231
      %p233 = scmp.ne.s32.totalorder %s225, %s227
      %p234 = scmp.eq.s32.totalorder %s28, 1
      %p235 = por %p233, %p234
      %p236 = scmp.ne.s32.totalorder %s227, %s228
      %p237 = scmp.eq.s32.totalorder %s28, 0
      %p238 = por %p236, %p237
      %p239 = scmp.ne.s32.totalorder %s227, %s228
      %p240 = scmp.eq.s32.totalorder %s29, 1
      %p241 = por %p239, %p240
      %p243 = scmp.ne.s32.totalorder %s228, %s242
      %p244 = scmp.eq.s32.totalorder %s29, 0
      %p245 = por %p243, %p244
      %s247 = sadd.s32 %s246, 1
      %p250 = scmp.eq.s32.totalorder %s23, 1
      %p251 = scmp.ne.s32.totalorder %s246, %s248
      %p252 = scmp.eq.s32.totalorder %s23, 0
      %p253 = por %p251, %p252
      %p254 = scmp.ne.s32.totalorder %s246, %s248
      %p255 = scmp.eq.s32.totalorder %s28, 1
      %p256 = por %p254, %p255
      %p257 = scmp.ne.s32.totalorder %s248, %s249
      %p258 = scmp.eq.s32.totalorder %s28, 0
      %p259 = por %p257, %p258
      %p260 = scmp.ne.s32.totalorder %s248, %s249
      %p261 = scmp.eq.s32.totalorder %s29, 1
      %p262 = por %p260, %p261
      %p264 = scmp.ne.s32.totalorder %s249, %s263
      %p265 = scmp.eq.s32.totalorder %s29, 0
      %p266 = por %p264, %p265
      %s268 = sadd.s32 %s267, 1
      %p271 = scmp.eq.s32.totalorder %s23, 1
      %p272 = scmp.ne.s32.totalorder %s267, %s269
      %p273 = scmp.eq.s32.totalorder %s23, 0
      %p274 = por %p272, %p273
      %p275 = scmp.ne.s32.totalorder %s267, %s269
      %p276 = scmp.eq.s32.totalorder %s28, 1
      %p277 = por %p275, %p276
      %p278 = scmp.ne.s32.totalorder %s269, %s270
      %p279 = scmp.eq.s32.totalorder %s28, 0
      %p280 = por %p278, %p279
      %p281 = scmp.ne.s32.totalorder %s269, %s270
      %p282 = scmp.eq.s32.totalorder %s29, 1
      %p283 = por %p281, %p282
      %p285 = scmp.ne.s32.totalorder %s270, %s284
      %p286 = scmp.eq.s32.totalorder %s29, 0
      %p287 = por %p285, %p286
      %s289 = sadd.s32 %s288, 1
      %p292 = scmp.eq.s32.totalorder %s23, 1
      %p293 = scmp.ne.s32.totalorder %s288, %s290
      %p294 = scmp.eq.s32.totalorder %s23, 0
      %p295 = por %p293, %p294
      %p296 = scmp.ne.s32.totalorder %s288, %s290
      %p297 = scmp.eq.s32.totalorder %s28, 1
      %p298 = por %p296, %p297
      %p299 = scmp.ne.s32.totalorder %s290, %s291
      %p300 = scmp.eq.s32.totalorder %s28, 0
      %p301 = por %p299, %p300
      %p302 = scmp.ne.s32.totalorder %s290, %s291
      %p303 = scmp.eq.s32.totalorder %s29, 1
      %p304 = por %p302, %p303
      %p306 = scmp.ne.s32.totalorder %s291, %s305
      %p307 = scmp.eq.s32.totalorder %s29, 0
      %p308 = por %p306, %p307
      %s310 = sadd.s32 %s309, 1
      %p313 = scmp.eq.s32.totalorder %s23, 1
      %p314 = scmp.ne.s32.totalorder %s309, %s311
      %p315 = scmp.eq.s32.totalorder %s23, 0
      %p316 = por %p314, %p315
      %p317 = scmp.ne.s32.totalorder %s309, %s311
      %p318 = scmp.eq.s32.totalorder %s28, 1
      %p319 = por %p317, %p318
      %p320 = scmp.ne.s32.totalorder %s311, %s312
      %p321 = scmp.eq.s32.totalorder %s28, 0
      %p322 = por %p320, %p321
      %p323 = scmp.ne.s32.totalorder %s311, %s312
      %p324 = scmp.eq.s32.totalorder %s29, 1
      %p325 = por %p323, %p324
      %p327 = scmp.ne.s32.totalorder %s312, %s326
      %p328 = scmp.eq.s32.totalorder %s29, 0
      %p329 = por %p327, %p328
      %s330 = ssub.s32 %s23, %s30
      %p331 = scmp.eq.s32.totalorder %s330, 0
      %s333 = sadd.s32 %s332, 1
      %s334 = scalar_select %p331, %s332, %s333
      %p337 = pneg %p331
      %p338 = scmp.eq.s32.totalorder %s23, 1
      %p339 = por %p337, %p338
      %p340 = scmp.ne.s32.totalorder %s332, %s335
      %p341 = scmp.eq.s32.totalorder %s23, 0
      %p342 = por %p340, %p341
      %p343 = scmp.ne.s32.totalorder %s332, %s335
      %p344 = scmp.eq.s32.totalorder %s28, 1
      %p345 = por %p343, %p344
      %p346 = scmp.ne.s32.totalorder %s335, %s336
      %p347 = scmp.eq.s32.totalorder %s28, 0
      %p348 = por %p346, %p347
      %p349 = scmp.ne.s32.totalorder %s335, %s336
      %p350 = scmp.eq.s32.totalorder %s29, 1
      %p351 = por %p349, %p350
      %p353 = scmp.ne.s32.totalorder %s336, %s352
      %p354 = scmp.eq.s32.totalorder %s29, 0
      %p355 = por %p353, %p354
      %p356 = scmp.le.s32.totalorder 1, %s23
      %p357 = scmp.lt.s32.totalorder %s23, 3
      %p358 = pnand %p356, %p357
      %p359 = pneg %p358
      // Predicated region
      $region9: #{tiny_convnet_forward.1} parent=5 // pred_check
        _
      $region10: #{tiny_convnet_forward.1} parent=5 // pred_check_branch
        %361 = sbr.rel (%p358) target = $region12
      $region11: #{tiny_convnet_forward.1} parent=5 // pred_region
        %s362 = ssub.s32 %s23, 1
        // Predicated region
        $region13: #{tiny_convnet_forward.1} parent=11 // pred_check
          %p363 = pneg %p70
        $region14: #{tiny_convnet_forward.1} parent=11 // pred_check_branch
          %365 = sbr.rel (%p363) target = $region16
        $region15: #{tiny_convnet_forward.1} parent=11 // pred_region
          _
        $region16: #{tiny_convnet_forward.1} parent=11 // pred_fallthru
          _
        // Predicated region
        $region17: #{tiny_convnet_forward.1} parent=11 // pred_check
          %p366 = pneg %p91
        $region18: #{tiny_convnet_forward.1} parent=11 // pred_check_branch
          %368 = sbr.rel (%p366) target = $region20
        $region19: #{tiny_convnet_forward.1} parent=11 // pred_region
          _
        $region20: #{tiny_convnet_forward.1} parent=11 // pred_fallthru
          _
        // Predicated region
        $region21: #{tiny_convnet_forward.1} parent=11 // pred_check
          %p369 = pneg %p112
        $region22: #{tiny_convnet_forward.1} parent=11 // pred_check_branch
          %371 = sbr.rel (%p369) target = $region24
        $region23: #{tiny_convnet_forward.1} parent=11 // pred_region
          _
        $region24: #{tiny_convnet_forward.1} parent=11 // pred_fallthru
          _
        // Predicated region
        $region25: #{tiny_convnet_forward.1} parent=11 // pred_check
          %p372 = pneg %p133
        $region26: #{tiny_convnet_forward.1} parent=11 // pred_check_branch
          %374 = sbr.rel (%p372) target = $region28
        $region27: #{tiny_convnet_forward.1} parent=11 // pred_region
          _
        $region28: #{tiny_convnet_forward.1} parent=11 // pred_fallthru
          _
        // Predicated region
        $region29: #{tiny_convnet_forward.1} parent=11 // pred_check
          %p375 = pneg %p154
        $region30: #{tiny_convnet_forward.1} parent=11 // pred_check_branch
          %377 = sbr.rel (%p375) target = $region32
        $region31: #{tiny_convnet_forward.1} parent=11 // pred_region
          _
        $region32: #{tiny_convnet_forward.1} parent=11 // pred_fallthru
          _
        // Predicated region
        $region33: #{tiny_convnet_forward.1} parent=11 // pred_check
          %p378 = pneg %p175
        $region34: #{tiny_convnet_forward.1} parent=11 // pred_check_branch
          %380 = sbr.rel (%p378) target = $region36
        $region35: #{tiny_convnet_forward.1} parent=11 // pred_region
          _
        $region36: #{tiny_convnet_forward.1} parent=11 // pred_fallthru
          _
        // Predicated region
        $region37: #{tiny_convnet_forward.1} parent=11 // pred_check
          %p381 = pneg %p196
        $region38: #{tiny_convnet_forward.1} parent=11 // pred_check_branch
          %383 = sbr.rel (%p381) target = $region40
        $region39: #{tiny_convnet_forward.1} parent=11 // pred_region
          _
        $region40: #{tiny_convnet_forward.1} parent=11 // pred_fallthru
          _
        // Predicated region
        $region41: #{tiny_convnet_forward.1} parent=11 // pred_check
          %p384 = pneg %p217
        $region42: #{tiny_convnet_forward.1} parent=11 // pred_check_branch
          %386 = sbr.rel (%p384) target = $region44
        $region43: #{tiny_convnet_forward.1} parent=11 // pred_region
          _
        $region44: #{tiny_convnet_forward.1} parent=11 // pred_fallthru
          _
        // Predicated region
        $region45: #{tiny_convnet_forward.1} parent=11 // pred_check
          %p387 = pneg %p238
        $region46: #{tiny_convnet_forward.1} parent=11 // pred_check_branch
          %389 = sbr.rel (%p387) target = $region48
        $region47: #{tiny_convnet_forward.1} parent=11 // pred_region
          _
        $region48: #{tiny_convnet_forward.1} parent=11 // pred_fallthru
          _
        // Predicated region
        $region49: #{tiny_convnet_forward.1} parent=11 // pred_check
          %p390 = pneg %p259
        $region50: #{tiny_convnet_forward.1} parent=11 // pred_check_branch
          %392 = sbr.rel (%p390) target = $region52
        $region51: #{tiny_convnet_forward.1} parent=11 // pred_region
          _
        $region52: #{tiny_convnet_forward.1} parent=11 // pred_fallthru
          _
        // Predicated region
        $region53: #{tiny_convnet_forward.1} parent=11 // pred_check
          %p393 = pneg %p280
        $region54: #{tiny_convnet_forward.1} parent=11 // pred_check_branch
          %395 = sbr.rel (%p393) target = $region56
        $region55: #{tiny_convnet_forward.1} parent=11 // pred_region
          _
        $region56: #{tiny_convnet_forward.1} parent=11 // pred_fallthru
          _
        // Predicated region
        $region57: #{tiny_convnet_forward.1} parent=11 // pred_check
          %p396 = pneg %p301
        $region58: #{tiny_convnet_forward.1} parent=11 // pred_check_branch
          %398 = sbr.rel (%p396) target = $region60
        $region59: #{tiny_convnet_forward.1} parent=11 // pred_region
          _
        $region60: #{tiny_convnet_forward.1} parent=11 // pred_fallthru
          _
        // Predicated region
        $region61: #{tiny_convnet_forward.1} parent=11 // pred_check
          %p399 = pneg %p322
        $region62: #{tiny_convnet_forward.1} parent=11 // pred_check_branch
          %401 = sbr.rel (%p399) target = $region64
        $region63: #{tiny_convnet_forward.1} parent=11 // pred_region
          _
        $region64: #{tiny_convnet_forward.1} parent=11 // pred_fallthru
          _
      $region12: #{tiny_convnet_forward.1} parent=5 // pred_fallthru
        _
      %p402 = scmp.lt.s32.totalorder %s23, 2
      // Predicated region
      $region65: #{tiny_convnet_forward.1} parent=5 // pred_check
        %p403 = pneg %p402
      $region66: #{tiny_convnet_forward.1} parent=5 // pred_check_branch
        %405 = sbr.rel (%p403) target = $region68
      $region67: #{tiny_convnet_forward.1} parent=5 // pred_region
        // Predicated region
        $region69: #{tiny_convnet_forward.1} parent=67 // pred_check
          %p406 = pneg %p43
        $region70: #{tiny_convnet_forward.1} parent=67 // pred_check_branch
          %408 = sbr.rel (%p406) target = $region72
        $region71: #{tiny_convnet_forward.1} parent=67 // pred_region
          %p409 = scmp.lt.s32.totalorder %s23, 1
          %s410 = scalar_select %p409, %s23, 1
          %s411 = smul.addr %s410, 54
          %s412 = smul.addr %s411, 8
          %s413 = scalar_lea.vmem %s0, %s412
        $region72: #{tiny_convnet_forward.1} parent=67 // pred_fallthru
          _
      $region68: #{tiny_convnet_forward.1} parent=5 // pred_fallthru
        _
      %p414 = scmp.le.s32.totalorder 1, %s23
      %p415 = scmp.lt.s32.totalorder %s23, 3
      %p416 = pnand %p414, %p415
      %p417 = pneg %p416
      // Predicated region
      $region73: #{tiny_convnet_forward.1} parent=5 // pred_check
        _
      $region74: #{tiny_convnet_forward.1} parent=5 // pred_check_branch
        %419 = sbr.rel (%p416) target = $region76
      $region75: #{tiny_convnet_forward.1} parent=5 // pred_region
        %s420 = ssub.s32 %s23, 1
        %p421 = scmp.lt.s32.totalorder %s28, 1
        %s422 = scalar_select %p421, %s28, 1
        %s423 = smul.addr %s422, 54
        %s424 = smul.addr %s423, 8
        %s425 = scalar_lea.vmem %s0, %s424
        %p426 = pneg %p49
        %p427 = pneg %p46
        %p428 = pneg %p70
        %p429 = pneg %p67
        %p430 = pneg %p91
        %p431 = pneg %p88
        %p432 = pneg %p112
        %p433 = pneg %p109
        %p434 = pneg %p133
        %p435 = pneg %p130
        %p436 = pneg %p154
        %p437 = pneg %p151
        %p438 = pneg %p175
        %p439 = pneg %p172
        %p440 = pneg %p196
        %p441 = pneg %p193
        %p442 = pneg %p217
        %p443 = pneg %p214
        %p444 = pneg %p238
        %p445 = pneg %p235
        %p446 = pneg %p259
        %p447 = pneg %p256
        %p448 = pneg %p280
        %p449 = pneg %p277
        %p450 = pneg %p301
        %p451 = pneg %p298
        %p452 = pneg %p322
        %p453 = pneg %p319
        %p454 = pneg %p348
        %p455 = pneg %p345
        %s456 = sand.u32 %s335, 1
        %s457 = scalar_lea.sflag [#allocation9], %s456
        %s458 = sand.u32 %s335, 1
        %s459 = scalar_lea.vmem [#allocation8], %s458
        %p460 = scmp.lt.s32.totalorder %s28, 1
        %s461 = scalar_select %p460, %s28, 1
        %s462 = smul.addr %s461, 54
        %s463 = smul.addr %s462, 8
        %s464 = scalar_lea.vmem %s0, %s463
        %v465 = vld [vmem:[%s464] sm:$0xff]
        %v466 = vld [vmem:[%s464 + $0x8] sm:$0xff]
        %v467 = vld [vmem:[%s464 + $0x18] sm:$0xff]
        %v468 = vld [vmem:[%s464 + $0x20] sm:$0xff]
        %v469 = vld [vmem:[%s464 + $0x30] sm:$0xff]
        %v470 = vld [vmem:[%s464 + $0x38] sm:$0xff]
        %v471 = vld [vmem:[%s464 + $0x48] sm:$0xff]
        %v472 = vld [vmem:[%s464 + $0x50] sm:$0xff]
        %v473 = vld [vmem:[%s464 + $0x60] sm:$0xff]
        %v474 = vld [vmem:[%s464 + $0x68] sm:$0xff]
        %v475 = vld [vmem:[%s464 + $0x78] sm:$0xff]
        %v476 = vld [vmem:[%s464 + $0x80] sm:$0xff]
        %v477 = vld [vmem:[%s464 + $0x90] sm:$0xff]
        %v478 = vld [vmem:[%s464 + $0x98] sm:$0xff]
        %v479 = vld [vmem:[%s464 + $0xa8] sm:$0xff]
        %v480 = vld [vmem:[%s464 + $0xb0] sm:$0xff]
        %v481 = vld [vmem:[%s464 + $0xc0] sm:$0xff]
        %v482 = vld [vmem:[%s464 + $0xc8] sm:$0xff]
        %v483 = vld [vmem:[%s464 + $0xd8] sm:$0xff]
        %v484 = vld [vmem:[%s464 + $0xe0] sm:$0xff]
        %v485 = vld [vmem:[%s464 + $0xf0] sm:$0xff]
        %v486 = vld [vmem:[%s464 + $0xf8] sm:$0xff]
        %v487 = vld [vmem:[%s464 + $0x108] sm:$0xff]
        %v488 = vld [vmem:[%s464 + $0x110] sm:$0xff]
        %v489 = vld [vmem:[%s464 + $0x120] sm:$0xff]
        %v490 = vld [vmem:[%s464 + $0x128] sm:$0xff]
        %v491 = vld [vmem:[%s464 + $0x138] sm:$0xff]
        %v492 = vld [vmem:[%s464 + $0x140] sm:$0xff]
        %v493 = vld [vmem:[%s464 + $0x150] sm:$0xff]
        %v494 = vld [vmem:[%s464 + $0x158] sm:$0xff]
        %v495 = vld [vmem:[%s464 + $0x168] sm:$0xff]
        %v496 = vld [vmem:[%s464 + $0x170] sm:$0xff]
        %vm497 = vcmask 23552
        %498 = vst.msk [vmem:[#allocation2] sm:$0xff] %vm497, %v465
        %499 = vst.msk [vmem:[#allocation2 + $0x8] sm:$0xff] %vm497, %v466
        %500 = vst.msk [vmem:[#allocation2 + $0x10] sm:$0xff] %vm497, %v467
        %501 = vst.msk [vmem:[#allocation2 + $0x18] sm:$0xff] %vm497, %v468
        %502 = vst.msk [vmem:[#allocation2 + $0x20] sm:$0xff] %vm497, %v469
        %503 = vst.msk [vmem:[#allocation2 + $0x28] sm:$0xff] %vm497, %v470
        %504 = vst.msk [vmem:[#allocation2 + $0x30] sm:$0xff] %vm497, %v471
        %505 = vst.msk [vmem:[#allocation2 + $0x38] sm:$0xff] %vm497, %v472
        %506 = vst.msk [vmem:[#allocation2 + $0x40] sm:$0xff] %vm497, %v473
        %507 = vst.msk [vmem:[#allocation2 + $0x48] sm:$0xff] %vm497, %v474
        %508 = vst.msk [vmem:[#allocation2 + $0x50] sm:$0xff] %vm497, %v475
        %509 = vst.msk [vmem:[#allocation2 + $0x58] sm:$0xff] %vm497, %v476
        %510 = vst.msk [vmem:[#allocation2 + $0x60] sm:$0xff] %vm497, %v477
        %511 = vst.msk [vmem:[#allocation2 + $0x68] sm:$0xff] %vm497, %v478
        %512 = vst.msk [vmem:[#allocation2 + $0x70] sm:$0xff] %vm497, %v479
        %513 = vst.msk [vmem:[#allocation2 + $0x78] sm:$0xff] %vm497, %v480
        %514 = vst.msk [vmem:[#allocation2 + $0x80] sm:$0xff] %vm497, %v481
        %515 = vst.msk [vmem:[#allocation2 + $0x88] sm:$0xff] %vm497, %v482
        %516 = vst.msk [vmem:[#allocation2 + $0x90] sm:$0xff] %vm497, %v483
        %517 = vst.msk [vmem:[#allocation2 + $0x98] sm:$0xff] %vm497, %v484
        %518 = vst.msk [vmem:[#allocation2 + $0xa0] sm:$0xff] %vm497, %v485
        %519 = vst.msk [vmem:[#allocation2 + $0xa8] sm:$0xff] %vm497, %v486
        %520 = vst.msk [vmem:[#allocation2 + $0xb0] sm:$0xff] %vm497, %v487
        %521 = vst.msk [vmem:[#allocation2 + $0xb8] sm:$0xff] %vm497, %v488
        %522 = vst.msk [vmem:[#allocation2 + $0xc0] sm:$0xff] %vm497, %v489
        %523 = vst.msk [vmem:[#allocation2 + $0xc8] sm:$0xff] %vm497, %v490
        %524 = vst.msk [vmem:[#allocation2 + $0xd0] sm:$0xff] %vm497, %v491
        %525 = vst.msk [vmem:[#allocation2 + $0xd8] sm:$0xff] %vm497, %v492
        %526 = vst.msk [vmem:[#allocation2 + $0xe0] sm:$0xff] %vm497, %v493
        %527 = vst.msk [vmem:[#allocation2 + $0xe8] sm:$0xff] %vm497, %v494
        %528 = vst.msk [vmem:[#allocation2 + $0xf0] sm:$0xff] %vm497, %v495
        %529 = vst.msk [vmem:[#allocation2 + $0xf8] sm:$0xff] %vm497, %v496
        %v530 = vld [vmem:[%s464 + $0x1] sm:$0xff]
        %v531 = vld [vmem:[%s464 + $0x9] sm:$0xff]
        %v532 = vld [vmem:[%s464 + $0x19] sm:$0xff]
        %v533 = vld [vmem:[%s464 + $0x21] sm:$0xff]
        %v534 = vld [vmem:[%s464 + $0x31] sm:$0xff]
        %v535 = vld [vmem:[%s464 + $0x39] sm:$0xff]
        %v536 = vld [vmem:[%s464 + $0x49] sm:$0xff]
        %v537 = vld [vmem:[%s464 + $0x51] sm:$0xff]
        %v538 = vld [vmem:[%s464 + $0x61] sm:$0xff]
        %v539 = vld [vmem:[%s464 + $0x69] sm:$0xff]
        %v540 = vld [vmem:[%s464 + $0x79] sm:$0xff]
        %v541 = vld [vmem:[%s464 + $0x81] sm:$0xff]
        %v542 = vld [vmem:[%s464 + $0x91] sm:$0xff]
        %v543 = vld [vmem:[%s464 + $0x99] sm:$0xff]
        %v544 = vld [vmem:[%s464 + $0xa9] sm:$0xff]
        %v545 = vld [vmem:[%s464 + $0xb1] sm:$0xff]
        %v546 = vld [vmem:[%s464 + $0xc1] sm:$0xff]
        %v547 = vld [vmem:[%s464 + $0xc9] sm:$0xff]
        %v548 = vld [vmem:[%s464 + $0xd9] sm:$0xff]
        %v549 = vld [vmem:[%s464 + $0xe1] sm:$0xff]
        %v550 = vld [vmem:[%s464 + $0xf1] sm:$0xff]
        %v551 = vld [vmem:[%s464 + $0xf9] sm:$0xff]
        %v552 = vld [vmem:[%s464 + $0x109] sm:$0xff]
        %v553 = vld [vmem:[%s464 + $0x111] sm:$0xff]
        %v554 = vld [vmem:[%s464 + $0x121] sm:$0xff]
        %v555 = vld [vmem:[%s464 + $0x129] sm:$0xff]
        %v556 = vld [vmem:[%s464 + $0x139] sm:$0xff]
        %v557 = vld [vmem:[%s464 + $0x141] sm:$0xff]
        %v558 = vld [vmem:[%s464 + $0x151] sm:$0xff]
        %v559 = vld [vmem:[%s464 + $0x159] sm:$0xff]
        %v560 = vld [vmem:[%s464 + $0x169] sm:$0xff]
        %v561 = vld [vmem:[%s464 + $0x171] sm:$0xff]
        %594 = vrot.lane.b32.xlu0 %v530, 3
        %v595 = vpop.permute.xlu0 %594
        %596 = vrot.lane.b32.xlu0 %v531, 3
        %v597 = vpop.permute.xlu0 %596
        %598 = vrot.lane.b32.xlu0 %v532, 3
        %v599 = vpop.permute.xlu0 %598
        %600 = vrot.lane.b32.xlu0 %v533, 3
        %v601 = vpop.permute.xlu0 %600
        %602 = vrot.lane.b32.xlu0 %v534, 3
        %v603 = vpop.permute.xlu0 %602
        %604 = vrot.lane.b32.xlu0 %v535, 3
        %v605 = vpop.permute.xlu0 %604
        %606 = vrot.lane.b32.xlu0 %v536, 3
        %v607 = vpop.permute.xlu0 %606
        %608 = vrot.lane.b32.xlu0 %v537, 3
        %v609 = vpop.permute.xlu0 %608
        %610 = vrot.lane.b32.xlu0 %v538, 3
        %v611 = vpop.permute.xlu0 %610
        %612 = vrot.lane.b32.xlu0 %v539, 3
        %v613 = vpop.permute.xlu0 %612
        %614 = vrot.lane.b32.xlu0 %v540, 3
        %v615 = vpop.permute.xlu0 %614
        %616 = vrot.lane.b32.xlu0 %v541, 3
        %v617 = vpop.permute.xlu0 %616
        %618 = vrot.lane.b32.xlu0 %v542, 3
        %v619 = vpop.permute.xlu0 %618
        %620 = vrot.lane.b32.xlu0 %v543, 3
        %v621 = vpop.permute.xlu0 %620
        %622 = vrot.lane.b32.xlu0 %v544, 3
        %v623 = vpop.permute.xlu0 %622
        %624 = vrot.lane.b32.xlu0 %v545, 3
        %v625 = vpop.permute.xlu0 %624
        %626 = vrot.lane.b32.xlu0 %v546, 3
        %v627 = vpop.permute.xlu0 %626
        %628 = vrot.lane.b32.xlu0 %v547, 3
        %v629 = vpop.permute.xlu0 %628
        %630 = vrot.lane.b32.xlu0 %v548, 3
        %v631 = vpop.permute.xlu0 %630
        %632 = vrot.lane.b32.xlu0 %v549, 3
        %v633 = vpop.permute.xlu0 %632
        %634 = vrot.lane.b32.xlu0 %v550, 3
        %v635 = vpop.permute.xlu0 %634
        %636 = vrot.lane.b32.xlu0 %v551, 3
        %v637 = vpop.permute.xlu0 %636
        %638 = vrot.lane.b32.xlu0 %v552, 3
        %v639 = vpop.permute.xlu0 %638
        %640 = vrot.lane.b32.xlu0 %v553, 3
        %v641 = vpop.permute.xlu0 %640
        %642 = vrot.lane.b32.xlu0 %v554, 3
        %v643 = vpop.permute.xlu0 %642
        %644 = vrot.lane.b32.xlu0 %v555, 3
        %v645 = vpop.permute.xlu0 %644
        %646 = vrot.lane.b32.xlu0 %v556, 3
        %v647 = vpop.permute.xlu0 %646
        %648 = vrot.lane.b32.xlu0 %v557, 3
        %v649 = vpop.permute.xlu0 %648
        %650 = vrot.lane.b32.xlu0 %v558, 3
        %v651 = vpop.permute.xlu0 %650
        %652 = vrot.lane.b32.xlu0 %v559, 3
        %v653 = vpop.permute.xlu0 %652
        %654 = vrot.lane.b32.xlu0 %v560, 3
        %v655 = vpop.permute.xlu0 %654
        %656 = vrot.lane.b32.xlu0 %v561, 3
        %v657 = vpop.permute.xlu0 %656
        %vm690 = vcmask 48152
        %691 = vst.msk [vmem:[#allocation2] sm:$0xff] %vm690, %v595
        %692 = vst.msk [vmem:[#allocation2 + $0x8] sm:$0xff] %vm690, %v597
        %693 = vst.msk [vmem:[#allocation2 + $0x10] sm:$0xff] %vm690, %v599
        %694 = vst.msk [vmem:[#allocation2 + $0x18] sm:$0xff] %vm690, %v601
        %695 = vst.msk [vmem:[#allocation2 + $0x20] sm:$0xff] %vm690, %v603
        %696 = vst.msk [vmem:[#allocation2 + $0x28] sm:$0xff] %vm690, %v605
        %697 = vst.msk [vmem:[#allocation2 + $0x30] sm:$0xff] %vm690, %v607
        %698 = vst.msk [vmem:[#allocation2 + $0x38] sm:$0xff] %vm690, %v609
        %699 = vst.msk [vmem:[#allocation2 + $0x40] sm:$0xff] %vm690, %v611
        %700 = vst.msk [vmem:[#allocation2 + $0x48] sm:$0xff] %vm690, %v613
        %701 = vst.msk [vmem:[#allocation2 + $0x50] sm:$0xff] %vm690, %v615
        %702 = vst.msk [vmem:[#allocation2 + $0x58] sm:$0xff] %vm690, %v617
        %703 = vst.msk [vmem:[#allocation2 + $0x60] sm:$0xff] %vm690, %v619
        %704 = vst.msk [vmem:[#allocation2 + $0x68] sm:$0xff] %vm690, %v621
        %705 = vst.msk [vmem:[#allocation2 + $0x70] sm:$0xff] %vm690, %v623
        %706 = vst.msk [vmem:[#allocation2 + $0x78] sm:$0xff] %vm690, %v625
        %707 = vst.msk [vmem:[#allocation2 + $0x80] sm:$0xff] %vm690, %v627
        %708 = vst.msk [vmem:[#allocation2 + $0x88] sm:$0xff] %vm690, %v629
        %709 = vst.msk [vmem:[#allocation2 + $0x90] sm:$0xff] %vm690, %v631
        %710 = vst.msk [vmem:[#allocation2 + $0x98] sm:$0xff] %vm690, %v633
        %711 = vst.msk [vmem:[#allocation2 + $0xa0] sm:$0xff] %vm690, %v635
        %712 = vst.msk [vmem:[#allocation2 + $0xa8] sm:$0xff] %vm690, %v637
        %713 = vst.msk [vmem:[#allocation2 + $0xb0] sm:$0xff] %vm690, %v639
        %714 = vst.msk [vmem:[#allocation2 + $0xb8] sm:$0xff] %vm690, %v641
        %715 = vst.msk [vmem:[#allocation2 + $0xc0] sm:$0xff] %vm690, %v643
        %716 = vst.msk [vmem:[#allocation2 + $0xc8] sm:$0xff] %vm690, %v645
        %717 = vst.msk [vmem:[#allocation2 + $0xd0] sm:$0xff] %vm690, %v647
        %718 = vst.msk [vmem:[#allocation2 + $0xd8] sm:$0xff] %vm690, %v649
        %719 = vst.msk [vmem:[#allocation2 + $0xe0] sm:$0xff] %vm690, %v651
        %720 = vst.msk [vmem:[#allocation2 + $0xe8] sm:$0xff] %vm690, %v653
        %721 = vst.msk [vmem:[#allocation2 + $0xf0] sm:$0xff] %vm690, %v655
        %722 = vst.msk [vmem:[#allocation2 + $0xf8] sm:$0xff] %vm690, %v657
        %v723 = vld [vmem:[%s464 + $0x2] sm:$0xff]
        %v724 = vld [vmem:[%s464 + $0xa] sm:$0xff]
        %v725 = vld [vmem:[%s464 + $0x1a] sm:$0xff]
        %v726 = vld [vmem:[%s464 + $0x22] sm:$0xff]
        %v727 = vld [vmem:[%s464 + $0x32] sm:$0xff]
        %v728 = vld [vmem:[%s464 + $0x3a] sm:$0xff]
        %v729 = vld [vmem:[%s464 + $0x4a] sm:$0xff]
        %v730 = vld [vmem:[%s464 + $0x52] sm:$0xff]
        %v731 = vld [vmem:[%s464 + $0x62] sm:$0xff]
        %v732 = vld [vmem:[%s464 + $0x6a] sm:$0xff]
        %v733 = vld [vmem:[%s464 + $0x7a] sm:$0xff]
        %v734 = vld [vmem:[%s464 + $0x82] sm:$0xff]
        %v735 = vld [vmem:[%s464 + $0x92] sm:$0xff]
        %v736 = vld [vmem:[%s464 + $0x9a] sm:$0xff]
        %v737 = vld [vmem:[%s464 + $0xaa] sm:$0xff]
        %v738 = vld [vmem:[%s464 + $0xb2] sm:$0xff]
        %v739 = vld [vmem:[%s464 + $0xc2] sm:$0xff]
        %v740 = vld [vmem:[%s464 + $0xca] sm:$0xff]
        %v741 = vld [vmem:[%s464 + $0xda] sm:$0xff]
        %v742 = vld [vmem:[%s464 + $0xe2] sm:$0xff]
        %v743 = vld [vmem:[%s464 + $0xf2] sm:$0xff]
        %v744 = vld [vmem:[%s464 + $0xfa] sm:$0xff]
        %v745 = vld [vmem:[%s464 + $0x10a] sm:$0xff]
        %v746 = vld [vmem:[%s464 + $0x112] sm:$0xff]
        %v747 = vld [vmem:[%s464 + $0x122] sm:$0xff]
        %v748 = vld [vmem:[%s464 + $0x12a] sm:$0xff]
        %v749 = vld [vmem:[%s464 + $0x13a] sm:$0xff]
        %v750 = vld [vmem:[%s464 + $0x142] sm:$0xff]
        %v751 = vld [vmem:[%s464 + $0x152] sm:$0xff]
        %v752 = vld [vmem:[%s464 + $0x15a] sm:$0xff]
        %v753 = vld [vmem:[%s464 + $0x16a] sm:$0xff]
        %v754 = vld [vmem:[%s464 + $0x172] sm:$0xff]
        %787 = vrot.lane.b32.xlu0 %v723, 6
        %v788 = vpop.permute.xlu0 %787
        %789 = vrot.lane.b32.xlu0 %v724, 6
        %v790 = vpop.permute.xlu0 %789
        %791 = vrot.lane.b32.xlu0 %v725, 6
        %v792 = vpop.permute.xlu0 %791
        %793 = vrot.lane.b32.xlu0 %v726, 6
        %v794 = vpop.permute.xlu0 %793
        %795 = vrot.lane.b32.xlu0 %v727, 6
        %v796 = vpop.permute.xlu0 %795
        %797 = vrot.lane.b32.xlu0 %v728, 6
        %v798 = vpop.permute.xlu0 %797
        %799 = vrot.lane.b32.xlu0 %v729, 6
        %v800 = vpop.permute.xlu0 %799
        %801 = vrot.lane.b32.xlu0 %v730, 6
        %v802 = vpop.permute.xlu0 %801
        %803 = vrot.lane.b32.xlu0 %v731, 6
        %v804 = vpop.permute.xlu0 %803
        %805 = vrot.lane.b32.xlu0 %v732, 6
        %v806 = vpop.permute.xlu0 %805
        %807 = vrot.lane.b32.xlu0 %v733, 6
        %v808 = vpop.permute.xlu0 %807
        %809 = vrot.lane.b32.xlu0 %v734, 6
        %v810 = vpop.permute.xlu0 %809
        %811 = vrot.lane.b32.xlu0 %v735, 6
        %v812 = vpop.permute.xlu0 %811
        %813 = vrot.lane.b32.xlu0 %v736, 6
        %v814 = vpop.permute.xlu0 %813
        %815 = vrot.lane.b32.xlu0 %v737, 6
        %v816 = vpop.permute.xlu0 %815
        %817 = vrot.lane.b32.xlu0 %v738, 6
        %v818 = vpop.permute.xlu0 %817
        %819 = vrot.lane.b32.xlu0 %v739, 6
        %v820 = vpop.permute.xlu0 %819
        %821 = vrot.lane.b32.xlu0 %v740, 6
        %v822 = vpop.permute.xlu0 %821
        %823 = vrot.lane.b32.xlu0 %v741, 6
        %v824 = vpop.permute.xlu0 %823
        %825 = vrot.lane.b32.xlu0 %v742, 6
        %v826 = vpop.permute.xlu0 %825
        %827 = vrot.lane.b32.xlu0 %v743, 6
        %v828 = vpop.permute.xlu0 %827
        %829 = vrot.lane.b32.xlu0 %v744, 6
        %v830 = vpop.permute.xlu0 %829
        %831 = vrot.lane.b32.xlu0 %v745, 6
        %v832 = vpop.permute.xlu0 %831
        %833 = vrot.lane.b32.xlu0 %v746, 6
        %v834 = vpop.permute.xlu0 %833
        %835 = vrot.lane.b32.xlu0 %v747, 6
        %v836 = vpop.permute.xlu0 %835
        %837 = vrot.lane.b32.xlu0 %v748, 6
        %v838 = vpop.permute.xlu0 %837
        %839 = vrot.lane.b32.xlu0 %v749, 6
        %v840 = vpop.permute.xlu0 %839
        %841 = vrot.lane.b32.xlu0 %v750, 6
        %v842 = vpop.permute.xlu0 %841
        %843 = vrot.lane.b32.xlu0 %v751, 6
        %v844 = vpop.permute.xlu0 %843
        %845 = vrot.lane.b32.xlu0 %v752, 6
        %v846 = vpop.permute.xlu0 %845
        %847 = vrot.lane.b32.xlu0 %v753, 6
        %v848 = vpop.permute.xlu0 %847
        %849 = vrot.lane.b32.xlu0 %v754, 6
        %v850 = vpop.permute.xlu0 %849
        %vm883 = vcmask 72752
        %884 = vst.msk [vmem:[#allocation2] sm:$0xff] %vm883, %v788
        %885 = vst.msk [vmem:[#allocation2 + $0x8] sm:$0xff] %vm883, %v790
        %886 = vst.msk [vmem:[#allocation2 + $0x10] sm:$0xff] %vm883, %v792
        %887 = vst.msk [vmem:[#allocation2 + $0x18] sm:$0xff] %vm883, %v794
        %888 = vst.msk [vmem:[#allocation2 + $0x20] sm:$0xff] %vm883, %v796
        %889 = vst.msk [vmem:[#allocation2 + $0x28] sm:$0xff] %vm883, %v798
        %890 = vst.msk [vmem:[#allocation2 + $0x30] sm:$0xff] %vm883, %v800
        %891 = vst.msk [vmem:[#allocation2 + $0x38] sm:$0xff] %vm883, %v802
        %892 = vst.msk [vmem:[#allocation2 + $0x40] sm:$0xff] %vm883, %v804
        %893 = vst.msk [vmem:[#allocation2 + $0x48] sm:$0xff] %vm883, %v806
        %894 = vst.msk [vmem:[#allocation2 + $0x50] sm:$0xff] %vm883, %v808
        %895 = vst.msk [vmem:[#allocation2 + $0x58] sm:$0xff] %vm883, %v810
        %896 = vst.msk [vmem:[#allocation2 + $0x60] sm:$0xff] %vm883, %v812
        %897 = vst.msk [vmem:[#allocation2 + $0x68] sm:$0xff] %vm883, %v814
        %898 = vst.msk [vmem:[#allocation2 + $0x70] sm:$0xff] %vm883, %v816
        %899 = vst.msk [vmem:[#allocation2 + $0x78] sm:$0xff] %vm883, %v818
        %900 = vst.msk [vmem:[#allocation2 + $0x80] sm:$0xff] %vm883, %v820
        %901 = vst.msk [vmem:[#allocation2 + $0x88] sm:$0xff] %vm883, %v822
        %902 = vst.msk [vmem:[#allocation2 + $0x90] sm:$0xff] %vm883, %v824
        %903 = vst.msk [vmem:[#allocation2 + $0x98] sm:$0xff] %vm883, %v826
        %904 = vst.msk [vmem:[#allocation2 + $0xa0] sm:$0xff] %vm883, %v828
        %905 = vst.msk [vmem:[#allocation2 + $0xa8] sm:$0xff] %vm883, %v830
        %906 = vst.msk [vmem:[#allocation2 + $0xb0] sm:$0xff] %vm883, %v832
        %907 = vst.msk [vmem:[#allocation2 + $0xb8] sm:$0xff] %vm883, %v834
        %908 = vst.msk [vmem:[#allocation2 + $0xc0] sm:$0xff] %vm883, %v836
        %909 = vst.msk [vmem:[#allocation2 + $0xc8] sm:$0xff] %vm883, %v838
        %910 = vst.msk [vmem:[#allocation2 + $0xd0] sm:$0xff] %vm883, %v840
        %911 = vst.msk [vmem:[#allocation2 + $0xd8] sm:$0xff] %vm883, %v842
        %912 = vst.msk [vmem:[#allocation2 + $0xe0] sm:$0xff] %vm883, %v844
        %913 = vst.msk [vmem:[#allocation2 + $0xe8] sm:$0xff] %vm883, %v846
        %914 = vst.msk [vmem:[#allocation2 + $0xf0] sm:$0xff] %vm883, %v848
        %915 = vst.msk [vmem:[#allocation2 + $0xf8] sm:$0xff] %vm883, %v850
        %s916 = scalar_lea.vmem %s464, 24
        %v917 = vld [vmem:[%s916] sm:$0xff]
        %v918 = vld [vmem:[%s916 + $0x8] sm:$0xff]
        %v919 = vld [vmem:[%s916 + $0x18] sm:$0xff]
        %v920 = vld [vmem:[%s916 + $0x20] sm:$0xff]
        %v921 = vld [vmem:[%s916 + $0x30] sm:$0xff]
        %v922 = vld [vmem:[%s916 + $0x38] sm:$0xff]
        %v923 = vld [vmem:[%s916 + $0x48] sm:$0xff]
        %v924 = vld [vmem:[%s916 + $0x50] sm:$0xff]
        %v925 = vld [vmem:[%s916 + $0x60] sm:$0xff]
        %v926 = vld [vmem:[%s916 + $0x68] sm:$0xff]
        %v927 = vld [vmem:[%s916 + $0x78] sm:$0xff]
        %v928 = vld [vmem:[%s916 + $0x80] sm:$0xff]
        %v929 = vld [vmem:[%s916 + $0x90] sm:$0xff]
        %v930 = vld [vmem:[%s916 + $0x98] sm:$0xff]
        %v931 = vld [vmem:[%s916 + $0xa8] sm:$0xff]
        %v932 = vld [vmem:[%s916 + $0xb0] sm:$0xff]
        %v933 = vld [vmem:[%s916 + $0xc0] sm:$0xff]
        %v934 = vld [vmem:[%s916 + $0xc8] sm:$0xff]
        %v935 = vld [vmem:[%s916 + $0xd8] sm:$0xff]
        %v936 = vld [vmem:[%s916 + $0xe0] sm:$0xff]
        %v937 = vld [vmem:[%s916 + $0xf0] sm:$0xff]
        %v938 = vld [vmem:[%s916 + $0xf8] sm:$0xff]
        %v939 = vld [vmem:[%s916 + $0x108] sm:$0xff]
        %v940 = vld [vmem:[%s916 + $0x110] sm:$0xff]
        %v941 = vld [vmem:[%s916 + $0x120] sm:$0xff]
        %v942 = vld [vmem:[%s916 + $0x128] sm:$0xff]
        %v943 = vld [vmem:[%s916 + $0x138] sm:$0xff]
        %v944 = vld [vmem:[%s916 + $0x140] sm:$0xff]
        %v945 = vld [vmem:[%s916 + $0x150] sm:$0xff]
        %v946 = vld [vmem:[%s916 + $0x158] sm:$0xff]
        %v947 = vld [vmem:[%s916 + $0x168] sm:$0xff]
        %v948 = vld [vmem:[%s916 + $0x170] sm:$0xff]
        %981 = vrot.lane.b32.xlu0 %v917, 9
        %v982 = vpop.permute.xlu0 %981
        %983 = vrot.lane.b32.xlu0 %v918, 9
        %v984 = vpop.permute.xlu0 %983
        %985 = vrot.lane.b32.xlu0 %v919, 9
        %v986 = vpop.permute.xlu0 %985
        %987 = vrot.lane.b32.xlu0 %v920, 9
        %v988 = vpop.permute.xlu0 %987
        %989 = vrot.lane.b32.xlu0 %v921, 9
        %v990 = vpop.permute.xlu0 %989
        %991 = vrot.lane.b32.xlu0 %v922, 9
        %v992 = vpop.permute.xlu0 %991
        %993 = vrot.lane.b32.xlu0 %v923, 9
        %v994 = vpop.permute.xlu0 %993
        %995 = vrot.lane.b32.xlu0 %v924, 9
        %v996 = vpop.permute.xlu0 %995
        %997 = vrot.lane.b32.xlu0 %v925, 9
        %v998 = vpop.permute.xlu0 %997
        %999 = vrot.lane.b32.xlu0 %v926, 9
        %v1000 = vpop.permute.xlu0 %999
        %1001 = vrot.lane.b32.xlu0 %v927, 9
        %v1002 = vpop.permute.xlu0 %1001
        %1003 = vrot.lane.b32.xlu0 %v928, 9
        %v1004 = vpop.permute.xlu0 %1003
        %1005 = vrot.lane.b32.xlu0 %v929, 9
        %v1006 = vpop.permute.xlu0 %1005
        %1007 = vrot.lane.b32.xlu0 %v930, 9
        %v1008 = vpop.permute.xlu0 %1007
        %1009 = vrot.lane.b32.xlu0 %v931, 9
        %v1010 = vpop.permute.xlu0 %1009
        %1011 = vrot.lane.b32.xlu0 %v932, 9
        %v1012 = vpop.permute.xlu0 %1011
        %1013 = vrot.lane.b32.xlu0 %v933, 9
        %v1014 = vpop.permute.xlu0 %1013
        %1015 = vrot.lane.b32.xlu0 %v934, 9
        %v1016 = vpop.permute.xlu0 %1015
        %1017 = vrot.lane.b32.xlu0 %v935, 9
        %v1018 = vpop.permute.xlu0 %1017
        %1019 = vrot.lane.b32.xlu0 %v936, 9
        %v1020 = vpop.permute.xlu0 %1019
        %1021 = vrot.lane.b32.xlu0 %v937, 9
        %v1022 = vpop.permute.xlu0 %1021
        %1023 = vrot.lane.b32.xlu0 %v938, 9
        %v1024 = vpop.permute.xlu0 %1023
        %1025 = vrot.lane.b32.xlu0 %v939, 9
        %v1026 = vpop.permute.xlu0 %1025
        %1027 = vrot.lane.b32.xlu0 %v940, 9
        %v1028 = vpop.permute.xlu0 %1027
        %1029 = vrot.lane.b32.xlu0 %v941, 9
        %v1030 = vpop.permute.xlu0 %1029
        %1031 = vrot.lane.b32.xlu0 %v942, 9
        %v1032 = vpop.permute.xlu0 %1031
        %1033 = vrot.lane.b32.xlu0 %v943, 9
        %v1034 = vpop.permute.xlu0 %1033
        %1035 = vrot.lane.b32.xlu0 %v944, 9
        %v1036 = vpop.permute.xlu0 %1035
        %1037 = vrot.lane.b32.xlu0 %v945, 9
        %v1038 = vpop.permute.xlu0 %1037
        %1039 = vrot.lane.b32.xlu0 %v946, 9
        %v1040 = vpop.permute.xlu0 %1039
        %1041 = vrot.lane.b32.xlu0 %v947, 9
        %v1042 = vpop.permute.xlu0 %1041
        %1043 = vrot.lane.b32.xlu0 %v948, 9
        %v1044 = vpop.permute.xlu0 %1043
        %vm1077 = vcmask 97352
        %1078 = vst.msk [vmem:[#allocation2] sm:$0xff] %vm1077, %v982
        %1079 = vst.msk [vmem:[#allocation2 + $0x8] sm:$0xff] %vm1077, %v984
        %1080 = vst.msk [vmem:[#allocation2 + $0x10] sm:$0xff] %vm1077, %v986
        %1081 = vst.msk [vmem:[#allocation2 + $0x18] sm:$0xff] %vm1077, %v988
        %1082 = vst.msk [vmem:[#allocation2 + $0x20] sm:$0xff] %vm1077, %v990
        %1083 = vst.msk [vmem:[#allocation2 + $0x28] sm:$0xff] %vm1077, %v992
        %1084 = vst.msk [vmem:[#allocation2 + $0x30] sm:$0xff] %vm1077, %v994
        %1085 = vst.msk [vmem:[#allocation2 + $0x38] sm:$0xff] %vm1077, %v996
        %1086 = vst.msk [vmem:[#allocation2 + $0x40] sm:$0xff] %vm1077, %v998
        %1087 = vst.msk [vmem:[#allocation2 + $0x48] sm:$0xff] %vm1077, %v1000
        %1088 = vst.msk [vmem:[#allocation2 + $0x50] sm:$0xff] %vm1077, %v1002
        %1089 = vst.msk [vmem:[#allocation2 + $0x58] sm:$0xff] %vm1077, %v1004
        %1090 = vst.msk [vmem:[#allocation2 + $0x60] sm:$0xff] %vm1077, %v1006
        %1091 = vst.msk [vmem:[#allocation2 + $0x68] sm:$0xff] %vm1077, %v1008
        %1092 = vst.msk [vmem:[#allocation2 + $0x70] sm:$0xff] %vm1077, %v1010
        %1093 = vst.msk [vmem:[#allocation2 + $0x78] sm:$0xff] %vm1077, %v1012
        %1094 = vst.msk [vmem:[#allocation2 + $0x80] sm:$0xff] %vm1077, %v1014
        %1095 = vst.msk [vmem:[#allocation2 + $0x88] sm:$0xff] %vm1077, %v1016
        %1096 = vst.msk [vmem:[#allocation2 + $0x90] sm:$0xff] %vm1077, %v1018
        %1097 = vst.msk [vmem:[#allocation2 + $0x98] sm:$0xff] %vm1077, %v1020
        %1098 = vst.msk [vmem:[#allocation2 + $0xa0] sm:$0xff] %vm1077, %v1022
        %1099 = vst.msk [vmem:[#allocation2 + $0xa8] sm:$0xff] %vm1077, %v1024
        %1100 = vst.msk [vmem:[#allocation2 + $0xb0] sm:$0xff] %vm1077, %v1026
        %1101 = vst.msk [vmem:[#allocation2 + $0xb8] sm:$0xff] %vm1077, %v1028
        %1102 = vst.msk [vmem:[#allocation2 + $0xc0] sm:$0xff] %vm1077, %v1030
        %1103 = vst.msk [vmem:[#allocation2 + $0xc8] sm:$0xff] %vm1077, %v1032
        %1104 = vst.msk [vmem:[#allocation2 + $0xd0] sm:$0xff] %vm1077, %v1034
        %1105 = vst.msk [vmem:[#allocation2 + $0xd8] sm:$0xff] %vm1077, %v1036
        %1106 = vst.msk [vmem:[#allocation2 + $0xe0] sm:$0xff] %vm1077, %v1038
        %1107 = vst.msk [vmem:[#allocation2 + $0xe8] sm:$0xff] %vm1077, %v1040
        %1108 = vst.msk [vmem:[#allocation2 + $0xf0] sm:$0xff] %vm1077, %v1042
        %1109 = vst.msk [vmem:[#allocation2 + $0xf8] sm:$0xff] %vm1077, %v1044
        %v1110 = vld [vmem:[%s916 + $0x1] sm:$0xff]
        %v1111 = vld [vmem:[%s916 + $0x9] sm:$0xff]
        %v1112 = vld [vmem:[%s916 + $0x19] sm:$0xff]
        %v1113 = vld [vmem:[%s916 + $0x21] sm:$0xff]
        %v1114 = vld [vmem:[%s916 + $0x31] sm:$0xff]
        %v1115 = vld [vmem:[%s916 + $0x39] sm:$0xff]
        %v1116 = vld [vmem:[%s916 + $0x49] sm:$0xff]
        %v1117 = vld [vmem:[%s916 + $0x51] sm:$0xff]
        %v1118 = vld [vmem:[%s916 + $0x61] sm:$0xff]
        %v1119 = vld [vmem:[%s916 + $0x69] sm:$0xff]
        %v1120 = vld [vmem:[%s916 + $0x79] sm:$0xff]
        %v1121 = vld [vmem:[%s916 + $0x81] sm:$0xff]
        %v1122 = vld [vmem:[%s916 + $0x91] sm:$0xff]
        %v1123 = vld [vmem:[%s916 + $0x99] sm:$0xff]
        %v1124 = vld [vmem:[%s916 + $0xa9] sm:$0xff]
        %v1125 = vld [vmem:[%s916 + $0xb1] sm:$0xff]
        %v1126 = vld [vmem:[%s916 + $0xc1] sm:$0xff]
        %v1127 = vld [vmem:[%s916 + $0xc9] sm:$0xff]
        %v1128 = vld [vmem:[%s916 + $0xd9] sm:$0xff]
        %v1129 = vld [vmem:[%s916 + $0xe1] sm:$0xff]
        %v1130 = vld [vmem:[%s916 + $0xf1] sm:$0xff]
        %v1131 = vld [vmem:[%s916 + $0xf9] sm:$0xff]
        %v1132 = vld [vmem:[%s916 + $0x109] sm:$0xff]
        %v1133 = vld [vmem:[%s916 + $0x111] sm:$0xff]
        %v1134 = vld [vmem:[%s916 + $0x121] sm:$0xff]
        %v1135 = vld [vmem:[%s916 + $0x129] sm:$0xff]
        %v1136 = vld [vmem:[%s916 + $0x139] sm:$0xff]
        %v1137 = vld [vmem:[%s916 + $0x141] sm:$0xff]
        %v1138 = vld [vmem:[%s916 + $0x151] sm:$0xff]
        %v1139 = vld [vmem:[%s916 + $0x159] sm:$0xff]
        %v1140 = vld [vmem:[%s916 + $0x169] sm:$0xff]
        %v1141 = vld [vmem:[%s916 + $0x171] sm:$0xff]
        %1174 = vrot.lane.b32.xlu0 %v1110, 12
        %v1175 = vpop.permute.xlu0 %1174
        %1176 = vrot.lane.b32.xlu0 %v1111, 12
        %v1177 = vpop.permute.xlu0 %1176
        %1178 = vrot.lane.b32.xlu0 %v1112, 12
        %v1179 = vpop.permute.xlu0 %1178
        %1180 = vrot.lane.b32.xlu0 %v1113, 12
        %v1181 = vpop.permute.xlu0 %1180
        %1182 = vrot.lane.b32.xlu0 %v1114, 12
        %v1183 = vpop.permute.xlu0 %1182
        %1184 = vrot.lane.b32.xlu0 %v1115, 12
        %v1185 = vpop.permute.xlu0 %1184
        %1186 = vrot.lane.b32.xlu0 %v1116, 12
        %v1187 = vpop.permute.xlu0 %1186
        %1188 = vrot.lane.b32.xlu0 %v1117, 12
        %v1189 = vpop.permute.xlu0 %1188
        %1190 = vrot.lane.b32.xlu0 %v1118, 12
        %v1191 = vpop.permute.xlu0 %1190
        %1192 = vrot.lane.b32.xlu0 %v1119, 12
        %v1193 = vpop.permute.xlu0 %1192
        %1194 = vrot.lane.b32.xlu0 %v1120, 12
        %v1195 = vpop.permute.xlu0 %1194
        %1196 = vrot.lane.b32.xlu0 %v1121, 12
        %v1197 = vpop.permute.xlu0 %1196
        %1198 = vrot.lane.b32.xlu0 %v1122, 12
        %v1199 = vpop.permute.xlu0 %1198
        %1200 = vrot.lane.b32.xlu0 %v1123, 12
        %v1201 = vpop.permute.xlu0 %1200
        %1202 = vrot.lane.b32.xlu0 %v1124, 12
        %v1203 = vpop.permute.xlu0 %1202
        %1204 = vrot.lane.b32.xlu0 %v1125, 12
        %v1205 = vpop.permute.xlu0 %1204
        %1206 = vrot.lane.b32.xlu0 %v1126, 12
        %v1207 = vpop.permute.xlu0 %1206
        %1208 = vrot.lane.b32.xlu0 %v1127, 12
        %v1209 = vpop.permute.xlu0 %1208
        %1210 = vrot.lane.b32.xlu0 %v1128, 12
        %v1211 = vpop.permute.xlu0 %1210
        %1212 = vrot.lane.b32.xlu0 %v1129, 12
        %v1213 = vpop.permute.xlu0 %1212
        %1214 = vrot.lane.b32.xlu0 %v1130, 12
        %v1215 = vpop.permute.xlu0 %1214
        %1216 = vrot.lane.b32.xlu0 %v1131, 12
        %v1217 = vpop.permute.xlu0 %1216
        %1218 = vrot.lane.b32.xlu0 %v1132, 12
        %v1219 = vpop.permute.xlu0 %1218
        %1220 = vrot.lane.b32.xlu0 %v1133, 12
        %v1221 = vpop.permute.xlu0 %1220
        %1222 = vrot.lane.b32.xlu0 %v1134, 12
        %v1223 = vpop.permute.xlu0 %1222
        %1224 = vrot.lane.b32.xlu0 %v1135, 12
        %v1225 = vpop.permute.xlu0 %1224
        %1226 = vrot.lane.b32.xlu0 %v1136, 12
        %v1227 = vpop.permute.xlu0 %1226
        %1228 = vrot.lane.b32.xlu0 %v1137, 12
        %v1229 = vpop.permute.xlu0 %1228
        %1230 = vrot.lane.b32.xlu0 %v1138, 12
        %v1231 = vpop.permute.xlu0 %1230
        %1232 = vrot.lane.b32.xlu0 %v1139, 12
        %v1233 = vpop.permute.xlu0 %1232
        %1234 = vrot.lane.b32.xlu0 %v1140, 12
        %v1235 = vpop.permute.xlu0 %1234
        %1236 = vrot.lane.b32.xlu0 %v1141, 12
        %v1237 = vpop.permute.xlu0 %1236
        %vm1270 = vcmask 121952
        %1271 = vst.msk [vmem:[#allocation2] sm:$0xff] %vm1270, %v1175
        %1272 = vst.msk [vmem:[#allocation2 + $0x8] sm:$0xff] %vm1270, %v1177
        %1273 = vst.msk [vmem:[#allocation2 + $0x10] sm:$0xff] %vm1270, %v1179
        %1274 = vst.msk [vmem:[#allocation2 + $0x18] sm:$0xff] %vm1270, %v1181
        %1275 = vst.msk [vmem:[#allocation2 + $0x20] sm:$0xff] %vm1270, %v1183
        %1276 = vst.msk [vmem:[#allocation2 + $0x28] sm:$0xff] %vm1270, %v1185
        %1277 = vst.msk [vmem:[#allocation2 + $0x30] sm:$0xff] %vm1270, %v1187
        %1278 = vst.msk [vmem:[#allocation2 + $0x38] sm:$0xff] %vm1270, %v1189
        %1279 = vst.msk [vmem:[#allocation2 + $0x40] sm:$0xff] %vm1270, %v1191
        %1280 = vst.msk [vmem:[#allocation2 + $0x48] sm:$0xff] %vm1270, %v1193
        %1281 = vst.msk [vmem:[#allocation2 + $0x50] sm:$0xff] %vm1270, %v1195
        %1282 = vst.msk [vmem:[#allocation2 + $0x58] sm:$0xff] %vm1270, %v1197
        %1283 = vst.msk [vmem:[#allocation2 + $0x60] sm:$0xff] %vm1270, %v1199
        %1284 = vst.msk [vmem:[#allocation2 + $0x68] sm:$0xff] %vm1270, %v1201
        %1285 = vst.msk [vmem:[#allocation2 + $0x70] sm:$0xff] %vm1270, %v1203
        %1286 = vst.msk [vmem:[#allocation2 + $0x78] sm:$0xff] %vm1270, %v1205
        %1287 = vst.msk [vmem:[#allocation2 + $0x80] sm:$0xff] %vm1270, %v1207
        %1288 = vst.msk [vmem:[#allocation2 + $0x88] sm:$0xff] %vm1270, %v1209
        %1289 = vst.msk [vmem:[#allocation2 + $0x90] sm:$0xff] %vm1270, %v1211
        %1290 = vst.msk [vmem:[#allocation2 + $0x98] sm:$0xff] %vm1270, %v1213
        %1291 = vst.msk [vmem:[#allocation2 + $0xa0] sm:$0xff] %vm1270, %v1215
        %1292 = vst.msk [vmem:[#allocation2 + $0xa8] sm:$0xff] %vm1270, %v1217
        %1293 = vst.msk [vmem:[#allocation2 + $0xb0] sm:$0xff] %vm1270, %v1219
        %1294 = vst.msk [vmem:[#allocation2 + $0xb8] sm:$0xff] %vm1270, %v1221
        %1295 = vst.msk [vmem:[#allocation2 + $0xc0] sm:$0xff] %vm1270, %v1223
        %1296 = vst.msk [vmem:[#allocation2 + $0xc8] sm:$0xff] %vm1270, %v1225
        %1297 = vst.msk [vmem:[#allocation2 + $0xd0] sm:$0xff] %vm1270, %v1227
        %1298 = vst.msk [vmem:[#allocation2 + $0xd8] sm:$0xff] %vm1270, %v1229
        %1299 = vst.msk [vmem:[#allocation2 + $0xe0] sm:$0xff] %vm1270, %v1231
        %1300 = vst.msk [vmem:[#allocation2 + $0xe8] sm:$0xff] %vm1270, %v1233
        %1301 = vst.msk [vmem:[#allocation2 + $0xf0] sm:$0xff] %vm1270, %v1235
        %1302 = vst.msk [vmem:[#allocation2 + $0xf8] sm:$0xff] %vm1270, %v1237
        %v1303 = vld [vmem:[%s916 + $0x2] sm:$0xff]
        %v1304 = vld [vmem:[%s916 + $0xa] sm:$0xff]
        %v1305 = vld [vmem:[%s916 + $0x1a] sm:$0xff]
        %v1306 = vld [vmem:[%s916 + $0x22] sm:$0xff]
        %v1307 = vld [vmem:[%s916 + $0x32] sm:$0xff]
        %v1308 = vld [vmem:[%s916 + $0x3a] sm:$0xff]
        %v1309 = vld [vmem:[%s916 + $0x4a] sm:$0xff]
        %v1310 = vld [vmem:[%s916 + $0x52] sm:$0xff]
        %v1311 = vld [vmem:[%s916 + $0x62] sm:$0xff]
        %v1312 = vld [vmem:[%s916 + $0x6a] sm:$0xff]
        %v1313 = vld [vmem:[%s916 + $0x7a] sm:$0xff]
        %v1314 = vld [vmem:[%s916 + $0x82] sm:$0xff]
        %v1315 = vld [vmem:[%s916 + $0x92] sm:$0xff]
        %v1316 = vld [vmem:[%s916 + $0x9a] sm:$0xff]
        %v1317 = vld [vmem:[%s916 + $0xaa] sm:$0xff]
        %v1318 = vld [vmem:[%s916 + $0xb2] sm:$0xff]
        %v1319 = vld [vmem:[%s916 + $0xc2] sm:$0xff]
        %v1320 = vld [vmem:[%s916 + $0xca] sm:$0xff]
        %v1321 = vld [vmem:[%s916 + $0xda] sm:$0xff]
        %v1322 = vld [vmem:[%s916 + $0xe2] sm:$0xff]
        %v1323 = vld [vmem:[%s916 + $0xf2] sm:$0xff]
        %v1324 = vld [vmem:[%s916 + $0xfa] sm:$0xff]
        %v1325 = vld [vmem:[%s916 + $0x10a] sm:$0xff]
        %v1326 = vld [vmem:[%s916 + $0x112] sm:$0xff]
        %v1327 = vld [vmem:[%s916 + $0x122] sm:$0xff]
        %v1328 = vld [vmem:[%s916 + $0x12a] sm:$0xff]
        %v1329 = vld [vmem:[%s916 + $0x13a] sm:$0xff]
        %v1330 = vld [vmem:[%s916 + $0x142] sm:$0xff]
        %v1331 = vld [vmem:[%s916 + $0x152] sm:$0xff]
        %v1332 = vld [vmem:[%s916 + $0x15a] sm:$0xff]
        %v1333 = vld [vmem:[%s916 + $0x16a] sm:$0xff]
        %v1334 = vld [vmem:[%s916 + $0x172] sm:$0xff]
        %1367 = vrot.lane.b32.xlu0 %v1303, 15
        %v1368 = vpop.permute.xlu0 %1367
        %1369 = vrot.lane.b32.xlu0 %v1304, 15
        %v1370 = vpop.permute.xlu0 %1369
        %1371 = vrot.lane.b32.xlu0 %v1305, 15
        %v1372 = vpop.permute.xlu0 %1371
        %1373 = vrot.lane.b32.xlu0 %v1306, 15
        %v1374 = vpop.permute.xlu0 %1373
        %1375 = vrot.lane.b32.xlu0 %v1307, 15
        %v1376 = vpop.permute.xlu0 %1375
        %1377 = vrot.lane.b32.xlu0 %v1308, 15
        %v1378 = vpop.permute.xlu0 %1377
        %1379 = vrot.lane.b32.xlu0 %v1309, 15
        %v1380 = vpop.permute.xlu0 %1379
        %1381 = vrot.lane.b32.xlu0 %v1310, 15
        %v1382 = vpop.permute.xlu0 %1381
        %1383 = vrot.lane.b32.xlu0 %v1311, 15
        %v1384 = vpop.permute.xlu0 %1383
        %1385 = vrot.lane.b32.xlu0 %v1312, 15
        %v1386 = vpop.permute.xlu0 %1385
        %1387 = vrot.lane.b32.xlu0 %v1313, 15
        %v1388 = vpop.permute.xlu0 %1387
        %1389 = vrot.lane.b32.xlu0 %v1314, 15
        %v1390 = vpop.permute.xlu0 %1389
        %1391 = vrot.lane.b32.xlu0 %v1315, 15
        %v1392 = vpop.permute.xlu0 %1391
        %1393 = vrot.lane.b32.xlu0 %v1316, 15
        %v1394 = vpop.permute.xlu0 %1393
        %1395 = vrot.lane.b32.xlu0 %v1317, 15
        %v1396 = vpop.permute.xlu0 %1395
        %1397 = vrot.lane.b32.xlu0 %v1318, 15
        %v1398 = vpop.permute.xlu0 %1397
        %1399 = vrot.lane.b32.xlu0 %v1319, 15
        %v1400 = vpop.permute.xlu0 %1399
        %1401 = vrot.lane.b32.xlu0 %v1320, 15
        %v1402 = vpop.permute.xlu0 %1401
        %1403 = vrot.lane.b32.xlu0 %v1321, 15
        %v1404 = vpop.permute.xlu0 %1403
        %1405 = vrot.lane.b32.xlu0 %v1322, 15
        %v1406 = vpop.permute.xlu0 %1405
        %1407 = vrot.lane.b32.xlu0 %v1323, 15
        %v1408 = vpop.permute.xlu0 %1407
        %1409 = vrot.lane.b32.xlu0 %v1324, 15
        %v1410 = vpop.permute.xlu0 %1409
        %1411 = vrot.lane.b32.xlu0 %v1325, 15
        %v1412 = vpop.permute.xlu0 %1411
        %1413 = vrot.lane.b32.xlu0 %v1326, 15
        %v1414 = vpop.permute.xlu0 %1413
        %1415 = vrot.lane.b32.xlu0 %v1327, 15
        %v1416 = vpop.permute.xlu0 %1415
        %1417 = vrot.lane.b32.xlu0 %v1328, 15
        %v1418 = vpop.permute.xlu0 %1417
        %1419 = vrot.lane.b32.xlu0 %v1329, 15
        %v1420 = vpop.permute.xlu0 %1419
        %1421 = vrot.lane.b32.xlu0 %v1330, 15
        %v1422 = vpop.permute.xlu0 %1421
        %1423 = vrot.lane.b32.xlu0 %v1331, 15
        %v1424 = vpop.permute.xlu0 %1423
        %1425 = vrot.lane.b32.xlu0 %v1332, 15
        %v1426 = vpop.permute.xlu0 %1425
        %1427 = vrot.lane.b32.xlu0 %v1333, 15
        %v1428 = vpop.permute.xlu0 %1427
        %1429 = vrot.lane.b32.xlu0 %v1334, 15
        %v1430 = vpop.permute.xlu0 %1429
        %vm1463 = vcmask 146552
        %1464 = vst.msk [vmem:[#allocation2] sm:$0xff] %vm1463, %v1368
        %1465 = vst.msk [vmem:[#allocation2 + $0x8] sm:$0xff] %vm1463, %v1370
        %1466 = vst.msk [vmem:[#allocation2 + $0x10] sm:$0xff] %vm1463, %v1372
        %1467 = vst.msk [vmem:[#allocation2 + $0x18] sm:$0xff] %vm1463, %v1374
        %1468 = vst.msk [vmem:[#allocation2 + $0x20] sm:$0xff] %vm1463, %v1376
        %1469 = vst.msk [vmem:[#allocation2 + $0x28] sm:$0xff] %vm1463, %v1378
        %1470 = vst.msk [vmem:[#allocation2 + $0x30] sm:$0xff] %vm1463, %v1380
        %1471 = vst.msk [vmem:[#allocation2 + $0x38] sm:$0xff] %vm1463, %v1382
        %1472 = vst.msk [vmem:[#allocation2 + $0x40] sm:$0xff] %vm1463, %v1384
        %1473 = vst.msk [vmem:[#allocation2 + $0x48] sm:$0xff] %vm1463, %v1386
        %1474 = vst.msk [vmem:[#allocation2 + $0x50] sm:$0xff] %vm1463, %v1388
        %1475 = vst.msk [vmem:[#allocation2 + $0x58] sm:$0xff] %vm1463, %v1390
        %1476 = vst.msk [vmem:[#allocation2 + $0x60] sm:$0xff] %vm1463, %v1392
        %1477 = vst.msk [vmem:[#allocation2 + $0x68] sm:$0xff] %vm1463, %v1394
        %1478 = vst.msk [vmem:[#allocation2 + $0x70] sm:$0xff] %vm1463, %v1396
        %1479 = vst.msk [vmem:[#allocation2 + $0x78] sm:$0xff] %vm1463, %v1398
        %1480 = vst.msk [vmem:[#allocation2 + $0x80] sm:$0xff] %vm1463, %v1400
        %1481 = vst.msk [vmem:[#allocation2 + $0x88] sm:$0xff] %vm1463, %v1402
        %1482 = vst.msk [vmem:[#allocation2 + $0x90] sm:$0xff] %vm1463, %v1404
        %1483 = vst.msk [vmem:[#allocation2 + $0x98] sm:$0xff] %vm1463, %v1406
        %1484 = vst.msk [vmem:[#allocation2 + $0xa0] sm:$0xff] %vm1463, %v1408
        %1485 = vst.msk [vmem:[#allocation2 + $0xa8] sm:$0xff] %vm1463, %v1410
        %1486 = vst.msk [vmem:[#allocation2 + $0xb0] sm:$0xff] %vm1463, %v1412
        %1487 = vst.msk [vmem:[#allocation2 + $0xb8] sm:$0xff] %vm1463, %v1414
        %1488 = vst.msk [vmem:[#allocation2 + $0xc0] sm:$0xff] %vm1463, %v1416
        %1489 = vst.msk [vmem:[#allocation2 + $0xc8] sm:$0xff] %vm1463, %v1418
        %1490 = vst.msk [vmem:[#allocation2 + $0xd0] sm:$0xff] %vm1463, %v1420
        %1491 = vst.msk [vmem:[#allocation2 + $0xd8] sm:$0xff] %vm1463, %v1422
        %1492 = vst.msk [vmem:[#allocation2 + $0xe0] sm:$0xff] %vm1463, %v1424
        %1493 = vst.msk [vmem:[#allocation2 + $0xe8] sm:$0xff] %vm1463, %v1426
        %1494 = vst.msk [vmem:[#allocation2 + $0xf0] sm:$0xff] %vm1463, %v1428
        %1495 = vst.msk [vmem:[#allocation2 + $0xf8] sm:$0xff] %vm1463, %v1430
        %s1496 = scalar_lea.vmem %s464, 48
        %v1497 = vld [vmem:[%s1496] sm:$0xff]
        %v1498 = vld [vmem:[%s1496 + $0x8] sm:$0xff]
        %v1499 = vld [vmem:[%s1496 + $0x18] sm:$0xff]
        %v1500 = vld [vmem:[%s1496 + $0x20] sm:$0xff]
        %v1501 = vld [vmem:[%s1496 + $0x30] sm:$0xff]
        %v1502 = vld [vmem:[%s1496 + $0x38] sm:$0xff]
        %v1503 = vld [vmem:[%s1496 + $0x48] sm:$0xff]
        %v1504 = vld [vmem:[%s1496 + $0x50] sm:$0xff]
        %v1505 = vld [vmem:[%s1496 + $0x60] sm:$0xff]
        %v1506 = vld [vmem:[%s1496 + $0x68] sm:$0xff]
        %v1507 = vld [vmem:[%s1496 + $0x78] sm:$0xff]
        %v1508 = vld [vmem:[%s1496 + $0x80] sm:$0xff]
        %v1509 = vld [vmem:[%s1496 + $0x90] sm:$0xff]
        %v1510 = vld [vmem:[%s1496 + $0x98] sm:$0xff]
        %v1511 = vld [vmem:[%s1496 + $0xa8] sm:$0xff]
        %v1512 = vld [vmem:[%s1496 + $0xb0] sm:$0xff]
        %v1513 = vld [vmem:[%s1496 + $0xc0] sm:$0xff]
        %v1514 = vld [vmem:[%s1496 + $0xc8] sm:$0xff]
        %v1515 = vld [vmem:[%s1496 + $0xd8] sm:$0xff]
        %v1516 = vld [vmem:[%s1496 + $0xe0] sm:$0xff]
        %v1517 = vld [vmem:[%s1496 + $0xf0] sm:$0xff]
        %v1518 = vld [vmem:[%s1496 + $0xf8] sm:$0xff]
        %v1519 = vld [vmem:[%s1496 + $0x108] sm:$0xff]
        %v1520 = vld [vmem:[%s1496 + $0x110] sm:$0xff]
        %v1521 = vld [vmem:[%s1496 + $0x120] sm:$0xff]
        %v1522 = vld [vmem:[%s1496 + $0x128] sm:$0xff]
        %v1523 = vld [vmem:[%s1496 + $0x138] sm:$0xff]
        %v1524 = vld [vmem:[%s1496 + $0x140] sm:$0xff]
        %v1525 = vld [vmem:[%s1496 + $0x150] sm:$0xff]
        %v1526 = vld [vmem:[%s1496 + $0x158] sm:$0xff]
        %v1527 = vld [vmem:[%s1496 + $0x168] sm:$0xff]
        %v1528 = vld [vmem:[%s1496 + $0x170] sm:$0xff]
        %1561 = vrot.lane.b32.xlu0 %v1497, 18
        %v1562 = vpop.permute.xlu0 %1561
        %1563 = vrot.lane.b32.xlu0 %v1498, 18
        %v1564 = vpop.permute.xlu0 %1563
        %1565 = vrot.lane.b32.xlu0 %v1499, 18
        %v1566 = vpop.permute.xlu0 %1565
        %1567 = vrot.lane.b32.xlu0 %v1500, 18
        %v1568 = vpop.permute.xlu0 %1567
        %1569 = vrot.lane.b32.xlu0 %v1501, 18
        %v1570 = vpop.permute.xlu0 %1569
        %1571 = vrot.lane.b32.xlu0 %v1502, 18
        %v1572 = vpop.permute.xlu0 %1571
        %1573 = vrot.lane.b32.xlu0 %v1503, 18
        %v1574 = vpop.permute.xlu0 %1573
        %1575 = vrot.lane.b32.xlu0 %v1504, 18
        %v1576 = vpop.permute.xlu0 %1575
        %1577 = vrot.lane.b32.xlu0 %v1505, 18
        %v1578 = vpop.permute.xlu0 %1577
        %1579 = vrot.lane.b32.xlu0 %v1506, 18
        %v1580 = vpop.permute.xlu0 %1579
        %1581 = vrot.lane.b32.xlu0 %v1507, 18
        %v1582 = vpop.permute.xlu0 %1581
        %1583 = vrot.lane.b32.xlu0 %v1508, 18
        %v1584 = vpop.permute.xlu0 %1583
        %1585 = vrot.lane.b32.xlu0 %v1509, 18
        %v1586 = vpop.permute.xlu0 %1585
        %1587 = vrot.lane.b32.xlu0 %v1510, 18
        %v1588 = vpop.permute.xlu0 %1587
        %1589 = vrot.lane.b32.xlu0 %v1511, 18
        %v1590 = vpop.permute.xlu0 %1589
        %1591 = vrot.lane.b32.xlu0 %v1512, 18
        %v1592 = vpop.permute.xlu0 %1591
        %1593 = vrot.lane.b32.xlu0 %v1513, 18
        %v1594 = vpop.permute.xlu0 %1593
        %1595 = vrot.lane.b32.xlu0 %v1514, 18
        %v1596 = vpop.permute.xlu0 %1595
        %1597 = vrot.lane.b32.xlu0 %v1515, 18
        %v1598 = vpop.permute.xlu0 %1597
        %1599 = vrot.lane.b32.xlu0 %v1516, 18
        %v1600 = vpop.permute.xlu0 %1599
        %1601 = vrot.lane.b32.xlu0 %v1517, 18
        %v1602 = vpop.permute.xlu0 %1601
        %1603 = vrot.lane.b32.xlu0 %v1518, 18
        %v1604 = vpop.permute.xlu0 %1603
        %1605 = vrot.lane.b32.xlu0 %v1519, 18
        %v1606 = vpop.permute.xlu0 %1605
        %1607 = vrot.lane.b32.xlu0 %v1520, 18
        %v1608 = vpop.permute.xlu0 %1607
        %1609 = vrot.lane.b32.xlu0 %v1521, 18
        %v1610 = vpop.permute.xlu0 %1609
        %1611 = vrot.lane.b32.xlu0 %v1522, 18
        %v1612 = vpop.permute.xlu0 %1611
        %1613 = vrot.lane.b32.xlu0 %v1523, 18
        %v1614 = vpop.permute.xlu0 %1613
        %1615 = vrot.lane.b32.xlu0 %v1524, 18
        %v1616 = vpop.permute.xlu0 %1615
        %1617 = vrot.lane.b32.xlu0 %v1525, 18
        %v1618 = vpop.permute.xlu0 %1617
        %1619 = vrot.lane.b32.xlu0 %v1526, 18
        %v1620 = vpop.permute.xlu0 %1619
        %1621 = vrot.lane.b32.xlu0 %v1527, 18
        %v1622 = vpop.permute.xlu0 %1621
        %1623 = vrot.lane.b32.xlu0 %v1528, 18
        %v1624 = vpop.permute.xlu0 %1623
        %vm1657 = vcmask 171152
        %1658 = vst.msk [vmem:[#allocation2] sm:$0xff] %vm1657, %v1562
        %1659 = vst.msk [vmem:[#allocation2 + $0x8] sm:$0xff] %vm1657, %v1564
        %1660 = vst.msk [vmem:[#allocation2 + $0x10] sm:$0xff] %vm1657, %v1566
        %1661 = vst.msk [vmem:[#allocation2 + $0x18] sm:$0xff] %vm1657, %v1568
        %1662 = vst.msk [vmem:[#allocation2 + $0x20] sm:$0xff] %vm1657, %v1570
        %1663 = vst.msk [vmem:[#allocation2 + $0x28] sm:$0xff] %vm1657, %v1572
        %1664 = vst.msk [vmem:[#allocation2 + $0x30] sm:$0xff] %vm1657, %v1574
        %1665 = vst.msk [vmem:[#allocation2 + $0x38] sm:$0xff] %vm1657, %v1576
        %1666 = vst.msk [vmem:[#allocation2 + $0x40] sm:$0xff] %vm1657, %v1578
        %1667 = vst.msk [vmem:[#allocation2 + $0x48] sm:$0xff] %vm1657, %v1580
        %1668 = vst.msk [vmem:[#allocation2 + $0x50] sm:$0xff] %vm1657, %v1582
        %1669 = vst.msk [vmem:[#allocation2 + $0x58] sm:$0xff] %vm1657, %v1584
        %1670 = vst.msk [vmem:[#allocation2 + $0x60] sm:$0xff] %vm1657, %v1586
        %1671 = vst.msk [vmem:[#allocation2 + $0x68] sm:$0xff] %vm1657, %v1588
        %1672 = vst.msk [vmem:[#allocation2 + $0x70] sm:$0xff] %vm1657, %v1590
        %1673 = vst.msk [vmem:[#allocation2 + $0x78] sm:$0xff] %vm1657, %v1592
        %1674 = vst.msk [vmem:[#allocation2 + $0x80] sm:$0xff] %vm1657, %v1594
        %1675 = vst.msk [vmem:[#allocation2 + $0x88] sm:$0xff] %vm1657, %v1596
        %1676 = vst.msk [vmem:[#allocation2 + $0x90] sm:$0xff] %vm1657, %v1598
        %1677 = vst.msk [vmem:[#allocation2 + $0x98] sm:$0xff] %vm1657, %v1600
        %1678 = vst.msk [vmem:[#allocation2 + $0xa0] sm:$0xff] %vm1657, %v1602
        %1679 = vst.msk [vmem:[#allocation2 + $0xa8] sm:$0xff] %vm1657, %v1604
        %1680 = vst.msk [vmem:[#allocation2 + $0xb0] sm:$0xff] %vm1657, %v1606
        %1681 = vst.msk [vmem:[#allocation2 + $0xb8] sm:$0xff] %vm1657, %v1608
        %1682 = vst.msk [vmem:[#allocation2 + $0xc0] sm:$0xff] %vm1657, %v1610
        %1683 = vst.msk [vmem:[#allocation2 + $0xc8] sm:$0xff] %vm1657, %v1612
        %1684 = vst.msk [vmem:[#allocation2 + $0xd0] sm:$0xff] %vm1657, %v1614
        %1685 = vst.msk [vmem:[#allocation2 + $0xd8] sm:$0xff] %vm1657, %v1616
        %1686 = vst.msk [vmem:[#allocation2 + $0xe0] sm:$0xff] %vm1657, %v1618
        %1687 = vst.msk [vmem:[#allocation2 + $0xe8] sm:$0xff] %vm1657, %v1620
        %1688 = vst.msk [vmem:[#allocation2 + $0xf0] sm:$0xff] %vm1657, %v1622
        %1689 = vst.msk [vmem:[#allocation2 + $0xf8] sm:$0xff] %vm1657, %v1624
        %v1690 = vld [vmem:[%s1496 + $0x1] sm:$0xff]
        %v1691 = vld [vmem:[%s1496 + $0x9] sm:$0xff]
        %v1692 = vld [vmem:[%s1496 + $0x19] sm:$0xff]
        %v1693 = vld [vmem:[%s1496 + $0x21] sm:$0xff]
        %v1694 = vld [vmem:[%s1496 + $0x31] sm:$0xff]
        %v1695 = vld [vmem:[%s1496 + $0x39] sm:$0xff]
        %v1696 = vld [vmem:[%s1496 + $0x49] sm:$0xff]
        %v1697 = vld [vmem:[%s1496 + $0x51] sm:$0xff]
        %v1698 = vld [vmem:[%s1496 + $0x61] sm:$0xff]
        %v1699 = vld [vmem:[%s1496 + $0x69] sm:$0xff]
        %v1700 = vld [vmem:[%s1496 + $0x79] sm:$0xff]
        %v1701 = vld [vmem:[%s1496 + $0x81] sm:$0xff]
        %v1702 = vld [vmem:[%s1496 + $0x91] sm:$0xff]
        %v1703 = vld [vmem:[%s1496 + $0x99] sm:$0xff]
        %v1704 = vld [vmem:[%s1496 + $0xa9] sm:$0xff]
        %v1705 = vld [vmem:[%s1496 + $0xb1] sm:$0xff]
        %v1706 = vld [vmem:[%s1496 + $0xc1] sm:$0xff]
        %v1707 = vld [vmem:[%s1496 + $0xc9] sm:$0xff]
        %v1708 = vld [vmem:[%s1496 + $0xd9] sm:$0xff]
        %v1709 = vld [vmem:[%s1496 + $0xe1] sm:$0xff]
        %v1710 = vld [vmem:[%s1496 + $0xf1] sm:$0xff]
        %v1711 = vld [vmem:[%s1496 + $0xf9] sm:$0xff]
        %v1712 = vld [vmem:[%s1496 + $0x109] sm:$0xff]
        %v1713 = vld [vmem:[%s1496 + $0x111] sm:$0xff]
        %v1714 = vld [vmem:[%s1496 + $0x121] sm:$0xff]
        %v1715 = vld [vmem:[%s1496 + $0x129] sm:$0xff]
        %v1716 = vld [vmem:[%s1496 + $0x139] sm:$0xff]
        %v1717 = vld [vmem:[%s1496 + $0x141] sm:$0xff]
        %v1718 = vld [vmem:[%s1496 + $0x151] sm:$0xff]
        %v1719 = vld [vmem:[%s1496 + $0x159] sm:$0xff]
        %v1720 = vld [vmem:[%s1496 + $0x169] sm:$0xff]
        %v1721 = vld [vmem:[%s1496 + $0x171] sm:$0xff]
        %1754 = vrot.lane.b32.xlu0 %v1690, 21
        %v1755 = vpop.permute.xlu0 %1754
        %1756 = vrot.lane.b32.xlu0 %v1691, 21
        %v1757 = vpop.permute.xlu0 %1756
        %1758 = vrot.lane.b32.xlu0 %v1692, 21
        %v1759 = vpop.permute.xlu0 %1758
        %1760 = vrot.lane.b32.xlu0 %v1693, 21
        %v1761 = vpop.permute.xlu0 %1760
        %1762 = vrot.lane.b32.xlu0 %v1694, 21
        %v1763 = vpop.permute.xlu0 %1762
        %1764 = vrot.lane.b32.xlu0 %v1695, 21
        %v1765 = vpop.permute.xlu0 %1764
        %1766 = vrot.lane.b32.xlu0 %v1696, 21
        %v1767 = vpop.permute.xlu0 %1766
        %1768 = vrot.lane.b32.xlu0 %v1697, 21
        %v1769 = vpop.permute.xlu0 %1768
        %1770 = vrot.lane.b32.xlu0 %v1698, 21
        %v1771 = vpop.permute.xlu0 %1770
        %1772 = vrot.lane.b32.xlu0 %v1699, 21
        %v1773 = vpop.permute.xlu0 %1772
        %1774 = vrot.lane.b32.xlu0 %v1700, 21
        %v1775 = vpop.permute.xlu0 %1774
        %1776 = vrot.lane.b32.xlu0 %v1701, 21
        %v1777 = vpop.permute.xlu0 %1776
        %1778 = vrot.lane.b32.xlu0 %v1702, 21
        %v1779 = vpop.permute.xlu0 %1778
        %1780 = vrot.lane.b32.xlu0 %v1703, 21
        %v1781 = vpop.permute.xlu0 %1780
        %1782 = vrot.lane.b32.xlu0 %v1704, 21
        %v1783 = vpop.permute.xlu0 %1782
        %1784 = vrot.lane.b32.xlu0 %v1705, 21
        %v1785 = vpop.permute.xlu0 %1784
        %1786 = vrot.lane.b32.xlu0 %v1706, 21
        %v1787 = vpop.permute.xlu0 %1786
        %1788 = vrot.lane.b32.xlu0 %v1707, 21
        %v1789 = vpop.permute.xlu0 %1788
        %1790 = vrot.lane.b32.xlu0 %v1708, 21
        %v1791 = vpop.permute.xlu0 %1790
        %1792 = vrot.lane.b32.xlu0 %v1709, 21
        %v1793 = vpop.permute.xlu0 %1792
        %1794 = vrot.lane.b32.xlu0 %v1710, 21
        %v1795 = vpop.permute.xlu0 %1794
        %1796 = vrot.lane.b32.xlu0 %v1711, 21
        %v1797 = vpop.permute.xlu0 %1796
        %1798 = vrot.lane.b32.xlu0 %v1712, 21
        %v1799 = vpop.permute.xlu0 %1798
        %1800 = vrot.lane.b32.xlu0 %v1713, 21
        %v1801 = vpop.permute.xlu0 %1800
        %1802 = vrot.lane.b32.xlu0 %v1714, 21
        %v1803 = vpop.permute.xlu0 %1802
        %1804 = vrot.lane.b32.xlu0 %v1715, 21
        %v1805 = vpop.permute.xlu0 %1804
        %1806 = vrot.lane.b32.xlu0 %v1716, 21
        %v1807 = vpop.permute.xlu0 %1806
        %1808 = vrot.lane.b32.xlu0 %v1717, 21
        %v1809 = vpop.permute.xlu0 %1808
        %1810 = vrot.lane.b32.xlu0 %v1718, 21
        %v1811 = vpop.permute.xlu0 %1810
        %1812 = vrot.lane.b32.xlu0 %v1719, 21
        %v1813 = vpop.permute.xlu0 %1812
        %1814 = vrot.lane.b32.xlu0 %v1720, 21
        %v1815 = vpop.permute.xlu0 %1814
        %1816 = vrot.lane.b32.xlu0 %v1721, 21
        %v1817 = vpop.permute.xlu0 %1816
        %vm1850 = vcmask 195752
        %1851 = vst.msk [vmem:[#allocation2] sm:$0xff] %vm1850, %v1755
        %1852 = vst.msk [vmem:[#allocation2 + $0x8] sm:$0xff] %vm1850, %v1757
        %1853 = vst.msk [vmem:[#allocation2 + $0x10] sm:$0xff] %vm1850, %v1759
        %1854 = vst.msk [vmem:[#allocation2 + $0x18] sm:$0xff] %vm1850, %v1761
        %1855 = vst.msk [vmem:[#allocation2 + $0x20] sm:$0xff] %vm1850, %v1763
        %1856 = vst.msk [vmem:[#allocation2 + $0x28] sm:$0xff] %vm1850, %v1765
        %1857 = vst.msk [vmem:[#allocation2 + $0x30] sm:$0xff] %vm1850, %v1767
        %1858 = vst.msk [vmem:[#allocation2 + $0x38] sm:$0xff] %vm1850, %v1769
        %1859 = vst.msk [vmem:[#allocation2 + $0x40] sm:$0xff] %vm1850, %v1771
        %1860 = vst.msk [vmem:[#allocation2 + $0x48] sm:$0xff] %vm1850, %v1773
        %1861 = vst.msk [vmem:[#allocation2 + $0x50] sm:$0xff] %vm1850, %v1775
        %1862 = vst.msk [vmem:[#allocation2 + $0x58] sm:$0xff] %vm1850, %v1777
        %1863 = vst.msk [vmem:[#allocation2 + $0x60] sm:$0xff] %vm1850, %v1779
        %1864 = vst.msk [vmem:[#allocation2 + $0x68] sm:$0xff] %vm1850, %v1781
        %1865 = vst.msk [vmem:[#allocation2 + $0x70] sm:$0xff] %vm1850, %v1783
        %1866 = vst.msk [vmem:[#allocation2 + $0x78] sm:$0xff] %vm1850, %v1785
        %1867 = vst.msk [vmem:[#allocation2 + $0x80] sm:$0xff] %vm1850, %v1787
        %1868 = vst.msk [vmem:[#allocation2 + $0x88] sm:$0xff] %vm1850, %v1789
        %1869 = vst.msk [vmem:[#allocation2 + $0x90] sm:$0xff] %vm1850, %v1791
        %1870 = vst.msk [vmem:[#allocation2 + $0x98] sm:$0xff] %vm1850, %v1793
        %1871 = vst.msk [vmem:[#allocation2 + $0xa0] sm:$0xff] %vm1850, %v1795
        %1872 = vst.msk [vmem:[#allocation2 + $0xa8] sm:$0xff] %vm1850, %v1797
        %1873 = vst.msk [vmem:[#allocation2 + $0xb0] sm:$0xff] %vm1850, %v1799
        %1874 = vst.msk [vmem:[#allocation2 + $0xb8] sm:$0xff] %vm1850, %v1801
        %1875 = vst.msk [vmem:[#allocation2 + $0xc0] sm:$0xff] %vm1850, %v1803
        %1876 = vst.msk [vmem:[#allocation2 + $0xc8] sm:$0xff] %vm1850, %v1805
        %1877 = vst.msk [vmem:[#allocation2 + $0xd0] sm:$0xff] %vm1850, %v1807
        %1878 = vst.msk [vmem:[#allocation2 + $0xd8] sm:$0xff] %vm1850, %v1809
        %1879 = vst.msk [vmem:[#allocation2 + $0xe0] sm:$0xff] %vm1850, %v1811
        %1880 = vst.msk [vmem:[#allocation2 + $0xe8] sm:$0xff] %vm1850, %v1813
        %1881 = vst.msk [vmem:[#allocation2 + $0xf0] sm:$0xff] %vm1850, %v1815
        %1882 = vst.msk [vmem:[#allocation2 + $0xf8] sm:$0xff] %vm1850, %v1817
        %v1883 = vld [vmem:[%s1496 + $0x2] sm:$0xff]
        %v1884 = vld [vmem:[%s1496 + $0xa] sm:$0xff]
        %v1885 = vld [vmem:[%s1496 + $0x1a] sm:$0xff]
        %v1886 = vld [vmem:[%s1496 + $0x22] sm:$0xff]
        %v1887 = vld [vmem:[%s1496 + $0x32] sm:$0xff]
        %v1888 = vld [vmem:[%s1496 + $0x3a] sm:$0xff]
        %v1889 = vld [vmem:[%s1496 + $0x4a] sm:$0xff]
        %v1890 = vld [vmem:[%s1496 + $0x52] sm:$0xff]
        %v1891 = vld [vmem:[%s1496 + $0x62] sm:$0xff]
        %v1892 = vld [vmem:[%s1496 + $0x6a] sm:$0xff]
        %v1893 = vld [vmem:[%s1496 + $0x7a] sm:$0xff]
        %v1894 = vld [vmem:[%s1496 + $0x82] sm:$0xff]
        %v1895 = vld [vmem:[%s1496 + $0x92] sm:$0xff]
        %v1896 = vld [vmem:[%s1496 + $0x9a] sm:$0xff]
        %v1897 = vld [vmem:[%s1496 + $0xaa] sm:$0xff]
        %v1898 = vld [vmem:[%s1496 + $0xb2] sm:$0xff]
        %v1899 = vld [vmem:[%s1496 + $0xc2] sm:$0xff]
        %v1900 = vld [vmem:[%s1496 + $0xca] sm:$0xff]
        %v1901 = vld [vmem:[%s1496 + $0xda] sm:$0xff]
        %v1902 = vld [vmem:[%s1496 + $0xe2] sm:$0xff]
        %v1903 = vld [vmem:[%s1496 + $0xf2] sm:$0xff]
        %v1904 = vld [vmem:[%s1496 + $0xfa] sm:$0xff]
        %v1905 = vld [vmem:[%s1496 + $0x10a] sm:$0xff]
        %v1906 = vld [vmem:[%s1496 + $0x112] sm:$0xff]
        %v1907 = vld [vmem:[%s1496 + $0x122] sm:$0xff]
        %v1908 = vld [vmem:[%s1496 + $0x12a] sm:$0xff]
        %v1909 = vld [vmem:[%s1496 + $0x13a] sm:$0xff]
        %v1910 = vld [vmem:[%s1496 + $0x142] sm:$0xff]
        %v1911 = vld [vmem:[%s1496 + $0x152] sm:$0xff]
        %v1912 = vld [vmem:[%s1496 + $0x15a] sm:$0xff]
        %v1913 = vld [vmem:[%s1496 + $0x16a] sm:$0xff]
        %v1914 = vld [vmem:[%s1496 + $0x172] sm:$0xff]
        %1947 = vrot.lane.b32.xlu0 %v1883, 24
        %v1948 = vpop.permute.xlu0 %1947
        %1949 = vrot.lane.b32.xlu0 %v1884, 24
        %v1950 = vpop.permute.xlu0 %1949
        %1951 = vrot.lane.b32.xlu0 %v1885, 24
        %v1952 = vpop.permute.xlu0 %1951
        %1953 = vrot.lane.b32.xlu0 %v1886, 24
        %v1954 = vpop.permute.xlu0 %1953
        %1955 = vrot.lane.b32.xlu0 %v1887, 24
        %v1956 = vpop.permute.xlu0 %1955
        %1957 = vrot.lane.b32.xlu0 %v1888, 24
        %v1958 = vpop.permute.xlu0 %1957
        %1959 = vrot.lane.b32.xlu0 %v1889, 24
        %v1960 = vpop.permute.xlu0 %1959
        %1961 = vrot.lane.b32.xlu0 %v1890, 24
        %v1962 = vpop.permute.xlu0 %1961
        %1963 = vrot.lane.b32.xlu0 %v1891, 24
        %v1964 = vpop.permute.xlu0 %1963
        %1965 = vrot.lane.b32.xlu0 %v1892, 24
        %v1966 = vpop.permute.xlu0 %1965
        %1967 = vrot.lane.b32.xlu0 %v1893, 24
        %v1968 = vpop.permute.xlu0 %1967
        %1969 = vrot.lane.b32.xlu0 %v1894, 24
        %v1970 = vpop.permute.xlu0 %1969
        %1971 = vrot.lane.b32.xlu0 %v1895, 24
        %v1972 = vpop.permute.xlu0 %1971
        %1973 = vrot.lane.b32.xlu0 %v1896, 24
        %v1974 = vpop.permute.xlu0 %1973
        %1975 = vrot.lane.b32.xlu0 %v1897, 24
        %v1976 = vpop.permute.xlu0 %1975
        %1977 = vrot.lane.b32.xlu0 %v1898, 24
        %v1978 = vpop.permute.xlu0 %1977
        %1979 = vrot.lane.b32.xlu0 %v1899, 24
        %v1980 = vpop.permute.xlu0 %1979
        %1981 = vrot.lane.b32.xlu0 %v1900, 24
        %v1982 = vpop.permute.xlu0 %1981
        %1983 = vrot.lane.b32.xlu0 %v1901, 24
        %v1984 = vpop.permute.xlu0 %1983
        %1985 = vrot.lane.b32.xlu0 %v1902, 24
        %v1986 = vpop.permute.xlu0 %1985
        %1987 = vrot.lane.b32.xlu0 %v1903, 24
        %v1988 = vpop.permute.xlu0 %1987
        %1989 = vrot.lane.b32.xlu0 %v1904, 24
        %v1990 = vpop.permute.xlu0 %1989
        %1991 = vrot.lane.b32.xlu0 %v1905, 24
        %v1992 = vpop.permute.xlu0 %1991
        %1993 = vrot.lane.b32.xlu0 %v1906, 24
        %v1994 = vpop.permute.xlu0 %1993
        %1995 = vrot.lane.b32.xlu0 %v1907, 24
        %v1996 = vpop.permute.xlu0 %1995
        %1997 = vrot.lane.b32.xlu0 %v1908, 24
        %v1998 = vpop.permute.xlu0 %1997
        %1999 = vrot.lane.b32.xlu0 %v1909, 24
        %v2000 = vpop.permute.xlu0 %1999
        %2001 = vrot.lane.b32.xlu0 %v1910, 24
        %v2002 = vpop.permute.xlu0 %2001
        %2003 = vrot.lane.b32.xlu0 %v1911, 24
        %v2004 = vpop.permute.xlu0 %2003
        %2005 = vrot.lane.b32.xlu0 %v1912, 24
        %v2006 = vpop.permute.xlu0 %2005
        %2007 = vrot.lane.b32.xlu0 %v1913, 24
        %v2008 = vpop.permute.xlu0 %2007
        %2009 = vrot.lane.b32.xlu0 %v1914, 24
        %v2010 = vpop.permute.xlu0 %2009
        %vm2043 = vcmask 220352
        %2044 = vst.msk [vmem:[#allocation2] sm:$0xff] %vm2043, %v1948
        %2045 = vst.msk [vmem:[#allocation2 + $0x8] sm:$0xff] %vm2043, %v1950
        %2046 = vst.msk [vmem:[#allocation2 + $0x10] sm:$0xff] %vm2043, %v1952
        %2047 = vst.msk [vmem:[#allocation2 + $0x18] sm:$0xff] %vm2043, %v1954
        %2048 = vst.msk [vmem:[#allocation2 + $0x20] sm:$0xff] %vm2043, %v1956
        %2049 = vst.msk [vmem:[#allocation2 + $0x28] sm:$0xff] %vm2043, %v1958
        %2050 = vst.msk [vmem:[#allocation2 + $0x30] sm:$0xff] %vm2043, %v1960
        %2051 = vst.msk [vmem:[#allocation2 + $0x38] sm:$0xff] %vm2043, %v1962
        %2052 = vst.msk [vmem:[#allocation2 + $0x40] sm:$0xff] %vm2043, %v1964
        %2053 = vst.msk [vmem:[#allocation2 + $0x48] sm:$0xff] %vm2043, %v1966
        %2054 = vst.msk [vmem:[#allocation2 + $0x50] sm:$0xff] %vm2043, %v1968
        %2055 = vst.msk [vmem:[#allocation2 + $0x58] sm:$0xff] %vm2043, %v1970
        %2056 = vst.msk [vmem:[#allocation2 + $0x60] sm:$0xff] %vm2043, %v1972
        %2057 = vst.msk [vmem:[#allocation2 + $0x68] sm:$0xff] %vm2043, %v1974
        %2058 = vst.msk [vmem:[#allocation2 + $0x70] sm:$0xff] %vm2043, %v1976
        %2059 = vst.msk [vmem:[#allocation2 + $0x78] sm:$0xff] %vm2043, %v1978
        %2060 = vst.msk [vmem:[#allocation2 + $0x80] sm:$0xff] %vm2043, %v1980
        %2061 = vst.msk [vmem:[#allocation2 + $0x88] sm:$0xff] %vm2043, %v1982
        %2062 = vst.msk [vmem:[#allocation2 + $0x90] sm:$0xff] %vm2043, %v1984
        %2063 = vst.msk [vmem:[#allocation2 + $0x98] sm:$0xff] %vm2043, %v1986
        %2064 = vst.msk [vmem:[#allocation2 + $0xa0] sm:$0xff] %vm2043, %v1988
        %2065 = vst.msk [vmem:[#allocation2 + $0xa8] sm:$0xff] %vm2043, %v1990
        %2066 = vst.msk [vmem:[#allocation2 + $0xb0] sm:$0xff] %vm2043, %v1992
        %2067 = vst.msk [vmem:[#allocation2 + $0xb8] sm:$0xff] %vm2043, %v1994
        %2068 = vst.msk [vmem:[#allocation2 + $0xc0] sm:$0xff] %vm2043, %v1996
        %2069 = vst.msk [vmem:[#allocation2 + $0xc8] sm:$0xff] %vm2043, %v1998
        %2070 = vst.msk [vmem:[#allocation2 + $0xd0] sm:$0xff] %vm2043, %v2000
        %2071 = vst.msk [vmem:[#allocation2 + $0xd8] sm:$0xff] %vm2043, %v2002
        %2072 = vst.msk [vmem:[#allocation2 + $0xe0] sm:$0xff] %vm2043, %v2004
        %2073 = vst.msk [vmem:[#allocation2 + $0xe8] sm:$0xff] %vm2043, %v2006
        %2074 = vst.msk [vmem:[#allocation2 + $0xf0] sm:$0xff] %vm2043, %v2008
        %2075 = vst.msk [vmem:[#allocation2 + $0xf8] sm:$0xff] %vm2043, %v2010
        %v2076 = vld [vmem:[#allocation2] sm:$0xff]
        %v2077 = vld [vmem:[#allocation2 + $0x8] sm:$0xff]
        %v2078 = vld [vmem:[#allocation2 + $0x10] sm:$0xff]
        %v2079 = vld [vmem:[#allocation2 + $0x18] sm:$0xff]
        %v2080 = vld [vmem:[#allocation2 + $0x20] sm:$0xff]
        %v2081 = vld [vmem:[#allocation2 + $0x28] sm:$0xff]
        %v2082 = vld [vmem:[#allocation2 + $0x30] sm:$0xff]
        %v2083 = vld [vmem:[#allocation2 + $0x38] sm:$0xff]
        %v2084 = vld [vmem:[#allocation2 + $0x40] sm:$0xff]
        %v2085 = vld [vmem:[#allocation2 + $0x48] sm:$0xff]
        %v2086 = vld [vmem:[#allocation2 + $0x50] sm:$0xff]
        %v2087 = vld [vmem:[#allocation2 + $0x58] sm:$0xff]
        %v2088 = vld [vmem:[#allocation2 + $0x60] sm:$0xff]
        %v2089 = vld [vmem:[#allocation2 + $0x68] sm:$0xff]
        %v2090 = vld [vmem:[#allocation2 + $0x70] sm:$0xff]
        %v2091 = vld [vmem:[#allocation2 + $0x78] sm:$0xff]
        %v2092 = vld [vmem:[#allocation2 + $0x80] sm:$0xff]
        %v2093 = vld [vmem:[#allocation2 + $0x88] sm:$0xff]
        %v2094 = vld [vmem:[#allocation2 + $0x90] sm:$0xff]
        %v2095 = vld [vmem:[#allocation2 + $0x98] sm:$0xff]
        %v2096 = vld [vmem:[#allocation2 + $0xa0] sm:$0xff]
        %v2097 = vld [vmem:[#allocation2 + $0xa8] sm:$0xff]
        %v2098 = vld [vmem:[#allocation2 + $0xb0] sm:$0xff]
        %v2099 = vld [vmem:[#allocation2 + $0xb8] sm:$0xff]
        %v2100 = vld [vmem:[#allocation2 + $0xc0] sm:$0xff]
        %v2101 = vld [vmem:[#allocation2 + $0xc8] sm:$0xff]
        %v2102 = vld [vmem:[#allocation2 + $0xd0] sm:$0xff]
        %v2103 = vld [vmem:[#allocation2 + $0xd8] sm:$0xff]
        %v2104 = vld [vmem:[#allocation2 + $0xe0] sm:$0xff]
        %v2105 = vld [vmem:[#allocation2 + $0xe8] sm:$0xff]
        %v2106 = vld [vmem:[#allocation2 + $0xf0] sm:$0xff]
        %v2107 = vld [vmem:[#allocation2 + $0xf8] sm:$0xff]
        %v2108 = vld [vmem:[%s1] sm:$0xff]
        %v2109 = vld [vmem:[%s1 + $0x8] sm:$0xff]
        %v2110 = vld [vmem:[%s1 + $0x10] sm:$0xff]
        %v2111 = vld [vmem:[%s1 + $0x18] sm:$0x7]
        %vm2112 = vcmask 220160
        %v2114 = vsel %vm2112, %v2076, 0
        %v2117 = vsel %vm2112, %v2077, 0
        %v2120 = vsel %vm2112, %v2078, 0
        %v2123 = vsel %vm2112, %v2079, 0
        %v2126 = vsel %vm2112, %v2080, 0
        %v2129 = vsel %vm2112, %v2081, 0
        %v2132 = vsel %vm2112, %v2082, 0
        %v2135 = vsel %vm2112, %v2083, 0
        %v2138 = vsel %vm2112, %v2084, 0
        %v2141 = vsel %vm2112, %v2085, 0
        %v2144 = vsel %vm2112, %v2086, 0
        %v2147 = vsel %vm2112, %v2087, 0
        %v2150 = vsel %vm2112, %v2088, 0
        %v2153 = vsel %vm2112, %v2089, 0
        %v2156 = vsel %vm2112, %v2090, 0
        %v2159 = vsel %vm2112, %v2091, 0
        %v2162 = vsel %vm2112, %v2092, 0
        %v2165 = vsel %vm2112, %v2093, 0
        %v2168 = vsel %vm2112, %v2094, 0
        %v2171 = vsel %vm2112, %v2095, 0
        %v2174 = vsel %vm2112, %v2096, 0
        %v2177 = vsel %vm2112, %v2097, 0
        %v2180 = vsel %vm2112, %v2098, 0
        %v2183 = vsel %vm2112, %v2099, 0
        %v2186 = vsel %vm2112, %v2100, 0
        %v2189 = vsel %vm2112, %v2101, 0
        %v2192 = vsel %vm2112, %v2102, 0
        %v2195 = vsel %vm2112, %v2103, 0
        %v2198 = vsel %vm2112, %v2104, 0
        %v2201 = vsel %vm2112, %v2105, 0
        %v2204 = vsel %vm2112, %v2106, 0
        %v2207 = vsel %vm2112, %v2107, 0
        %vm2209 = vcmask 1042432
        %v2211 = vsel %vm2209, %v2111, 0
        %2213 = vmatprep.subr.mxu0 0.0
        %2214 = vmatpush1.msra.mxu0 %v2108
        %2215 = vmatprep.subr.mxu0 0.0
        %2216 = vmatpush1.msra.mxu0 %v2109
        %2217 = vmatprep.subr.mxu0 0.0
        %2218 = vmatpush1.msra.mxu0 %v2110
        %2219 = vmatprep.subr.mxu0 0.0
        %2220 = vmatpush1.msra.mxu0 %v2211
        %2221 = vmatprep.subr.mxu0 0.0
        %2222 = vmatpush1.msra.mxu0 0.0
        %2223 = vmatprep.subr.mxu0 0.0
        %2224 = vmatpush1.msra.mxu0 0.0
        %2225 = vmatprep.subr.mxu0 0.0
        %2226 = vmatpush1.msra.mxu0 0.0
        %2227 = vmatprep.subr.mxu0 0.0
        %2228 = vmatpush1.msra.mxu0 0.0
        %2229 = vmatprep.subr.mxu0 0.0
        %2230 = vmatpush1.msra.mxu0 0.0
        %2231 = vmatprep.subr.mxu0 0.0
        %2232 = vmatpush1.msra.mxu0 0.0
        %2233 = vmatprep.subr.mxu0 0.0
        %2234 = vmatpush1.msra.mxu0 0.0
        %2235 = vmatprep.subr.mxu0 0.0
        %2236 = vmatpush1.msra.mxu0 0.0
        %2237 = vmatprep.subr.mxu0 0.0
        %2238 = vmatpush1.msra.mxu0 0.0
        %2239 = vmatprep.subr.mxu0 0.0
        %2240 = vmatpush1.msra.mxu0 0.0
        %2241 = vmatprep.subr.mxu0 0.0
        %2242 = vmatpush1.msra.mxu0 0.0
        %2243 = vmatprep.subr.mxu0 0.0
        %2244 = vmatpush1.msra.mxu0 0.0
        %2245 = vmatprep.subr.mxu0 0.0
        %2246 = vmatpush1.msra.mxu0 0.0
        %2247 = vmatprep.subr.mxu0 0.0
        %2248 = vmatpush1.msra.mxu0 0.0
        %2249 = vmatprep.subr.mxu0 0.0
        %2250 = vmatpush1.msra.mxu0 0.0
        %2251 = vmatprep.subr.mxu0 0.0
        %2252 = vmatpush1.msra.mxu0 0.0
        %2253 = vmatprep.subr.mxu0 0.0
        %2254 = vmatpush1.msra.mxu0 0.0
        %2255 = vmatprep.subr.mxu0 0.0
        %2256 = vmatpush1.msra.mxu0 0.0
        %2257 = vmatprep.subr.mxu0 0.0
        %2258 = vmatpush1.msra.mxu0 0.0
        %2259 = vmatprep.subr.mxu0 0.0
        %2260 = vmatpush1.msra.mxu0 0.0
        %2261 = vmatprep.subr.mxu0 0.0
        %2262 = vmatpush1.msra.mxu0 0.0
        %2263 = vmatprep.subr.mxu0 0.0
        %2264 = vmatpush1.msra.mxu0 0.0
        %2265 = vmatprep.subr.mxu0 0.0
        %2266 = vmatpush1.msra.mxu0 0.0
        %2267 = vmatprep.subr.mxu0 0.0
        %2268 = vmatpush1.msra.mxu0 0.0
        %2269 = vmatprep.subr.mxu0 0.0
        %2270 = vmatpush1.msra.mxu0 0.0
        %2271 = vmatprep.subr.mxu0 0.0
        %2272 = vmatpush1.msra.mxu0 0.0
        %2273 = vmatprep.subr.mxu0 0.0
        %2274 = vmatpush1.msra.mxu0 0.0
        %2275 = vmatprep.subr.mxu0 0.0
        %2276 = vmatpush1.msra.mxu0 0.0
        %2277 = vmatprep.mubr.f32.mxu0 0.0
        %2278 = vmatmul.mubr.f32.gmra.mrb[0].mxu0 %v2114
        %v2279 = vpop.f32.mrb[0].mxu0
        %v2280 = vadd.f32 0.0, %v2279
        %v2281 = vpop.f32.mrb[0].mxu0
        %2282 = vmatprep.mubr.f32.mxu0 0.0
        %2283 = vmatmul.mubr.f32.gmra.mrb[0].mxu0 %v2117
        %v2284 = vpop.f32.mrb[0].mxu0
        %v2285 = vadd.f32 0.0, %v2284
        %v2286 = vpop.f32.mrb[0].mxu0
        %2287 = vmatprep.mubr.f32.mxu0 0.0
        %2288 = vmatmul.mubr.f32.gmra.mrb[0].mxu0 %v2120
        %v2289 = vpop.f32.mrb[0].mxu0
        %v2290 = vadd.f32 0.0, %v2289
        %v2291 = vpop.f32.mrb[0].mxu0
        %2292 = vmatprep.mubr.f32.mxu0 0.0
        %2293 = vmatmul.mubr.f32.gmra.mrb[0].mxu0 %v2123
        %v2294 = vpop.f32.mrb[0].mxu0
        %v2295 = vadd.f32 0.0, %v2294
        %v2296 = vpop.f32.mrb[0].mxu0
        %2297 = vmatprep.mubr.f32.mxu0 0.0
        %2298 = vmatmul.mubr.f32.gmra.mrb[0].mxu0 %v2126
        %v2299 = vpop.f32.mrb[0].mxu0
        %v2300 = vadd.f32 0.0, %v2299
        %v2301 = vpop.f32.mrb[0].mxu0
        %2302 = vmatprep.mubr.f32.mxu0 0.0
        %2303 = vmatmul.mubr.f32.gmra.mrb[0].mxu0 %v2129
        %v2304 = vpop.f32.mrb[0].mxu0
        %v2305 = vadd.f32 0.0, %v2304
        %v2306 = vpop.f32.mrb[0].mxu0
        %2307 = vmatprep.mubr.f32.mxu0 0.0
        %2308 = vmatmul.mubr.f32.gmra.mrb[0].mxu0 %v2132
        %v2309 = vpop.f32.mrb[0].mxu0
        %v2310 = vadd.f32 0.0, %v2309
        %v2311 = vpop.f32.mrb[0].mxu0
        %2312 = vmatprep.mubr.f32.mxu0 0.0
        %2313 = vmatmul.mubr.f32.gmra.mrb[0].mxu0 %v2135
        %v2314 = vpop.f32.mrb[0].mxu0
        %v2315 = vadd.f32 0.0, %v2314
        %v2316 = vpop.f32.mrb[0].mxu0
        %2317 = vmatprep.mubr.f32.mxu0 0.0
        %2318 = vmatmul.mubr.f32.gmra.mrb[0].mxu0 %v2138
        %v2319 = vpop.f32.mrb[0].mxu0
        %v2320 = vadd.f32 0.0, %v2319
        %v2321 = vpop.f32.mrb[0].mxu0
        %2322 = vmatprep.mubr.f32.mxu0 0.0
        %2323 = vmatmul.mubr.f32.gmra.mrb[0].mxu0 %v2141
        %v2324 = vpop.f32.mrb[0].mxu0
        %v2325 = vadd.f32 0.0, %v2324
        %v2326 = vpop.f32.mrb[0].mxu0
        %2327 = vmatprep.mubr.f32.mxu0 0.0
        %2328 = vmatmul.mubr.f32.gmra.mrb[0].mxu0 %v2144
        %v2329 = vpop.f32.mrb[0].mxu0
        %v2330 = vadd.f32 0.0, %v2329
        %v2331 = vpop.f32.mrb[0].mxu0
        %2332 = vmatprep.mubr.f32.mxu0 0.0
        %2333 = vmatmul.mubr.f32.gmra.mrb[0].mxu0 %v2147
        %v2334 = vpop.f32.mrb[0].mxu0
        %v2335 = vadd.f32 0.0, %v2334
        %v2336 = vpop.f32.mrb[0].mxu0
        %2337 = vmatprep.mubr.f32.mxu0 0.0
        %2338 = vmatmul.mubr.f32.gmra.mrb[0].mxu0 %v2150
        %v2339 = vpop.f32.mrb[0].mxu0
        %v2340 = vadd.f32 0.0, %v2339
        %v2341 = vpop.f32.mrb[0].mxu0
        %2342 = vmatprep.mubr.f32.mxu0 0.0
        %2343 = vmatmul.mubr.f32.gmra.mrb[0].mxu0 %v2153
        %v2344 = vpop.f32.mrb[0].mxu0
        %v2345 = vadd.f32 0.0, %v2344
        %v2346 = vpop.f32.mrb[0].mxu0
        %2347 = vmatprep.mubr.f32.mxu0 0.0
        %2348 = vmatmul.mubr.f32.gmra.mrb[0].mxu0 %v2156
        %v2349 = vpop.f32.mrb[0].mxu0
        %v2350 = vadd.f32 0.0, %v2349
        %v2351 = vpop.f32.mrb[0].mxu0
        %2352 = vmatprep.mubr.f32.mxu0 0.0
        %2353 = vmatmul.mubr.f32.gmra.mrb[0].mxu0 %v2159
        %v2354 = vpop.f32.mrb[0].mxu0
        %v2355 = vadd.f32 0.0, %v2354
        %v2356 = vpop.f32.mrb[0].mxu0
        %2357 = vmatprep.mubr.f32.mxu0 0.0
        %2358 = vmatmul.mubr.f32.gmra.mrb[0].mxu0 %v2162
        %v2359 = vpop.f32.mrb[0].mxu0
        %v2360 = vadd.f32 0.0, %v2359
        %v2361 = vpop.f32.mrb[0].mxu0
        %2362 = vmatprep.mubr.f32.mxu0 0.0
        %2363 = vmatmul.mubr.f32.gmra.mrb[0].mxu0 %v2165
        %v2364 = vpop.f32.mrb[0].mxu0
        %v2365 = vadd.f32 0.0, %v2364
        %v2366 = vpop.f32.mrb[0].mxu0
        %2367 = vmatprep.mubr.f32.mxu0 0.0
        %2368 = vmatmul.mubr.f32.gmra.mrb[0].mxu0 %v2168
        %v2369 = vpop.f32.mrb[0].mxu0
        %v2370 = vadd.f32 0.0, %v2369
        %v2371 = vpop.f32.mrb[0].mxu0
        %2372 = vmatprep.mubr.f32.mxu0 0.0
        %2373 = vmatmul.mubr.f32.gmra.mrb[0].mxu0 %v2171
        %v2374 = vpop.f32.mrb[0].mxu0
        %v2375 = vadd.f32 0.0, %v2374
        %v2376 = vpop.f32.mrb[0].mxu0
        %2377 = vmatprep.mubr.f32.mxu0 0.0
        %2378 = vmatmul.mubr.f32.gmra.mrb[0].mxu0 %v2174
        %v2379 = vpop.f32.mrb[0].mxu0
        %v2380 = vadd.f32 0.0, %v2379
        %v2381 = vpop.f32.mrb[0].mxu0
        %2382 = vmatprep.mubr.f32.mxu0 0.0
        %2383 = vmatmul.mubr.f32.gmra.mrb[0].mxu0 %v2177
        %v2384 = vpop.f32.mrb[0].mxu0
        %v2385 = vadd.f32 0.0, %v2384
        %v2386 = vpop.f32.mrb[0].mxu0
        %2387 = vmatprep.mubr.f32.mxu0 0.0
        %2388 = vmatmul.mubr.f32.gmra.mrb[0].mxu0 %v2180
        %v2389 = vpop.f32.mrb[0].mxu0
        %v2390 = vadd.f32 0.0, %v2389
        %v2391 = vpop.f32.mrb[0].mxu0
        %2392 = vmatprep.mubr.f32.mxu0 0.0
        %2393 = vmatmul.mubr.f32.gmra.mrb[0].mxu0 %v2183
        %v2394 = vpop.f32.mrb[0].mxu0
        %v2395 = vadd.f32 0.0, %v2394
        %v2396 = vpop.f32.mrb[0].mxu0
        %2397 = vmatprep.mubr.f32.mxu0 0.0
        %2398 = vmatmul.mubr.f32.gmra.mrb[0].mxu0 %v2186
        %v2399 = vpop.f32.mrb[0].mxu0
        %v2400 = vadd.f32 0.0, %v2399
        %v2401 = vpop.f32.mrb[0].mxu0
        %2402 = vmatprep.mubr.f32.mxu0 0.0
        %2403 = vmatmul.mubr.f32.gmra.mrb[0].mxu0 %v2189
        %v2404 = vpop.f32.mrb[0].mxu0
        %v2405 = vadd.f32 0.0, %v2404
        %v2406 = vpop.f32.mrb[0].mxu0
        %2407 = vmatprep.mubr.f32.mxu0 0.0
        %2408 = vmatmul.mubr.f32.gmra.mrb[0].mxu0 %v2192
        %v2409 = vpop.f32.mrb[0].mxu0
        %v2410 = vadd.f32 0.0, %v2409
        %v2411 = vpop.f32.mrb[0].mxu0
        %2412 = vmatprep.mubr.f32.mxu0 0.0
        %2413 = vmatmul.mubr.f32.gmra.mrb[0].mxu0 %v2195
        %v2414 = vpop.f32.mrb[0].mxu0
        %v2415 = vadd.f32 0.0, %v2414
        %v2416 = vpop.f32.mrb[0].mxu0
        %2417 = vmatprep.mubr.f32.mxu0 0.0
        %2418 = vmatmul.mubr.f32.gmra.mrb[0].mxu0 %v2198
        %v2419 = vpop.f32.mrb[0].mxu0
        %v2420 = vadd.f32 0.0, %v2419
        %v2421 = vpop.f32.mrb[0].mxu0
        %2422 = vmatprep.mubr.f32.mxu0 0.0
        %2423 = vmatmul.mubr.f32.gmra.mrb[0].mxu0 %v2201
        %v2424 = vpop.f32.mrb[0].mxu0
        %v2425 = vadd.f32 0.0, %v2424
        %v2426 = vpop.f32.mrb[0].mxu0
        %2427 = vmatprep.mubr.f32.mxu0 0.0
        %2428 = vmatmul.mubr.f32.gmra.mrb[0].mxu0 %v2204
        %v2429 = vpop.f32.mrb[0].mxu0
        %v2430 = vadd.f32 0.0, %v2429
        %v2431 = vpop.f32.mrb[0].mxu0
        %2432 = vmatprep.mubr.f32.mxu0 0.0
        %2433 = vmatmul.mubr.f32.gmra.mrb[0].mxu0 %v2207
        %v2434 = vpop.f32.mrb[0].mxu0
        %v2435 = vadd.f32 0.0, %v2434
        %v2436 = vpop.f32.mrb[0].mxu0
        %2437 = vdwg.mxu0
        %v2438 = vld [vmem:[%s2] sm:$0x1]
        %v2440 = vlaneseq
        %v2441 = vshrl.u32 %v2440, 7
        %v2442 = vsub.s32 0, %v2441
        %v2443 = vrot.slane %v2438, %v2442
        %v2445 = vmul.f32 %v2280, %v2443
        %v2446 = vmul.f32 %v2285, %v2443
        %v2447 = vmul.f32 %v2290, %v2443
        %v2448 = vmul.f32 %v2295, %v2443
        %v2449 = vmul.f32 %v2300, %v2443
        %v2450 = vmul.f32 %v2305, %v2443
        %v2451 = vmul.f32 %v2310, %v2443
        %v2452 = vmul.f32 %v2315, %v2443
        %v2453 = vmul.f32 %v2320, %v2443
        %v2454 = vmul.f32 %v2325, %v2443
        %v2455 = vmul.f32 %v2330, %v2443
        %v2456 = vmul.f32 %v2335, %v2443
        %v2457 = vmul.f32 %v2340, %v2443
        %v2458 = vmul.f32 %v2345, %v2443
        %v2459 = vmul.f32 %v2350, %v2443
        %v2460 = vmul.f32 %v2355, %v2443
        %v2461 = vmul.f32 %v2360, %v2443
        %v2462 = vmul.f32 %v2365, %v2443
        %v2463 = vmul.f32 %v2370, %v2443
        %v2464 = vmul.f32 %v2375, %v2443
        %v2465 = vmul.f32 %v2380, %v2443
        %v2466 = vmul.f32 %v2385, %v2443
        %v2467 = vmul.f32 %v2390, %v2443
        %v2468 = vmul.f32 %v2395, %v2443
        %v2469 = vmul.f32 %v2400, %v2443
        %v2470 = vmul.f32 %v2405, %v2443
        %v2471 = vmul.f32 %v2410, %v2443
        %v2472 = vmul.f32 %v2415, %v2443
        %v2473 = vmul.f32 %v2420, %v2443
        %v2474 = vmul.f32 %v2425, %v2443
        %v2475 = vmul.f32 %v2430, %v2443
        %v2476 = vmul.f32 %v2435, %v2443
        %v2477 = vld [vmem:[%s3] sm:$0x1]
        %v2479 = vlaneseq
        %v2480 = vshrl.u32 %v2479, 7
        %v2481 = vsub.s32 0, %v2480
        %v2482 = vrot.slane %v2477, %v2481
        %v2484 = vadd.f32 %v2445, %v2482
        %v2485 = vadd.f32 %v2446, %v2482
        %v2486 = vadd.f32 %v2447, %v2482
        %v2487 = vadd.f32 %v2448, %v2482
        %v2488 = vadd.f32 %v2449, %v2482
        %v2489 = vadd.f32 %v2450, %v2482
        %v2490 = vadd.f32 %v2451, %v2482
        %v2491 = vadd.f32 %v2452, %v2482
        %v2492 = vadd.f32 %v2453, %v2482
        %v2493 = vadd.f32 %v2454, %v2482
        %v2494 = vadd.f32 %v2455, %v2482
        %v2495 = vadd.f32 %v2456, %v2482
        %v2496 = vadd.f32 %v2457, %v2482
        %v2497 = vadd.f32 %v2458, %v2482
        %v2498 = vadd.f32 %v2459, %v2482
        %v2499 = vadd.f32 %v2460, %v2482
        %v2500 = vadd.f32 %v2461, %v2482
        %v2501 = vadd.f32 %v2462, %v2482
        %v2502 = vadd.f32 %v2463, %v2482
        %v2503 = vadd.f32 %v2464, %v2482
        %v2504 = vadd.f32 %v2465, %v2482
        %v2505 = vadd.f32 %v2466, %v2482
        %v2506 = vadd.f32 %v2467, %v2482
        %v2507 = vadd.f32 %v2468, %v2482
        %v2508 = vadd.f32 %v2469, %v2482
        %v2509 = vadd.f32 %v2470, %v2482
        %v2510 = vadd.f32 %v2471, %v2482
        %v2511 = vadd.f32 %v2472, %v2482
        %v2512 = vadd.f32 %v2473, %v2482
        %v2513 = vadd.f32 %v2474, %v2482
        %v2514 = vadd.f32 %v2475, %v2482
        %v2515 = vadd.f32 %v2476, %v2482
        %v2516 = vmax.f32 %v2484, 0.0
        %v2517 = vmax.f32 %v2485, 0.0
        %v2518 = vmax.f32 %v2486, 0.0
        %v2519 = vmax.f32 %v2487, 0.0
        %v2520 = vmax.f32 %v2488, 0.0
        %v2521 = vmax.f32 %v2489, 0.0
        %v2522 = vmax.f32 %v2490, 0.0
        %v2523 = vmax.f32 %v2491, 0.0
        %v2524 = vmax.f32 %v2492, 0.0
        %v2525 = vmax.f32 %v2493, 0.0
        %v2526 = vmax.f32 %v2494, 0.0
        %v2527 = vmax.f32 %v2495, 0.0
        %v2528 = vmax.f32 %v2496, 0.0
        %v2529 = vmax.f32 %v2497, 0.0
        %v2530 = vmax.f32 %v2498, 0.0
        %v2531 = vmax.f32 %v2499, 0.0
        %v2532 = vmax.f32 %v2500, 0.0
        %v2533 = vmax.f32 %v2501, 0.0
        %v2534 = vmax.f32 %v2502, 0.0
        %v2535 = vmax.f32 %v2503, 0.0
        %v2536 = vmax.f32 %v2504, 0.0
        %v2537 = vmax.f32 %v2505, 0.0
        %v2538 = vmax.f32 %v2506, 0.0
        %v2539 = vmax.f32 %v2507, 0.0
        %v2540 = vmax.f32 %v2508, 0.0
        %v2541 = vmax.f32 %v2509, 0.0
        %v2542 = vmax.f32 %v2510, 0.0
        %v2543 = vmax.f32 %v2511, 0.0
        %v2544 = vmax.f32 %v2512, 0.0
        %v2545 = vmax.f32 %v2513, 0.0
        %v2546 = vmax.f32 %v2514, 0.0
        %v2547 = vmax.f32 %v2515, 0.0
        %vm2548 = vcmask 130048
        %2549 = vst.msk [vmem:[#allocation3] sm:$0xff] %vm2548, 0.0
        %vm2550 = vcmask 123904
        %2551 = vst.msk [vmem:[#allocation3 + $0x8] sm:$0x3] %vm2550, 0.0
        %2552 = vst.msk [vmem:[#allocation3 + $0x10] sm:$0xff] %vm2548, 0.0
        %2553 = vst.msk [vmem:[#allocation3 + $0x18] sm:$0x3] %vm2550, 0.0
        %2554 = vst.msk [vmem:[#allocation3 + $0x20] sm:$0xff] %vm2548, 0.0
        %2555 = vst.msk [vmem:[#allocation3 + $0x28] sm:$0x3] %vm2550, 0.0
        %2556 = vst.msk [vmem:[#allocation3 + $0x30] sm:$0xff] %vm2548, 0.0
        %2557 = vst.msk [vmem:[#allocation3 + $0x38] sm:$0x3] %vm2550, 0.0
        %2558 = vst.msk [vmem:[#allocation3 + $0x40] sm:$0xff] %vm2548, 0.0
        %2559 = vst.msk [vmem:[#allocation3 + $0x48] sm:$0x3] %vm2550, 0.0
        %2560 = vst.msk [vmem:[#allocation3 + $0x50] sm:$0xff] %vm2548, 0.0
        %2561 = vst.msk [vmem:[#allocation3 + $0x58] sm:$0x3] %vm2550, 0.0
        %2562 = vst.msk [vmem:[#allocation3 + $0x60] sm:$0xff] %vm2548, 0.0
        %2563 = vst.msk [vmem:[#allocation3 + $0x68] sm:$0x3] %vm2550, 0.0
        %2564 = vst.msk [vmem:[#allocation3 + $0x70] sm:$0xff] %vm2548, 0.0
        %2565 = vst.msk [vmem:[#allocation3 + $0x78] sm:$0x3] %vm2550, 0.0
        %2566 = vst.msk [vmem:[#allocation3 + $0x80] sm:$0xff] %vm2548, 0.0
        %2567 = vst.msk [vmem:[#allocation3 + $0x88] sm:$0x3] %vm2550, 0.0
        %2568 = vst.msk [vmem:[#allocation3 + $0x90] sm:$0xff] %vm2548, 0.0
        %2569 = vst.msk [vmem:[#allocation3 + $0x98] sm:$0x3] %vm2550, 0.0
        %v2570 = vmax.f32 %v2516, %v2518
        %v2571 = vmax.f32 %v2517, %v2519
        %v2572 = vmax.f32 %v2520, %v2522
        %v2573 = vmax.f32 %v2521, %v2523
        %v2574 = vmax.f32 %v2524, %v2526
        %v2575 = vmax.f32 %v2525, %v2527
        %v2576 = vmax.f32 %v2528, %v2530
        %v2577 = vmax.f32 %v2529, %v2531
        %v2578 = vmax.f32 %v2532, %v2534
        %v2579 = vmax.f32 %v2533, %v2535
        %v2580 = vmax.f32 %v2536, %v2538
        %v2581 = vmax.f32 %v2537, %v2539
        %v2582 = vmax.f32 %v2540, %v2542
        %v2583 = vmax.f32 %v2541, %v2543
        %v2584 = vmax.f32 %v2544, %v2546
        %v2585 = vmax.f32 %v2545, %v2547
        %v2594 = vrot.slane %v2570, 1
        %v2595 = vrot.slane %v2572, 1
        %v2596 = vrot.slane %v2574, 1
        %v2597 = vrot.slane %v2576, 1
        %v2598 = vrot.slane %v2578, 1
        %v2599 = vrot.slane %v2580, 1
        %v2600 = vrot.slane %v2582, 1
        %v2601 = vrot.slane %v2584, 1
        %v2610 = vmax.f32 %v2570, %v2594
        %v2611 = vmax.f32 %v2572, %v2595
        %v2612 = vmax.f32 %v2574, %v2596
        %v2613 = vmax.f32 %v2576, %v2597
        %v2614 = vmax.f32 %v2578, %v2598
        %v2615 = vmax.f32 %v2580, %v2599
        %v2616 = vmax.f32 %v2582, %v2600
        %v2617 = vmax.f32 %v2584, %v2601
        %s2618 = scalar_lea.vmem [#allocation3], 16
        %vm2619 = vcmask 122880
        %2620 = vst.msk [vmem:[%s2618 + $0x1] sm:$0x1] %vm2619, %v2610
        %2621 = vst.msk [vmem:[%s2618 + $0x11] sm:$0x1] %vm2619, %v2611
        %2622 = vst.msk [vmem:[%s2618 + $0x21] sm:$0x1] %vm2619, %v2612
        %2623 = vst.msk [vmem:[%s2618 + $0x31] sm:$0x1] %vm2619, %v2613
        %2624 = vst.msk [vmem:[%s2618 + $0x41] sm:$0x1] %vm2619, %v2614
        %2625 = vst.msk [vmem:[%s2618 + $0x51] sm:$0x1] %vm2619, %v2615
        %2626 = vst.msk [vmem:[%s2618 + $0x61] sm:$0x1] %vm2619, %v2616
        %2627 = vst.msk [vmem:[%s2618 + $0x71] sm:$0x1] %vm2619, %v2617
        %vm2628 = vcmask 124930
        %2629 = vst.msk [vmem:[%s2618] sm:$0x4] %vm2628, %v2610
        %2630 = vst.msk [vmem:[%s2618 + $0x10] sm:$0x4] %vm2628, %v2611
        %2631 = vst.msk [vmem:[%s2618 + $0x20] sm:$0x4] %vm2628, %v2612
        %2632 = vst.msk [vmem:[%s2618 + $0x30] sm:$0x4] %vm2628, %v2613
        %2633 = vst.msk [vmem:[%s2618 + $0x40] sm:$0x4] %vm2628, %v2614
        %2634 = vst.msk [vmem:[%s2618 + $0x50] sm:$0x4] %vm2628, %v2615
        %2635 = vst.msk [vmem:[%s2618 + $0x60] sm:$0x4] %vm2628, %v2616
        %2636 = vst.msk [vmem:[%s2618 + $0x70] sm:$0x4] %vm2628, %v2617
        %vm2637 = vcmask 126980
        %2638 = vst.msk [vmem:[%s2618 - $0x1] sm:$0x10] %vm2637, %v2610
        %2639 = vst.msk [vmem:[%s2618 + $0xf] sm:$0x10] %vm2637, %v2611
        %2640 = vst.msk [vmem:[%s2618 + $0x1f] sm:$0x10] %vm2637, %v2612
        %2641 = vst.msk [vmem:[%s2618 + $0x2f] sm:$0x10] %vm2637, %v2613
        %2642 = vst.msk [vmem:[%s2618 + $0x3f] sm:$0x10] %vm2637, %v2614
        %2643 = vst.msk [vmem:[%s2618 + $0x4f] sm:$0x10] %vm2637, %v2615
        %2644 = vst.msk [vmem:[%s2618 + $0x5f] sm:$0x10] %vm2637, %v2616
        %2645 = vst.msk [vmem:[%s2618 + $0x6f] sm:$0x10] %vm2637, %v2617
        %vm2646 = vcmask 129030
        %2647 = vst.msk [vmem:[%s2618 - $0x2] sm:$0x40] %vm2646, %v2610
        %2648 = vst.msk [vmem:[%s2618 + $0xe] sm:$0x40] %vm2646, %v2611
        %2649 = vst.msk [vmem:[%s2618 + $0x1e] sm:$0x40] %vm2646, %v2612
        %2650 = vst.msk [vmem:[%s2618 + $0x2e] sm:$0x40] %vm2646, %v2613
        %2651 = vst.msk [vmem:[%s2618 + $0x3e] sm:$0x40] %vm2646, %v2614
        %2652 = vst.msk [vmem:[%s2618 + $0x4e] sm:$0x40] %vm2646, %v2615
        %2653 = vst.msk [vmem:[%s2618 + $0x5e] sm:$0x40] %vm2646, %v2616
        %2654 = vst.msk [vmem:[%s2618 + $0x6e] sm:$0x40] %vm2646, %v2617
        %v2663 = vrot.slane %v2571, 1
        %v2664 = vrot.slane %v2573, 1
        %v2665 = vrot.slane %v2575, 1
        %v2666 = vrot.slane %v2577, 1
        %v2667 = vrot.slane %v2579, 1
        %v2668 = vrot.slane %v2581, 1
        %v2669 = vrot.slane %v2583, 1
        %v2670 = vrot.slane %v2585, 1
        %v2679 = vmax.f32 %v2571, %v2663
        %v2680 = vmax.f32 %v2573, %v2664
        %v2681 = vmax.f32 %v2575, %v2665
        %v2682 = vmax.f32 %v2577, %v2666
        %v2683 = vmax.f32 %v2579, %v2667
        %v2684 = vmax.f32 %v2581, %v2668
        %v2685 = vmax.f32 %v2583, %v2669
        %v2686 = vmax.f32 %v2585, %v2670
        %2687 = vst.msk [vmem:[%s2618 + $0x5] sm:$0x1] %vm2619, %v2679
        %2688 = vst.msk [vmem:[%s2618 + $0x15] sm:$0x1] %vm2619, %v2680
        %2689 = vst.msk [vmem:[%s2618 + $0x25] sm:$0x1] %vm2619, %v2681
        %2690 = vst.msk [vmem:[%s2618 + $0x35] sm:$0x1] %vm2619, %v2682
        %2691 = vst.msk [vmem:[%s2618 + $0x45] sm:$0x1] %vm2619, %v2683
        %2692 = vst.msk [vmem:[%s2618 + $0x55] sm:$0x1] %vm2619, %v2684
        %2693 = vst.msk [vmem:[%s2618 + $0x65] sm:$0x1] %vm2619, %v2685
        %2694 = vst.msk [vmem:[%s2618 + $0x75] sm:$0x1] %vm2619, %v2686
        %2695 = vst.msk [vmem:[%s2618 + $0x4] sm:$0x4] %vm2628, %v2679
        %2696 = vst.msk [vmem:[%s2618 + $0x14] sm:$0x4] %vm2628, %v2680
        %2697 = vst.msk [vmem:[%s2618 + $0x24] sm:$0x4] %vm2628, %v2681
        %2698 = vst.msk [vmem:[%s2618 + $0x34] sm:$0x4] %vm2628, %v2682
        %2699 = vst.msk [vmem:[%s2618 + $0x44] sm:$0x4] %vm2628, %v2683
        %2700 = vst.msk [vmem:[%s2618 + $0x54] sm:$0x4] %vm2628, %v2684
        %2701 = vst.msk [vmem:[%s2618 + $0x64] sm:$0x4] %vm2628, %v2685
        %2702 = vst.msk [vmem:[%s2618 + $0x74] sm:$0x4] %vm2628, %v2686
        %2703 = vst.msk [vmem:[%s2618 + $0x3] sm:$0x10] %vm2637, %v2679
        %2704 = vst.msk [vmem:[%s2618 + $0x13] sm:$0x10] %vm2637, %v2680
        %2705 = vst.msk [vmem:[%s2618 + $0x23] sm:$0x10] %vm2637, %v2681
        %2706 = vst.msk [vmem:[%s2618 + $0x33] sm:$0x10] %vm2637, %v2682
        %2707 = vst.msk [vmem:[%s2618 + $0x43] sm:$0x10] %vm2637, %v2683
        %2708 = vst.msk [vmem:[%s2618 + $0x53] sm:$0x10] %vm2637, %v2684
        %2709 = vst.msk [vmem:[%s2618 + $0x63] sm:$0x10] %vm2637, %v2685
        %2710 = vst.msk [vmem:[%s2618 + $0x73] sm:$0x10] %vm2637, %v2686
        %2711 = vst.msk [vmem:[%s2618 + $0x2] sm:$0x40] %vm2646, %v2679
        %2712 = vst.msk [vmem:[%s2618 + $0x12] sm:$0x40] %vm2646, %v2680
        %2713 = vst.msk [vmem:[%s2618 + $0x22] sm:$0x40] %vm2646, %v2681
        %2714 = vst.msk [vmem:[%s2618 + $0x32] sm:$0x40] %vm2646, %v2682
        %2715 = vst.msk [vmem:[%s2618 + $0x42] sm:$0x40] %vm2646, %v2683
        %2716 = vst.msk [vmem:[%s2618 + $0x52] sm:$0x40] %vm2646, %v2684
        %2717 = vst.msk [vmem:[%s2618 + $0x62] sm:$0x40] %vm2646, %v2685
        %2718 = vst.msk [vmem:[%s2618 + $0x72] sm:$0x40] %vm2646, %v2686
        %v2719 = vld [vmem:[#allocation3] sm:$0xff]
        %v2720 = vld [vmem:[#allocation3 + $0x10] sm:$0xff]
        %v2721 = vld [vmem:[#allocation3 + $0x20] sm:$0xff]
        %v2722 = vld [vmem:[#allocation3 + $0x30] sm:$0xff]
        %v2723 = vld [vmem:[#allocation3 + $0x40] sm:$0xff]
        %v2724 = vld [vmem:[#allocation3 + $0x50] sm:$0xff]
        %v2725 = vld [vmem:[#allocation3 + $0x60] sm:$0xff]
        %v2726 = vld [vmem:[#allocation3 + $0x70] sm:$0xff]
        %2727 = vst.msk [vmem:[#allocation4] sm:$0xff] %vm2548, %v2719
        %2728 = vst.msk [vmem:[#allocation4 + $0x10] sm:$0xff] %vm2548, %v2720
        %2729 = vst.msk [vmem:[#allocation4 + $0x20] sm:$0xff] %vm2548, %v2721
        %2730 = vst.msk [vmem:[#allocation4 + $0x30] sm:$0xff] %vm2548, %v2722
        %2731 = vst.msk [vmem:[#allocation4 + $0x40] sm:$0xff] %vm2548, %v2723
        %2732 = vst.msk [vmem:[#allocation4 + $0x50] sm:$0xff] %vm2548, %v2724
        %2733 = vst.msk [vmem:[#allocation4 + $0x60] sm:$0xff] %vm2548, %v2725
        %2734 = vst.msk [vmem:[#allocation4 + $0x70] sm:$0xff] %vm2548, %v2726
        %v2735 = vld [vmem:[#allocation3 + $0x1] sm:$0xff]
        %v2736 = vld [vmem:[#allocation3 + $0x11] sm:$0xff]
        %v2737 = vld [vmem:[#allocation3 + $0x21] sm:$0xff]
        %v2738 = vld [vmem:[#allocation3 + $0x31] sm:$0xff]
        %v2739 = vld [vmem:[#allocation3 + $0x41] sm:$0xff]
        %v2740 = vld [vmem:[#allocation3 + $0x51] sm:$0xff]
        %v2741 = vld [vmem:[#allocation3 + $0x61] sm:$0xff]
        %v2742 = vld [vmem:[#allocation3 + $0x71] sm:$0xff]
        %2751 = vrot.lane.b32.xlu0 %v2735, 16
        %v2752 = vpop.permute.xlu0 %2751
        %2753 = vrot.lane.b32.xlu0 %v2736, 16
        %v2754 = vpop.permute.xlu0 %2753
        %2755 = vrot.lane.b32.xlu0 %v2737, 16
        %v2756 = vpop.permute.xlu0 %2755
        %2757 = vrot.lane.b32.xlu0 %v2738, 16
        %v2758 = vpop.permute.xlu0 %2757
        %2759 = vrot.lane.b32.xlu0 %v2739, 16
        %v2760 = vpop.permute.xlu0 %2759
        %2761 = vrot.lane.b32.xlu0 %v2740, 16
        %v2762 = vpop.permute.xlu0 %2761
        %2763 = vrot.lane.b32.xlu0 %v2741, 16
        %v2764 = vpop.permute.xlu0 %2763
        %2765 = vrot.lane.b32.xlu0 %v2742, 16
        %v2766 = vpop.permute.xlu0 %2765
        %vm2775 = vcmask 261248
        %2776 = vst.msk [vmem:[#allocation4] sm:$0xff] %vm2775, %v2752
        %2777 = vst.msk [vmem:[#allocation4 + $0x10] sm:$0xff] %vm2775, %v2754
        %2778 = vst.msk [vmem:[#allocation4 + $0x20] sm:$0xff] %vm2775, %v2756
        %2779 = vst.msk [vmem:[#allocation4 + $0x30] sm:$0xff] %vm2775, %v2758
        %2780 = vst.msk [vmem:[#allocation4 + $0x40] sm:$0xff] %vm2775, %v2760
        %2781 = vst.msk [vmem:[#allocation4 + $0x50] sm:$0xff] %vm2775, %v2762
        %2782 = vst.msk [vmem:[#allocation4 + $0x60] sm:$0xff] %vm2775, %v2764
        %2783 = vst.msk [vmem:[#allocation4 + $0x70] sm:$0xff] %vm2775, %v2766
        %v2784 = vld [vmem:[#allocation3 + $0x2] sm:$0xff]
        %v2785 = vld [vmem:[#allocation3 + $0x12] sm:$0xff]
        %v2786 = vld [vmem:[#allocation3 + $0x22] sm:$0xff]
        %v2787 = vld [vmem:[#allocation3 + $0x32] sm:$0xff]
        %v2788 = vld [vmem:[#allocation3 + $0x42] sm:$0xff]
        %v2789 = vld [vmem:[#allocation3 + $0x52] sm:$0xff]
        %v2790 = vld [vmem:[#allocation3 + $0x62] sm:$0xff]
        %v2791 = vld [vmem:[#allocation3 + $0x72] sm:$0xff]
        %2800 = vrot.lane.b32.xlu0 %v2784, 32
        %v2801 = vpop.permute.xlu0 %2800
        %2802 = vrot.lane.b32.xlu0 %v2785, 32
        %v2803 = vpop.permute.xlu0 %2802
        %2804 = vrot.lane.b32.xlu0 %v2786, 32
        %v2805 = vpop.permute.xlu0 %2804
        %2806 = vrot.lane.b32.xlu0 %v2787, 32
        %v2807 = vpop.permute.xlu0 %2806
        %2808 = vrot.lane.b32.xlu0 %v2788, 32
        %v2809 = vpop.permute.xlu0 %2808
        %2810 = vrot.lane.b32.xlu0 %v2789, 32
        %v2811 = vpop.permute.xlu0 %2810
        %2812 = vrot.lane.b32.xlu0 %v2790, 32
        %v2813 = vpop.permute.xlu0 %2812
        %2814 = vrot.lane.b32.xlu0 %v2791, 32
        %v2815 = vpop.permute.xlu0 %2814
        %vm2824 = vcmask 392448
        %2825 = vst.msk [vmem:[#allocation4] sm:$0xff] %vm2824, %v2801
        %2826 = vst.msk [vmem:[#allocation4 + $0x10] sm:$0xff] %vm2824, %v2803
        %2827 = vst.msk [vmem:[#allocation4 + $0x20] sm:$0xff] %vm2824, %v2805
        %2828 = vst.msk [vmem:[#allocation4 + $0x30] sm:$0xff] %vm2824, %v2807
        %2829 = vst.msk [vmem:[#allocation4 + $0x40] sm:$0xff] %vm2824, %v2809
        %2830 = vst.msk [vmem:[#allocation4 + $0x50] sm:$0xff] %vm2824, %v2811
        %2831 = vst.msk [vmem:[#allocation4 + $0x60] sm:$0xff] %vm2824, %v2813
        %2832 = vst.msk [vmem:[#allocation4 + $0x70] sm:$0xff] %vm2824, %v2815
        %v2833 = vld [vmem:[%s2618] sm:$0xff]
        %v2834 = vld [vmem:[%s2618 + $0x10] sm:$0xff]
        %v2835 = vld [vmem:[%s2618 + $0x20] sm:$0xff]
        %v2836 = vld [vmem:[%s2618 + $0x30] sm:$0xff]
        %v2837 = vld [vmem:[%s2618 + $0x40] sm:$0xff]
        %v2838 = vld [vmem:[%s2618 + $0x50] sm:$0xff]
        %v2839 = vld [vmem:[%s2618 + $0x60] sm:$0xff]
        %v2840 = vld [vmem:[%s2618 + $0x70] sm:$0xff]
        %2849 = vrot.lane.b32.xlu0 %v2833, 48
        %v2850 = vpop.permute.xlu0 %2849
        %2851 = vrot.lane.b32.xlu0 %v2834, 48
        %v2852 = vpop.permute.xlu0 %2851
        %2853 = vrot.lane.b32.xlu0 %v2835, 48
        %v2854 = vpop.permute.xlu0 %2853
        %2855 = vrot.lane.b32.xlu0 %v2836, 48
        %v2856 = vpop.permute.xlu0 %2855
        %2857 = vrot.lane.b32.xlu0 %v2837, 48
        %v2858 = vpop.permute.xlu0 %2857
        %2859 = vrot.lane.b32.xlu0 %v2838, 48
        %v2860 = vpop.permute.xlu0 %2859
        %2861 = vrot.lane.b32.xlu0 %v2839, 48
        %v2862 = vpop.permute.xlu0 %2861
        %2863 = vrot.lane.b32.xlu0 %v2840, 48
        %v2864 = vpop.permute.xlu0 %2863
        %vm2873 = vcmask 523648
        %2874 = vst.msk [vmem:[#allocation4] sm:$0xff] %vm2873, %v2850
        %2875 = vst.msk [vmem:[#allocation4 + $0x10] sm:$0xff] %vm2873, %v2852
        %2876 = vst.msk [vmem:[#allocation4 + $0x20] sm:$0xff] %vm2873, %v2854
        %2877 = vst.msk [vmem:[#allocation4 + $0x30] sm:$0xff] %vm2873, %v2856
        %2878 = vst.msk [vmem:[#allocation4 + $0x40] sm:$0xff] %vm2873, %v2858
        %2879 = vst.msk [vmem:[#allocation4 + $0x50] sm:$0xff] %vm2873, %v2860
        %2880 = vst.msk [vmem:[#allocation4 + $0x60] sm:$0xff] %vm2873, %v2862
        %2881 = vst.msk [vmem:[#allocation4 + $0x70] sm:$0xff] %vm2873, %v2864
        %v2882 = vld [vmem:[%s2618 + $0x1] sm:$0xff]
        %v2883 = vld [vmem:[%s2618 + $0x11] sm:$0xff]
        %v2884 = vld [vmem:[%s2618 + $0x21] sm:$0xff]
        %v2885 = vld [vmem:[%s2618 + $0x31] sm:$0xff]
        %v2886 = vld [vmem:[%s2618 + $0x41] sm:$0xff]
        %v2887 = vld [vmem:[%s2618 + $0x51] sm:$0xff]
        %v2888 = vld [vmem:[%s2618 + $0x61] sm:$0xff]
        %v2889 = vld [vmem:[%s2618 + $0x71] sm:$0xff]
        %2898 = vrot.lane.b32.xlu0 %v2882, 64
        %v2899 = vpop.permute.xlu0 %2898
        %2900 = vrot.lane.b32.xlu0 %v2883, 64
        %v2901 = vpop.permute.xlu0 %2900
        %2902 = vrot.lane.b32.xlu0 %v2884, 64
        %v2903 = vpop.permute.xlu0 %2902
        %2904 = vrot.lane.b32.xlu0 %v2885, 64
        %v2905 = vpop.permute.xlu0 %2904
        %2906 = vrot.lane.b32.xlu0 %v2886, 64
        %v2907 = vpop.permute.xlu0 %2906
        %2908 = vrot.lane.b32.xlu0 %v2887, 64
        %v2909 = vpop.permute.xlu0 %2908
        %2910 = vrot.lane.b32.xlu0 %v2888, 64
        %v2911 = vpop.permute.xlu0 %2910
        %2912 = vrot.lane.b32.xlu0 %v2889, 64
        %v2913 = vpop.permute.xlu0 %2912
        %vm2922 = vcmask 654848
        %2923 = vst.msk [vmem:[#allocation4] sm:$0xff] %vm2922, %v2899
        %2924 = vst.msk [vmem:[#allocation4 + $0x10] sm:$0xff] %vm2922, %v2901
        %2925 = vst.msk [vmem:[#allocation4 + $0x20] sm:$0xff] %vm2922, %v2903
        %2926 = vst.msk [vmem:[#allocation4 + $0x30] sm:$0xff] %vm2922, %v2905
        %2927 = vst.msk [vmem:[#allocation4 + $0x40] sm:$0xff] %vm2922, %v2907
        %2928 = vst.msk [vmem:[#allocation4 + $0x50] sm:$0xff] %vm2922, %v2909
        %2929 = vst.msk [vmem:[#allocation4 + $0x60] sm:$0xff] %vm2922, %v2911
        %2930 = vst.msk [vmem:[#allocation4 + $0x70] sm:$0xff] %vm2922, %v2913
        %v2931 = vld [vmem:[%s2618 + $0x2] sm:$0xff]
        %v2932 = vld [vmem:[%s2618 + $0x12] sm:$0xff]
        %v2933 = vld [vmem:[%s2618 + $0x22] sm:$0xff]
        %v2934 = vld [vmem:[%s2618 + $0x32] sm:$0xff]
        %v2935 = vld [vmem:[%s2618 + $0x42] sm:$0xff]
        %v2936 = vld [vmem:[%s2618 + $0x52] sm:$0xff]
        %v2937 = vld [vmem:[%s2618 + $0x62] sm:$0xff]
        %v2938 = vld [vmem:[%s2618 + $0x72] sm:$0xff]
        %2947 = vrot.lane.b32.xlu0 %v2931, 80
        %v2948 = vpop.permute.xlu0 %2947
        %2949 = vrot.lane.b32.xlu0 %v2932, 80
        %v2950 = vpop.permute.xlu0 %2949
        %2951 = vrot.lane.b32.xlu0 %v2933, 80
        %v2952 = vpop.permute.xlu0 %2951
        %2953 = vrot.lane.b32.xlu0 %v2934, 80
        %v2954 = vpop.permute.xlu0 %2953
        %2955 = vrot.lane.b32.xlu0 %v2935, 80
        %v2956 = vpop.permute.xlu0 %2955
        %2957 = vrot.lane.b32.xlu0 %v2936, 80
        %v2958 = vpop.permute.xlu0 %2957
        %2959 = vrot.lane.b32.xlu0 %v2937, 80
        %v2960 = vpop.permute.xlu0 %2959
        %2961 = vrot.lane.b32.xlu0 %v2938, 80
        %v2962 = vpop.permute.xlu0 %2961
        %vm2971 = vcmask 786048
        %2972 = vst.msk [vmem:[#allocation4] sm:$0xff] %vm2971, %v2948
        %2973 = vst.msk [vmem:[#allocation4 + $0x10] sm:$0xff] %vm2971, %v2950
        %2974 = vst.msk [vmem:[#allocation4 + $0x20] sm:$0xff] %vm2971, %v2952
        %2975 = vst.msk [vmem:[#allocation4 + $0x30] sm:$0xff] %vm2971, %v2954
        %2976 = vst.msk [vmem:[#allocation4 + $0x40] sm:$0xff] %vm2971, %v2956
        %2977 = vst.msk [vmem:[#allocation4 + $0x50] sm:$0xff] %vm2971, %v2958
        %2978 = vst.msk [vmem:[#allocation4 + $0x60] sm:$0xff] %vm2971, %v2960
        %2979 = vst.msk [vmem:[#allocation4 + $0x70] sm:$0xff] %vm2971, %v2962
        %s2980 = scalar_lea.vmem [#allocation3], 32
        %v2981 = vld [vmem:[%s2980] sm:$0xff]
        %v2982 = vld [vmem:[%s2980 + $0x10] sm:$0xff]
        %v2983 = vld [vmem:[%s2980 + $0x20] sm:$0xff]
        %v2984 = vld [vmem:[%s2980 + $0x30] sm:$0xff]
        %v2985 = vld [vmem:[%s2980 + $0x40] sm:$0xff]
        %v2986 = vld [vmem:[%s2980 + $0x50] sm:$0xff]
        %v2987 = vld [vmem:[%s2980 + $0x60] sm:$0xff]
        %v2988 = vld [vmem:[%s2980 + $0x70] sm:$0xff]
        %2997 = vrot.lane.b32.xlu0 %v2981, 96
        %v2998 = vpop.permute.xlu0 %2997
        %2999 = vrot.lane.b32.xlu0 %v2982, 96
        %v3000 = vpop.permute.xlu0 %2999
        %3001 = vrot.lane.b32.xlu0 %v2983, 96
        %v3002 = vpop.permute.xlu0 %3001
        %3003 = vrot.lane.b32.xlu0 %v2984, 96
        %v3004 = vpop.permute.xlu0 %3003
        %3005 = vrot.lane.b32.xlu0 %v2985, 96
        %v3006 = vpop.permute.xlu0 %3005
        %3007 = vrot.lane.b32.xlu0 %v2986, 96
        %v3008 = vpop.permute.xlu0 %3007
        %3009 = vrot.lane.b32.xlu0 %v2987, 96
        %v3010 = vpop.permute.xlu0 %3009
        %3011 = vrot.lane.b32.xlu0 %v2988, 96
        %v3012 = vpop.permute.xlu0 %3011
        %vm3021 = vcmask 917248
        %3022 = vst.msk [vmem:[#allocation4] sm:$0xff] %vm3021, %v2998
        %3023 = vst.msk [vmem:[#allocation4 + $0x10] sm:$0xff] %vm3021, %v3000
        %3024 = vst.msk [vmem:[#allocation4 + $0x20] sm:$0xff] %vm3021, %v3002
        %3025 = vst.msk [vmem:[#allocation4 + $0x30] sm:$0xff] %vm3021, %v3004
        %3026 = vst.msk [vmem:[#allocation4 + $0x40] sm:$0xff] %vm3021, %v3006
        %3027 = vst.msk [vmem:[#allocation4 + $0x50] sm:$0xff] %vm3021, %v3008
        %3028 = vst.msk [vmem:[#allocation4 + $0x60] sm:$0xff] %vm3021, %v3010
        %3029 = vst.msk [vmem:[#allocation4 + $0x70] sm:$0xff] %vm3021, %v3012
        %v3030 = vld [vmem:[%s2980 + $0x1] sm:$0xff]
        %v3031 = vld [vmem:[%s2980 + $0x11] sm:$0xff]
        %v3032 = vld [vmem:[%s2980 + $0x21] sm:$0xff]
        %v3033 = vld [vmem:[%s2980 + $0x31] sm:$0xff]
        %v3034 = vld [vmem:[%s2980 + $0x41] sm:$0xff]
        %v3035 = vld [vmem:[%s2980 + $0x51] sm:$0xff]
        %v3036 = vld [vmem:[%s2980 + $0x61] sm:$0xff]
        %v3037 = vld [vmem:[%s2980 + $0x71] sm:$0xff]
        %3046 = vrot.lane.b32.xlu0 %v3030, 112
        %v3047 = vpop.permute.xlu0 %3046
        %3048 = vrot.lane.b32.xlu0 %v3031, 112
        %v3049 = vpop.permute.xlu0 %3048
        %3050 = vrot.lane.b32.xlu0 %v3032, 112
        %v3051 = vpop.permute.xlu0 %3050
        %3052 = vrot.lane.b32.xlu0 %v3033, 112
        %v3053 = vpop.permute.xlu0 %3052
        %3054 = vrot.lane.b32.xlu0 %v3034, 112
        %v3055 = vpop.permute.xlu0 %3054
        %3056 = vrot.lane.b32.xlu0 %v3035, 112
        %v3057 = vpop.permute.xlu0 %3056
        %3058 = vrot.lane.b32.xlu0 %v3036, 112
        %v3059 = vpop.permute.xlu0 %3058
        %3060 = vrot.lane.b32.xlu0 %v3037, 112
        %v3061 = vpop.permute.xlu0 %3060
        %vm3070 = vcmask 1048448
        %3071 = vst.msk [vmem:[#allocation4] sm:$0xff] %vm3070, %v3047
        %3072 = vst.msk [vmem:[#allocation4 + $0x10] sm:$0xff] %vm3070, %v3049
        %3073 = vst.msk [vmem:[#allocation4 + $0x20] sm:$0xff] %vm3070, %v3051
        %3074 = vst.msk [vmem:[#allocation4 + $0x30] sm:$0xff] %vm3070, %v3053
        %3075 = vst.msk [vmem:[#allocation4 + $0x40] sm:$0xff] %vm3070, %v3055
        %3076 = vst.msk [vmem:[#allocation4 + $0x50] sm:$0xff] %vm3070, %v3057
        %3077 = vst.msk [vmem:[#allocation4 + $0x60] sm:$0xff] %vm3070, %v3059
        %3078 = vst.msk [vmem:[#allocation4 + $0x70] sm:$0xff] %vm3070, %v3061
        %v3079 = vld [vmem:[%s2980 + $0x2] sm:$0xff]
        %v3080 = vld [vmem:[%s2980 + $0x12] sm:$0xff]
        %v3081 = vld [vmem:[%s2980 + $0x22] sm:$0xff]
        %v3082 = vld [vmem:[%s2980 + $0x32] sm:$0xff]
        %v3083 = vld [vmem:[%s2980 + $0x42] sm:$0xff]
        %v3084 = vld [vmem:[%s2980 + $0x52] sm:$0xff]
        %v3085 = vld [vmem:[%s2980 + $0x62] sm:$0xff]
        %v3086 = vld [vmem:[%s2980 + $0x72] sm:$0xff]
        %3087 = vst.msk [vmem:[#allocation4 + $0x8] sm:$0xff] %vm2548, %v3079
        %3088 = vst.msk [vmem:[#allocation4 + $0x18] sm:$0xff] %vm2548, %v3080
        %3089 = vst.msk [vmem:[#allocation4 + $0x28] sm:$0xff] %vm2548, %v3081
        %3090 = vst.msk [vmem:[#allocation4 + $0x38] sm:$0xff] %vm2548, %v3082
        %3091 = vst.msk [vmem:[#allocation4 + $0x48] sm:$0xff] %vm2548, %v3083
        %3092 = vst.msk [vmem:[#allocation4 + $0x58] sm:$0xff] %vm2548, %v3084
        %3093 = vst.msk [vmem:[#allocation4 + $0x68] sm:$0xff] %vm2548, %v3085
        %3094 = vst.msk [vmem:[#allocation4 + $0x78] sm:$0xff] %vm2548, %v3086
        %v3095 = vld [vmem:[#allocation4] sm:$0xff]
        %v3096 = vld [vmem:[#allocation4 + $0x8] sm:$0xff]
        %v3097 = vld [vmem:[#allocation4 + $0x10] sm:$0xff]
        %v3098 = vld [vmem:[#allocation4 + $0x18] sm:$0xff]
        %v3099 = vld [vmem:[#allocation4 + $0x20] sm:$0xff]
        %v3100 = vld [vmem:[#allocation4 + $0x28] sm:$0xff]
        %v3101 = vld [vmem:[#allocation4 + $0x30] sm:$0xff]
        %v3102 = vld [vmem:[#allocation4 + $0x38] sm:$0xff]
        %v3103 = vld [vmem:[#allocation4 + $0x40] sm:$0xff]
        %v3104 = vld [vmem:[#allocation4 + $0x48] sm:$0xff]
        %v3105 = vld [vmem:[#allocation4 + $0x50] sm:$0xff]
        %v3106 = vld [vmem:[#allocation4 + $0x58] sm:$0xff]
        %v3107 = vld [vmem:[#allocation4 + $0x60] sm:$0xff]
        %v3108 = vld [vmem:[#allocation4 + $0x68] sm:$0xff]
        %v3109 = vld [vmem:[#allocation4 + $0x70] sm:$0xff]
        %v3110 = vld [vmem:[#allocation4 + $0x78] sm:$0xff]
        %v3111 = vld [vmem:[%s4] sm:$0xff]
        %v3112 = vld [vmem:[%s4 + $0x8] sm:$0xff]
        %v3113 = vld [vmem:[%s4 + $0x10] sm:$0xff]
        %v3114 = vld [vmem:[%s4 + $0x18] sm:$0xff]
        %v3115 = vld [vmem:[%s4 + $0x20] sm:$0xff]
        %v3116 = vld [vmem:[%s4 + $0x28] sm:$0xff]
        %v3117 = vld [vmem:[%s4 + $0x30] sm:$0xff]
        %v3118 = vld [vmem:[%s4 + $0x38] sm:$0xff]
        %v3119 = vld [vmem:[%s4 + $0x40] sm:$0xff]
        %v3120 = vld [vmem:[%s4 + $0x48] sm:$0xff]
        %v3121 = vld [vmem:[%s4 + $0x50] sm:$0xff]
        %v3122 = vld [vmem:[%s4 + $0x58] sm:$0xff]
        %v3123 = vld [vmem:[%s4 + $0x60] sm:$0xff]
        %v3124 = vld [vmem:[%s4 + $0x68] sm:$0xff]
        %v3125 = vld [vmem:[%s4 + $0x70] sm:$0xff]
        %v3126 = vld [vmem:[%s4 + $0x78] sm:$0xff]
        %v3127 = vld [vmem:[%s4 + $0x80] sm:$0xff]
        %v3128 = vld [vmem:[%s4 + $0x88] sm:$0xff]
        %v3130 = vsel %vm2548, %v3096, 0
        %v3133 = vsel %vm2548, %v3098, 0
        %v3136 = vsel %vm2548, %v3100, 0
        %v3139 = vsel %vm2548, %v3102, 0
        %v3142 = vsel %vm2548, %v3104, 0
        %v3145 = vsel %vm2548, %v3106, 0
        %v3148 = vsel %vm2548, %v3108, 0
        %v3151 = vsel %vm2548, %v3110, 0
        %3153 = vmatprep.subr.mxu0 0.0
        %3154 = vmatpush1.msra.mxu0 %v3111
        %3155 = vmatprep.subr.mxu0 0.0
        %3156 = vmatpush1.msra.mxu0 %v3112
        %3157 = vmatprep.subr.mxu0 0.0
        %3158 = vmatpush1.msra.mxu0 %v3113
        %3159 = vmatprep.subr.mxu0 0.0
        %3160 = vmatpush1.msra.mxu0 %v3114
        %3161 = vmatprep.subr.mxu0 0.0
        %3162 = vmatpush1.msra.mxu0 %v3115
        %3163 = vmatprep.subr.mxu0 0.0
        %3164 = vmatpush1.msra.mxu0 %v3116
        %3165 = vmatprep.subr.mxu0 0.0
        %3166 = vmatpush1.msra.mxu0 %v3117
        %3167 = vmatprep.subr.mxu0 0.0
        %3168 = vmatpush1.msra.mxu0 %v3118
        %3169 = vmatprep.subr.mxu0 0.0
        %3170 = vmatpush1.msra.mxu0 %v3119
        %3171 = vmatprep.subr.mxu0 0.0
        %3172 = vmatpush1.msra.mxu0 %v3120
        %3173 = vmatprep.subr.mxu0 0.0
        %3174 = vmatpush1.msra.mxu0 %v3121
        %3175 = vmatprep.subr.mxu0 0.0
        %3176 = vmatpush1.msra.mxu0 %v3122
        %3177 = vmatprep.subr.mxu0 0.0
        %3178 = vmatpush1.msra.mxu0 %v3123
        %3179 = vmatprep.subr.mxu0 0.0
        %3180 = vmatpush1.msra.mxu0 %v3124
        %3181 = vmatprep.subr.mxu0 0.0
        %3182 = vmatpush1.msra.mxu0 %v3125
        %3183 = vmatprep.subr.mxu0 0.0
        %3184 = vmatpush1.msra.mxu0 %v3126
        %3185 = vmatprep.subr.mxu0 0.0
        %3186 = vmatpush1.msra.mxu0 %v3127
        %3187 = vmatprep.subr.mxu0 0.0
        %3188 = vmatpush1.msra.mxu0 %v3128
        %3189 = vmatprep.subr.mxu0 0.0
        %3190 = vmatpush1.msra.mxu0 0.0
        %3191 = vmatprep.subr.mxu0 0.0
        %3192 = vmatpush1.msra.mxu0 0.0
        %3193 = vmatprep.subr.mxu0 0.0
        %3194 = vmatpush1.msra.mxu0 0.0
        %3195 = vmatprep.subr.mxu0 0.0
        %3196 = vmatpush1.msra.mxu0 0.0
        %3197 = vmatprep.subr.mxu0 0.0
        %3198 = vmatpush1.msra.mxu0 0.0
        %3199 = vmatprep.subr.mxu0 0.0
        %3200 = vmatpush1.msra.mxu0 0.0
        %3201 = vmatprep.subr.mxu0 0.0
        %3202 = vmatpush1.msra.mxu0 0.0
        %3203 = vmatprep.subr.mxu0 0.0
        %3204 = vmatpush1.msra.mxu0 0.0
        %3205 = vmatprep.subr.mxu0 0.0
        %3206 = vmatpush1.msra.mxu0 0.0
        %3207 = vmatprep.subr.mxu0 0.0
        %3208 = vmatpush1.msra.mxu0 0.0
        %3209 = vmatprep.subr.mxu0 0.0
        %3210 = vmatpush1.msra.mxu0 0.0
        %3211 = vmatprep.subr.mxu0 0.0
        %3212 = vmatpush1.msra.mxu0 0.0
        %3213 = vmatprep.subr.mxu0 0.0
        %3214 = vmatpush1.msra.mxu0 0.0
        %3215 = vmatprep.subr.mxu0 0.0
        %3216 = vmatpush1.msra.mxu0 0.0
        %3217 = vmatprep.mubr.f32.mxu0 %v3130
        %3218 = vmatmul.mubr.f32.gmra.mrb[0].mxu0 %v3095
        %v3219 = vpop.f32.mrb[0].mxu0
        %v3220 = vadd.f32 0.0, %v3219
        %v3221 = vpop.f32.mrb[0].mxu0
        %3222 = vmatprep.mubr.f32.mxu0 %v3133
        %3223 = vmatmul.mubr.f32.gmra.mrb[0].mxu0 %v3097
        %v3224 = vpop.f32.mrb[0].mxu0
        %v3225 = vadd.f32 0.0, %v3224
        %v3226 = vpop.f32.mrb[0].mxu0
        %3227 = vmatprep.mubr.f32.mxu0 %v3136
        %3228 = vmatmul.mubr.f32.gmra.mrb[0].mxu0 %v3099
        %v3229 = vpop.f32.mrb[0].mxu0
        %v3230 = vadd.f32 0.0, %v3229
        %v3231 = vpop.f32.mrb[0].mxu0
        %3232 = vmatprep.mubr.f32.mxu0 %v3139
        %3233 = vmatmul.mubr.f32.gmra.mrb[0].mxu0 %v3101
        %v3234 = vpop.f32.mrb[0].mxu0
        %v3235 = vadd.f32 0.0, %v3234
        %v3236 = vpop.f32.mrb[0].mxu0
        %3237 = vmatprep.mubr.f32.mxu0 %v3142
        %3238 = vmatmul.mubr.f32.gmra.mrb[0].mxu0 %v3103
        %v3239 = vpop.f32.mrb[0].mxu0
        %v3240 = vadd.f32 0.0, %v3239
        %v3241 = vpop.f32.mrb[0].mxu0
        %3242 = vmatprep.mubr.f32.mxu0 %v3145
        %3243 = vmatmul.mubr.f32.gmra.mrb[0].mxu0 %v3105
        %v3244 = vpop.f32.mrb[0].mxu0
        %v3245 = vadd.f32 0.0, %v3244
        %v3246 = vpop.f32.mrb[0].mxu0
        %3247 = vmatprep.mubr.f32.mxu0 %v3148
        %3248 = vmatmul.mubr.f32.gmra.mrb[0].mxu0 %v3107
        %v3249 = vpop.f32.mrb[0].mxu0
        %v3250 = vadd.f32 0.0, %v3249
        %v3251 = vpop.f32.mrb[0].mxu0
        %3252 = vmatprep.mubr.f32.mxu0 %v3151
        %3253 = vmatmul.mubr.f32.gmra.mrb[0].mxu0 %v3109
        %v3254 = vpop.f32.mrb[0].mxu0
        %v3255 = vadd.f32 0.0, %v3254
        %v3256 = vpop.f32.mrb[0].mxu0
        %3257 = vdwg.mxu0
        %v3258 = vld [vmem:[%s5] sm:$0x1]
        %v3260 = vlaneseq
        %v3261 = vshrl.u32 %v3260, 7
        %v3262 = vsub.s32 0, %v3261
        %v3263 = vrot.slane %v3258, %v3262
        %v3265 = vmul.f32 %v3220, %v3263
        %v3266 = vmul.f32 %v3225, %v3263
        %v3267 = vmul.f32 %v3230, %v3263
        %v3268 = vmul.f32 %v3235, %v3263
        %v3269 = vmul.f32 %v3240, %v3263
        %v3270 = vmul.f32 %v3245, %v3263
        %v3271 = vmul.f32 %v3250, %v3263
        %v3272 = vmul.f32 %v3255, %v3263
        %v3273 = vld [vmem:[%s6] sm:$0x1]
        %v3275 = vlaneseq
        %v3276 = vshrl.u32 %v3275, 7
        %v3277 = vsub.s32 0, %v3276
        %v3278 = vrot.slane %v3273, %v3277
        %v3280 = vadd.f32 %v3265, %v3278
        %v3281 = vadd.f32 %v3266, %v3278
        %v3282 = vadd.f32 %v3267, %v3278
        %v3283 = vadd.f32 %v3268, %v3278
        %v3284 = vadd.f32 %v3269, %v3278
        %v3285 = vadd.f32 %v3270, %v3278
        %v3286 = vadd.f32 %v3271, %v3278
        %v3287 = vadd.f32 %v3272, %v3278
        %v3288 = vmax.f32 %v3280, 0.0
        %v3289 = vmax.f32 %v3281, 0.0
        %v3290 = vmax.f32 %v3282, 0.0
        %v3291 = vmax.f32 %v3283, 0.0
        %v3292 = vmax.f32 %v3284, 0.0
        %v3293 = vmax.f32 %v3285, 0.0
        %v3294 = vmax.f32 %v3286, 0.0
        %v3295 = vmax.f32 %v3287, 0.0
        %vm3296 = vcmask 259072
        %3297 = vst.msk [vmem:[#allocation5] sm:$0x3f] %vm3296, 0.0
        %3298 = vst.msk [vmem:[#allocation5 + $0x8] sm:$0x3f] %vm3296, 0.0
        %3299 = vst.msk [vmem:[#allocation5 + $0x10] sm:$0x3f] %vm3296, 0.0
        %3300 = vst.msk [vmem:[#allocation5 + $0x18] sm:$0x3f] %vm3296, 0.0
        %3301 = vst.msk [vmem:[#allocation5 + $0x20] sm:$0x3f] %vm3296, 0.0
        %3302 = vst.msk [vmem:[#allocation5 + $0x28] sm:$0x3f] %vm3296, 0.0
        %v3303 = vmax.f32 %v3288, %v3289
        %v3304 = vmax.f32 %v3290, %v3291
        %v3305 = vmax.f32 %v3292, %v3293
        %v3306 = vmax.f32 %v3294, %v3295
        %v3311 = vrot.slane %v3303, 1
        %v3312 = vrot.slane %v3304, 1
        %v3313 = vrot.slane %v3305, 1
        %v3314 = vrot.slane %v3306, 1
        %v3319 = vmax.f32 %v3303, %v3311
        %v3320 = vmax.f32 %v3304, %v3312
        %v3321 = vmax.f32 %v3305, %v3313
        %v3322 = vmax.f32 %v3306, %v3314
        %s3323 = scalar_lea.vmem [#allocation5], 8
        %vm3324 = vcmask 253952
        %3325 = vst.msk [vmem:[%s3323 + $0x1] sm:$0x1] %vm3324, %v3319
        %3326 = vst.msk [vmem:[%s3323 + $0x9] sm:$0x1] %vm3324, %v3320
        %3327 = vst.msk [vmem:[%s3323 + $0x11] sm:$0x1] %vm3324, %v3321
        %3328 = vst.msk [vmem:[%s3323 + $0x19] sm:$0x1] %vm3324, %v3322
        %vm3329 = vcmask 256002
        %3330 = vst.msk [vmem:[%s3323] sm:$0x4] %vm3329, %v3319
        %3331 = vst.msk [vmem:[%s3323 + $0x8] sm:$0x4] %vm3329, %v3320
        %3332 = vst.msk [vmem:[%s3323 + $0x10] sm:$0x4] %vm3329, %v3321
        %3333 = vst.msk [vmem:[%s3323 + $0x18] sm:$0x4] %vm3329, %v3322
        %vm3334 = vcmask 258052
        %3335 = vst.msk [vmem:[%s3323 - $0x1] sm:$0x10] %vm3334, %v3319
        %3336 = vst.msk [vmem:[%s3323 + $0x7] sm:$0x10] %vm3334, %v3320
        %3337 = vst.msk [vmem:[%s3323 + $0xf] sm:$0x10] %vm3334, %v3321
        %3338 = vst.msk [vmem:[%s3323 + $0x17] sm:$0x10] %vm3334, %v3322
        %vm3339 = vcmask 260102
        %3340 = vst.msk [vmem:[%s3323 - $0x2] sm:$0x40] %vm3339, %v3319
        %3341 = vst.msk [vmem:[%s3323 + $0x6] sm:$0x40] %vm3339, %v3320
        %3342 = vst.msk [vmem:[%s3323 + $0xe] sm:$0x40] %vm3339, %v3321
        %3343 = vst.msk [vmem:[%s3323 + $0x16] sm:$0x40] %vm3339, %v3322
        %v3344 = vld [vmem:[#allocation5] sm:$0xf]
        %vm3345 = vcmask 257024
        %3346 = vst.msk [vmem:[#allocation6] sm:$0xf] %vm3345, %v3344
        %v3347 = vld [vmem:[%s3323] sm:$0xf]
        %v3349 = vrot.slane %v3347, 4
        %vm3351 = vcmask 261124
        %3352 = vst.msk [vmem:[#allocation6] sm:$0xf0] %vm3351, %v3349
        %s3353 = scalar_lea.vmem [#allocation5], 16
        %v3354 = vld [vmem:[%s3353] sm:$0xf]
        %3355 = vst.msk [vmem:[#allocation6 + $0x18] sm:$0xf] %vm3345, %v3354
        %s3356 = scalar_lea.vmem [#allocation5], 24
        %v3357 = vld [vmem:[%s3356] sm:$0xf]
        %v3359 = vrot.slane %v3357, 4
        %3361 = vst.msk [vmem:[#allocation6 + $0x18] sm:$0xf0] %vm3351, %v3359
        %v3362 = vld [vmem:[#allocation5 + $0x1] sm:$0xf]
        %3364 = vrot.lane.b32.xlu0 %v3362, 32
        %v3365 = vpop.permute.xlu0 %3364
        %vm3367 = vcmask 519424
        %3368 = vst.msk [vmem:[#allocation6] sm:$0xf] %vm3367, %v3365
        %v3369 = vld [vmem:[%s3323 + $0x1] sm:$0xf]
        %v3371 = vrot.slane %v3369, 4
        %3372 = vrot.lane.b32.xlu0 %v3371, 32
        %v3373 = vpop.permute.xlu0 %3372
        %vm3375 = vcmask 523524
        %3376 = vst.msk [vmem:[#allocation6] sm:$0xf0] %vm3375, %v3373
        %v3377 = vld [vmem:[%s3353 + $0x1] sm:$0xf]
        %3379 = vrot.lane.b32.xlu0 %v3377, 32
        %v3380 = vpop.permute.xlu0 %3379
        %3382 = vst.msk [vmem:[#allocation6 + $0x18] sm:$0xf] %vm3367, %v3380
        %v3383 = vld [vmem:[%s3356 + $0x1] sm:$0xf]
        %v3385 = vrot.slane %v3383, 4
        %3386 = vrot.lane.b32.xlu0 %v3385, 32
        %v3387 = vpop.permute.xlu0 %3386
        %3389 = vst.msk [vmem:[#allocation6 + $0x18] sm:$0xf0] %vm3375, %v3387
        %v3390 = vld [vmem:[#allocation5 + $0x2] sm:$0xf]
        %3392 = vrot.lane.b32.xlu0 %v3390, 64
        %v3393 = vpop.permute.xlu0 %3392
        %vm3395 = vcmask 781824
        %3396 = vst.msk [vmem:[#allocation6] sm:$0xf] %vm3395, %v3393
        %v3397 = vld [vmem:[%s3323 + $0x2] sm:$0xf]
        %v3399 = vrot.slane %v3397, 4
        %3400 = vrot.lane.b32.xlu0 %v3399, 64
        %v3401 = vpop.permute.xlu0 %3400
        %vm3403 = vcmask 785924
        %3404 = vst.msk [vmem:[#allocation6] sm:$0xf0] %vm3403, %v3401
        %v3405 = vld [vmem:[%s3353 + $0x2] sm:$0xf]
        %3407 = vrot.lane.b32.xlu0 %v3405, 64
        %v3408 = vpop.permute.xlu0 %3407
        %3410 = vst.msk [vmem:[#allocation6 + $0x18] sm:$0xf] %vm3395, %v3408
        %v3411 = vld [vmem:[%s3356 + $0x2] sm:$0xf]
        %v3413 = vrot.slane %v3411, 4
        %3414 = vrot.lane.b32.xlu0 %v3413, 64
        %v3415 = vpop.permute.xlu0 %3414
        %3417 = vst.msk [vmem:[#allocation6 + $0x18] sm:$0xf0] %vm3403, %v3415
        %v3418 = vld [vmem:[%s3323] sm:$0xf]
        %3420 = vrot.lane.b32.xlu0 %v3418, 96
        %v3421 = vpop.permute.xlu0 %3420
        %vm3423 = vcmask 1044224
        %3424 = vst.msk [vmem:[#allocation6] sm:$0xf] %vm3423, %v3421
        %v3425 = vld [vmem:[%s3353] sm:$0xf]
        %v3427 = vrot.slane %v3425, 4
        %3428 = vrot.lane.b32.xlu0 %v3427, 96
        %v3429 = vpop.permute.xlu0 %3428
        %vm3431 = vcmask 1048324
        %3432 = vst.msk [vmem:[#allocation6] sm:$0xf0] %vm3431, %v3429
        %v3433 = vld [vmem:[%s3356] sm:$0xf]
        %3435 = vrot.lane.b32.xlu0 %v3433, 96
        %v3436 = vpop.permute.xlu0 %3435
        %3438 = vst.msk [vmem:[#allocation6 + $0x18] sm:$0xf] %vm3423, %v3436
        %s3439 = scalar_lea.vmem [#allocation5], 32
        %v3440 = vld [vmem:[%s3439] sm:$0xf]
        %v3442 = vrot.slane %v3440, 4
        %3443 = vrot.lane.b32.xlu0 %v3442, 96
        %v3444 = vpop.permute.xlu0 %3443
        %3446 = vst.msk [vmem:[#allocation6 + $0x18] sm:$0xf0] %vm3431, %v3444
        %v3447 = vld [vmem:[%s3323 + $0x1] sm:$0xf]
        %3448 = vst.msk [vmem:[#allocation6 + $0x8] sm:$0xf] %vm3345, %v3447
        %v3449 = vld [vmem:[%s3353 + $0x1] sm:$0xf]
        %v3451 = vrot.slane %v3449, 4
        %3453 = vst.msk [vmem:[#allocation6 + $0x8] sm:$0xf0] %vm3351, %v3451
        %v3454 = vld [vmem:[%s3356 + $0x1] sm:$0xf]
        %3455 = vst.msk [vmem:[#allocation6 + $0x20] sm:$0xf] %vm3345, %v3454
        %v3456 = vld [vmem:[%s3439 + $0x1] sm:$0xf]
        %v3458 = vrot.slane %v3456, 4
        %3460 = vst.msk [vmem:[#allocation6 + $0x20] sm:$0xf0] %vm3351, %v3458
        %v3461 = vld [vmem:[%s3323 + $0x2] sm:$0xf]
        %3463 = vrot.lane.b32.xlu0 %v3461, 32
        %v3464 = vpop.permute.xlu0 %3463
        %3466 = vst.msk [vmem:[#allocation6 + $0x8] sm:$0xf] %vm3367, %v3464
        %v3467 = vld [vmem:[%s3353 + $0x2] sm:$0xf]
        %v3469 = vrot.slane %v3467, 4
        %3470 = vrot.lane.b32.xlu0 %v3469, 32
        %v3471 = vpop.permute.xlu0 %3470
        %3473 = vst.msk [vmem:[#allocation6 + $0x8] sm:$0xf0] %vm3375, %v3471
        %v3474 = vld [vmem:[%s3356 + $0x2] sm:$0xf]
        %3476 = vrot.lane.b32.xlu0 %v3474, 32
        %v3477 = vpop.permute.xlu0 %3476
        %3479 = vst.msk [vmem:[#allocation6 + $0x20] sm:$0xf] %vm3367, %v3477
        %v3480 = vld [vmem:[%s3439 + $0x2] sm:$0xf]
        %v3482 = vrot.slane %v3480, 4
        %3483 = vrot.lane.b32.xlu0 %v3482, 32
        %v3484 = vpop.permute.xlu0 %3483
        %3486 = vst.msk [vmem:[#allocation6 + $0x20] sm:$0xf0] %vm3375, %v3484
        %v3487 = vld [vmem:[%s3353] sm:$0xf]
        %3489 = vrot.lane.b32.xlu0 %v3487, 64
        %v3490 = vpop.permute.xlu0 %3489
        %3492 = vst.msk [vmem:[#allocation6 + $0x8] sm:$0xf] %vm3395, %v3490
        %v3493 = vld [vmem:[%s3356] sm:$0xf]
        %v3495 = vrot.slane %v3493, 4
        %3496 = vrot.lane.b32.xlu0 %v3495, 64
        %v3497 = vpop.permute.xlu0 %3496
        %3499 = vst.msk [vmem:[#allocation6 + $0x8] sm:$0xf0] %vm3403, %v3497
        %v3500 = vld [vmem:[%s3439] sm:$0xf]
        %3502 = vrot.lane.b32.xlu0 %v3500, 64
        %v3503 = vpop.permute.xlu0 %3502
        %3505 = vst.msk [vmem:[#allocation6 + $0x20] sm:$0xf] %vm3395, %v3503
        %s3506 = scalar_lea.vmem [#allocation5], 40
        %v3507 = vld [vmem:[%s3506] sm:$0xf]
        %v3509 = vrot.slane %v3507, 4
        %3510 = vrot.lane.b32.xlu0 %v3509, 64
        %v3511 = vpop.permute.xlu0 %3510
        %3513 = vst.msk [vmem:[#allocation6 + $0x20] sm:$0xf0] %vm3403, %v3511
        %v3514 = vld [vmem:[%s3353 + $0x1] sm:$0xf]
        %3516 = vrot.lane.b32.xlu0 %v3514, 96
        %v3517 = vpop.permute.xlu0 %3516
        %3519 = vst.msk [vmem:[#allocation6 + $0x8] sm:$0xf] %vm3423, %v3517
        %v3520 = vld [vmem:[%s3356 + $0x1] sm:$0xf]
        %v3522 = vrot.slane %v3520, 4
        %3523 = vrot.lane.b32.xlu0 %v3522, 96
        %v3524 = vpop.permute.xlu0 %3523
        %3526 = vst.msk [vmem:[#allocation6 + $0x8] sm:$0xf0] %vm3431, %v3524
        %v3527 = vld [vmem:[%s3439 + $0x1] sm:$0xf]
        %3529 = vrot.lane.b32.xlu0 %v3527, 96
        %v3530 = vpop.permute.xlu0 %3529
        %3532 = vst.msk [vmem:[#allocation6 + $0x20] sm:$0xf] %vm3423, %v3530
        %v3533 = vld [vmem:[%s3506 + $0x1] sm:$0xf]
        %v3535 = vrot.slane %v3533, 4
        %3536 = vrot.lane.b32.xlu0 %v3535, 96
        %v3537 = vpop.permute.xlu0 %3536
        %3539 = vst.msk [vmem:[#allocation6 + $0x20] sm:$0xf0] %vm3431, %v3537
        %v3540 = vld [vmem:[%s3353 + $0x2] sm:$0xf]
        %3541 = vst.msk [vmem:[#allocation6 + $0x10] sm:$0xf] %vm3345, %v3540
        %v3542 = vld [vmem:[%s3356 + $0x2] sm:$0xf]
        %v3544 = vrot.slane %v3542, 4
        %3546 = vst.msk [vmem:[#allocation6 + $0x10] sm:$0xf0] %vm3351, %v3544
        %v3547 = vld [vmem:[%s3439 + $0x2] sm:$0xf]
        %3548 = vst.msk [vmem:[#allocation6 + $0x28] sm:$0xf] %vm3345, %v3547
        %v3549 = vld [vmem:[%s3506 + $0x2] sm:$0xf]
        %v3551 = vrot.slane %v3549, 4
        %3553 = vst.msk [vmem:[#allocation6 + $0x28] sm:$0xf0] %vm3351, %v3551
        %v3554 = vld [vmem:[#allocation6] sm:$0xff]
        %v3555 = vld [vmem:[#allocation6 + $0x8] sm:$0xff]
        %v3556 = vld [vmem:[#allocation6 + $0x10] sm:$0xff]
        %v3557 = vld [vmem:[#allocation6 + $0x18] sm:$0xff]
        %v3558 = vld [vmem:[#allocation6 + $0x20] sm:$0xff]
        %v3559 = vld [vmem:[#allocation6 + $0x28] sm:$0xff]
        %v3560 = vld [vmem:[%s7] sm:$0xff]
        %v3561 = vld [vmem:[%s7 + $0x8] sm:$0xff]
        %v3562 = vld [vmem:[%s7 + $0x10] sm:$0xff]
        %v3563 = vld [vmem:[%s7 + $0x18] sm:$0xff]
        %v3564 = vld [vmem:[%s7 + $0x20] sm:$0xff]
        %v3565 = vld [vmem:[%s7 + $0x28] sm:$0xff]
        %v3566 = vld [vmem:[%s7 + $0x30] sm:$0xff]
        %v3567 = vld [vmem:[%s7 + $0x38] sm:$0xff]
        %v3568 = vld [vmem:[%s7 + $0x40] sm:$0xff]
        %v3569 = vld [vmem:[%s7 + $0x48] sm:$0xff]
        %v3570 = vld [vmem:[%s7 + $0x50] sm:$0xff]
        %v3571 = vld [vmem:[%s7 + $0x58] sm:$0xff]
        %v3572 = vld [vmem:[%s7 + $0x60] sm:$0xff]
        %v3573 = vld [vmem:[%s7 + $0x68] sm:$0xff]
        %v3574 = vld [vmem:[%s7 + $0x70] sm:$0xff]
        %v3575 = vld [vmem:[%s7 + $0x78] sm:$0xff]
        %v3576 = vld [vmem:[%s7 + $0x80] sm:$0xff]
        %v3577 = vld [vmem:[%s7 + $0x88] sm:$0xff]
        %v3578 = vld [vmem:[%s7 + $0x90] sm:$0xff]
        %v3579 = vld [vmem:[%s7 + $0x98] sm:$0xff]
        %v3580 = vld [vmem:[%s7 + $0xa0] sm:$0xff]
        %v3581 = vld [vmem:[%s7 + $0xa8] sm:$0xff]
        %v3582 = vld [vmem:[%s7 + $0xb0] sm:$0xff]
        %v3583 = vld [vmem:[%s7 + $0xb8] sm:$0xff]
        %v3584 = vld [vmem:[%s7 + $0xc0] sm:$0xff]
        %v3585 = vld [vmem:[%s7 + $0xc8] sm:$0xff]
        %v3586 = vld [vmem:[%s7 + $0xd0] sm:$0xff]
        %v3587 = vld [vmem:[%s7 + $0xd8] sm:$0xff]
        %v3588 = vld [vmem:[%s7 + $0xe0] sm:$0xff]
        %v3589 = vld [vmem:[%s7 + $0xe8] sm:$0xff]
        %v3590 = vld [vmem:[%s7 + $0xf0] sm:$0xff]
        %v3591 = vld [vmem:[%s7 + $0xf8] sm:$0xff]
        %v3592 = vld [vmem:[%s7 + $0x100] sm:$0xff]
        %v3593 = vld [vmem:[%s7 + $0x108] sm:$0xff]
        %v3594 = vld [vmem:[%s7 + $0x110] sm:$0xff]
        %v3595 = vld [vmem:[%s7 + $0x118] sm:$0xff]
        %vm3596 = vcmask 261120
        %v3598 = vsel %vm3596, %v3556, 0
        %v3601 = vsel %vm3596, %v3559, 0
        %3603 = vmatprep.subr.mxu0 0.0
        %3604 = vmatpush1.msra.mxu0 %v3560
        %3605 = vmatprep.subr.mxu0 0.0
        %3606 = vmatpush1.msra.mxu0 %v3561
        %3607 = vmatprep.subr.mxu0 0.0
        %3608 = vmatpush1.msra.mxu0 %v3562
        %3609 = vmatprep.subr.mxu0 0.0
        %3610 = vmatpush1.msra.mxu0 %v3563
        %3611 = vmatprep.subr.mxu0 0.0
        %3612 = vmatpush1.msra.mxu0 %v3564
        %3613 = vmatprep.subr.mxu0 0.0
        %3614 = vmatpush1.msra.mxu0 %v3565
        %3615 = vmatprep.subr.mxu0 0.0
        %3616 = vmatpush1.msra.mxu0 %v3566
        %3617 = vmatprep.subr.mxu0 0.0
        %3618 = vmatpush1.msra.mxu0 %v3567
        %3619 = vmatprep.subr.mxu0 0.0
        %3620 = vmatpush1.msra.mxu0 %v3568
        %3621 = vmatprep.subr.mxu0 0.0
        %3622 = vmatpush1.msra.mxu0 %v3569
        %3623 = vmatprep.subr.mxu0 0.0
        %3624 = vmatpush1.msra.mxu0 %v3570
        %3625 = vmatprep.subr.mxu0 0.0
        %3626 = vmatpush1.msra.mxu0 %v3571
        %3627 = vmatprep.subr.mxu0 0.0
        %3628 = vmatpush1.msra.mxu0 %v3572
        %3629 = vmatprep.subr.mxu0 0.0
        %3630 = vmatpush1.msra.mxu0 %v3573
        %3631 = vmatprep.subr.mxu0 0.0
        %3632 = vmatpush1.msra.mxu0 %v3574
        %3633 = vmatprep.subr.mxu0 0.0
        %3634 = vmatpush1.msra.mxu0 %v3575
        %3635 = vmatprep.subr.mxu0 0.0
        %3636 = vmatpush1.msra.mxu0 %v3576
        %3637 = vmatprep.subr.mxu0 0.0
        %3638 = vmatpush1.msra.mxu0 %v3577
        %3639 = vmatprep.subr.mxu0 0.0
        %3640 = vmatpush1.msra.mxu0 %v3578
        %3641 = vmatprep.subr.mxu0 0.0
        %3642 = vmatpush1.msra.mxu0 %v3579
        %3643 = vmatprep.subr.mxu0 0.0
        %3644 = vmatpush1.msra.mxu0 %v3580
        %3645 = vmatprep.subr.mxu0 0.0
        %3646 = vmatpush1.msra.mxu0 %v3581
        %3647 = vmatprep.subr.mxu0 0.0
        %3648 = vmatpush1.msra.mxu0 %v3582
        %3649 = vmatprep.subr.mxu0 0.0
        %3650 = vmatpush1.msra.mxu0 %v3583
        %3651 = vmatprep.subr.mxu0 0.0
        %3652 = vmatpush1.msra.mxu0 %v3584
        %3653 = vmatprep.subr.mxu0 0.0
        %3654 = vmatpush1.msra.mxu0 %v3585
        %3655 = vmatprep.subr.mxu0 0.0
        %3656 = vmatpush1.msra.mxu0 %v3586
        %3657 = vmatprep.subr.mxu0 0.0
        %3658 = vmatpush1.msra.mxu0 %v3587
        %3659 = vmatprep.subr.mxu0 0.0
        %3660 = vmatpush1.msra.mxu0 %v3588
        %3661 = vmatprep.subr.mxu0 0.0
        %3662 = vmatpush1.msra.mxu0 %v3589
        %3663 = vmatprep.subr.mxu0 0.0
        %3664 = vmatpush1.msra.mxu0 %v3590
        %3665 = vmatprep.subr.mxu0 0.0
        %3666 = vmatpush1.msra.mxu0 %v3591
        %3667 = vmatprep.mubr.f32.mxu0 %v3555
        %3668 = vmatmul.mubr.f32.gmra.mrb[0].mxu0 %v3554
        %v3669 = vpop.f32.mrb[0].mxu0
        %v3670 = vadd.f32 0.0, %v3669
        %v3671 = vpop.f32.mrb[0].mxu0
        %3672 = vmatprep.mubr.f32.mxu0 %v3558
        %3673 = vmatmul.mubr.f32.gmra.mrb[0].mxu0 %v3557
        %v3674 = vpop.f32.mrb[0].mxu0
        %v3675 = vadd.f32 0.0, %v3674
        %v3676 = vpop.f32.mrb[0].mxu0
        %3677 = vdwg.mxu0
        %3678 = vmatprep.subr.mxu0 0.0
        %3679 = vmatpush1.msra.mxu0 %v3592
        %3680 = vmatprep.subr.mxu0 0.0
        %3681 = vmatpush1.msra.mxu0 %v3593
        %3682 = vmatprep.subr.mxu0 0.0
        %3683 = vmatpush1.msra.mxu0 %v3594
        %3684 = vmatprep.subr.mxu0 0.0
        %3685 = vmatpush1.msra.mxu0 %v3595
        %3686 = vmatprep.subr.mxu0 0.0
        %3687 = vmatpush1.msra.mxu0 0.0
        %3688 = vmatprep.subr.mxu0 0.0
        %3689 = vmatpush1.msra.mxu0 0.0
        %3690 = vmatprep.subr.mxu0 0.0
        %3691 = vmatpush1.msra.mxu0 0.0
        %3692 = vmatprep.subr.mxu0 0.0
        %3693 = vmatpush1.msra.mxu0 0.0
        %3694 = vmatprep.subr.mxu0 0.0
        %3695 = vmatpush1.msra.mxu0 0.0
        %3696 = vmatprep.subr.mxu0 0.0
        %3697 = vmatpush1.msra.mxu0 0.0
        %3698 = vmatprep.subr.mxu0 0.0
        %3699 = vmatpush1.msra.mxu0 0.0
        %3700 = vmatprep.subr.mxu0 0.0
        %3701 = vmatpush1.msra.mxu0 0.0
        %3702 = vmatprep.subr.mxu0 0.0
        %3703 = vmatpush1.msra.mxu0 0.0
        %3704 = vmatprep.subr.mxu0 0.0
        %3705 = vmatpush1.msra.mxu0 0.0
        %3706 = vmatprep.subr.mxu0 0.0
        %3707 = vmatpush1.msra.mxu0 0.0
        %3708 = vmatprep.subr.mxu0 0.0
        %3709 = vmatpush1.msra.mxu0 0.0
        %3710 = vmatprep.subr.mxu0 0.0
        %3711 = vmatpush1.msra.mxu0 0.0
        %3712 = vmatprep.subr.mxu0 0.0
        %3713 = vmatpush1.msra.mxu0 0.0
        %3714 = vmatprep.subr.mxu0 0.0
        %3715 = vmatpush1.msra.mxu0 0.0
        %3716 = vmatprep.subr.mxu0 0.0
        %3717 = vmatpush1.msra.mxu0 0.0
        %3718 = vmatprep.subr.mxu0 0.0
        %3719 = vmatpush1.msra.mxu0 0.0
        %3720 = vmatprep.subr.mxu0 0.0
        %3721 = vmatpush1.msra.mxu0 0.0
        %3722 = vmatprep.subr.mxu0 0.0
        %3723 = vmatpush1.msra.mxu0 0.0
        %3724 = vmatprep.subr.mxu0 0.0
        %3725 = vmatpush1.msra.mxu0 0.0
        %3726 = vmatprep.subr.mxu0 0.0
        %3727 = vmatpush1.msra.mxu0 0.0
        %3728 = vmatprep.subr.mxu0 0.0
        %3729 = vmatpush1.msra.mxu0 0.0
        %3730 = vmatprep.subr.mxu0 0.0
        %3731 = vmatpush1.msra.mxu0 0.0
        %3732 = vmatprep.subr.mxu0 0.0
        %3733 = vmatpush1.msra.mxu0 0.0
        %3734 = vmatprep.subr.mxu0 0.0
        %3735 = vmatpush1.msra.mxu0 0.0
        %3736 = vmatprep.subr.mxu0 0.0
        %3737 = vmatpush1.msra.mxu0 0.0
        %3738 = vmatprep.subr.mxu0 0.0
        %3739 = vmatpush1.msra.mxu0 0.0
        %3740 = vmatprep.subr.mxu0 0.0
        %3741 = vmatpush1.msra.mxu0 0.0
        %3742 = vmatprep.mubr.f32.mxu0 0.0
        %3743 = vmatmul.mubr.f32.gmra.mrb[0].mxu0 %v3598
        %v3744 = vpop.f32.mrb[0].mxu0
        %v3745 = vadd.f32 %v3670, %v3744
        %v3746 = vpop.f32.mrb[0].mxu0
        %3747 = vmatprep.mubr.f32.mxu0 0.0
        %3748 = vmatmul.mubr.f32.gmra.mrb[0].mxu0 %v3601
        %v3749 = vpop.f32.mrb[0].mxu0
        %v3750 = vadd.f32 %v3675, %v3749
        %v3751 = vpop.f32.mrb[0].mxu0
        %3752 = vdwg.mxu0
        %v3753 = vld [vmem:[%s8] sm:$0x1]
        %v3755 = vlaneseq
        %v3756 = vshrl.u32 %v3755, 7
        %v3757 = vsub.s32 0, %v3756
        %v3758 = vrot.slane %v3753, %v3757
        %v3760 = vmul.f32 %v3745, %v3758
        %v3761 = vmul.f32 %v3750, %v3758
        %v3762 = vld [vmem:[%s9] sm:$0x1]
        %v3764 = vlaneseq
        %v3765 = vshrl.u32 %v3764, 7
        %v3766 = vsub.s32 0, %v3765
        %v3767 = vrot.slane %v3762, %v3766
        %v3769 = vadd.f32 %v3760, %v3767
        %v3770 = vadd.f32 %v3761, %v3767
        %v3771 = vmax.f32 %v3769, 0.0
        %v3772 = vmax.f32 %v3770, 0.0
        %v3773 = vlaneseq
        %vm3774 = vcmp.ge.s32.totalorder %v3773, 0
        %vm3775 = vcmp.lt.s32.totalorder %v3773, 64
        %vm3776 = vmand %vm3774, %vm3775
        %3777 = vst.msk [vmem:[#allocation7] sm:$0x1] %vm3776, %v3771
        %v3780 = vunpack.c.l.s4 1966171168
        %v3781 = vunpack.c.0.s8 %v3780
        %v3782 = vlaneseq
        %v3783 = vshrl.u32 %v3782, 7
        %v3784 = vsub.s32 %v3781, %v3783
        %v3785 = vrot.slane %v3771, %v3784
        %v3786 = vcombine.high %v3785, %v3785
        %v3788 = vunpack.c.l.s4 1966171168
        %v3789 = vunpack.c.0.s8 %v3788
        %v3790 = vlaneseq
        %v3791 = vshrl.u32 %v3790, 7
        %v3792 = vsub.s32 %v3789, %v3791
        %v3793 = vrot.slane %v3785, %v3792
        %v3795 = vunpack.c.l.s4 1966171168
        %v3796 = vunpack.c.0.s8 %v3795
        %v3797 = vlaneseq
        %v3798 = vshrl.u32 %v3797, 7
        %v3799 = vsub.s32 %v3796, %v3798
        %v3800 = vrot.slane %v3786, %v3799
        %3801 = vrot.lane.b32.xlu0 %v3800, 64
        %v3802 = vpop.permute.xlu0 %3801
        %vm3804 = vcmp.ge.s32.totalorder %v3773, 64
        %vm3805 = vcmp.lt.s32.totalorder %v3773, 128
        %vm3806 = vmand %vm3804, %vm3805
        %3807 = vst.msk [vmem:[#allocation7] sm:$0x1] %vm3806, %v3802
        %v3808 = vcombine.high %v3793, %v3793
        %3810 = vst.msk [vmem:[#allocation7 + $0x1] sm:$0x1] %vm3776, %v3808
        %v3811 = vcombine.high %v3800, %v3800
        %3812 = vrot.lane.b32.xlu0 %v3811, 64
        %v3813 = vpop.permute.xlu0 %3812
        %3815 = vst.msk [vmem:[#allocation7 + $0x1] sm:$0x1] %vm3806, %v3813
        %v3816 = vcombine.high %v3771, %v3771
        %v3818 = vunpack.c.l.s4 1966171168
        %v3819 = vunpack.c.0.s8 %v3818
        %v3820 = vlaneseq
        %v3821 = vshrl.u32 %v3820, 7
        %v3822 = vsub.s32 %v3819, %v3821
        %v3823 = vrot.slane %v3816, %v3822
        %v3825 = vunpack.c.l.s4 1966171168
        %v3826 = vunpack.c.0.s8 %v3825
        %v3827 = vlaneseq
        %v3828 = vshrl.u32 %v3827, 7
        %v3829 = vsub.s32 %v3826, %v3828
        %v3830 = vrot.slane %v3823, %v3829
        %3832 = vst.msk [vmem:[#allocation7 + $0x2] sm:$0x1] %vm3776, %v3830
        %v3833 = vcombine.high %v3823, %v3823
        %v3835 = vunpack.c.l.s4 1966171168
        %v3836 = vunpack.c.0.s8 %v3835
        %v3837 = vlaneseq
        %v3838 = vshrl.u32 %v3837, 7
        %v3839 = vsub.s32 %v3836, %v3838
        %v3840 = vrot.slane %v3833, %v3839
        %3841 = vrot.lane.b32.xlu0 %v3840, 64
        %v3842 = vpop.permute.xlu0 %3841
        %3844 = vst.msk [vmem:[#allocation7 + $0x2] sm:$0x1] %vm3806, %v3842
        %v3845 = vcombine.high %v3830, %v3830
        %3847 = vst.msk [vmem:[#allocation7 + $0x3] sm:$0x1] %vm3776, %v3845
        %v3848 = vcombine.high %v3840, %v3840
        %3849 = vrot.lane.b32.xlu0 %v3848, 64
        %v3850 = vpop.permute.xlu0 %3849
        %3852 = vst.msk [vmem:[#allocation7 + $0x3] sm:$0x1] %vm3806, %v3850
        %3853 = vst.msk [vmem:[#allocation7 + $0x4] sm:$0x1] %vm3776, %v3772
        %v3856 = vunpack.c.l.s4 1966171168
        %v3857 = vunpack.c.0.s8 %v3856
        %v3858 = vlaneseq
        %v3859 = vshrl.u32 %v3858, 7
        %v3860 = vsub.s32 %v3857, %v3859
        %v3861 = vrot.slane %v3772, %v3860
        %v3862 = vcombine.high %v3861, %v3861
        %v3864 = vunpack.c.l.s4 1966171168
        %v3865 = vunpack.c.0.s8 %v3864
        %v3866 = vlaneseq
        %v3867 = vshrl.u32 %v3866, 7
        %v3868 = vsub.s32 %v3865, %v3867
        %v3869 = vrot.slane %v3861, %v3868
        %v3871 = vunpack.c.l.s4 1966171168
        %v3872 = vunpack.c.0.s8 %v3871
        %v3873 = vlaneseq
        %v3874 = vshrl.u32 %v3873, 7
        %v3875 = vsub.s32 %v3872, %v3874
        %v3876 = vrot.slane %v3862, %v3875
        %3877 = vrot.lane.b32.xlu0 %v3876, 64
        %v3878 = vpop.permute.xlu0 %3877
        %3880 = vst.msk [vmem:[#allocation7 + $0x4] sm:$0x1] %vm3806, %v3878
        %v3881 = vcombine.high %v3869, %v3869
        %3883 = vst.msk [vmem:[#allocation7 + $0x5] sm:$0x1] %vm3776, %v3881
        %v3884 = vcombine.high %v3876, %v3876
        %3885 = vrot.lane.b32.xlu0 %v3884, 64
        %v3886 = vpop.permute.xlu0 %3885
        %3888 = vst.msk [vmem:[#allocation7 + $0x5] sm:$0x1] %vm3806, %v3886
        %v3889 = vcombine.high %v3772, %v3772
        %v3891 = vunpack.c.l.s4 1966171168
        %v3892 = vunpack.c.0.s8 %v3891
        %v3893 = vlaneseq
        %v3894 = vshrl.u32 %v3893, 7
        %v3895 = vsub.s32 %v3892, %v3894
        %v3896 = vrot.slane %v3889, %v3895
        %v3898 = vunpack.c.l.s4 1966171168
        %v3899 = vunpack.c.0.s8 %v3898
        %v3900 = vlaneseq
        %v3901 = vshrl.u32 %v3900, 7
        %v3902 = vsub.s32 %v3899, %v3901
        %v3903 = vrot.slane %v3896, %v3902
        %3905 = vst.msk [vmem:[#allocation7 + $0x6] sm:$0x1] %vm3776, %v3903
        %v3906 = vcombine.high %v3896, %v3896
        %v3908 = vunpack.c.l.s4 1966171168
        %v3909 = vunpack.c.0.s8 %v3908
        %v3910 = vlaneseq
        %v3911 = vshrl.u32 %v3910, 7
        %v3912 = vsub.s32 %v3909, %v3911
        %v3913 = vrot.slane %v3906, %v3912
        %3914 = vrot.lane.b32.xlu0 %v3913, 64
        %v3915 = vpop.permute.xlu0 %3914
        %3917 = vst.msk [vmem:[#allocation7 + $0x6] sm:$0x1] %vm3806, %v3915
        %v3918 = vcombine.high %v3903, %v3903
        %3920 = vst.msk [vmem:[#allocation7 + $0x7] sm:$0x1] %vm3776, %v3918
        %v3921 = vcombine.high %v3913, %v3913
        %3922 = vrot.lane.b32.xlu0 %v3921, 64
        %v3923 = vpop.permute.xlu0 %3922
        %3925 = vst.msk [vmem:[#allocation7 + $0x7] sm:$0x1] %vm3806, %v3923
        %v3926 = vld [vmem:[#allocation7] sm:$0xff]
        %v3927 = vld [vmem:[%s10] sm:$0xff]
        %v3928 = vld [vmem:[%s10 + $0x8] sm:$0xff]
        %v3929 = vld [vmem:[%s10 + $0x10] sm:$0xff]
        %v3930 = vld [vmem:[%s10 + $0x18] sm:$0xff]
        %v3931 = vld [vmem:[%s10 + $0x20] sm:$0xff]
        %v3932 = vld [vmem:[%s10 + $0x28] sm:$0xff]
        %v3933 = vld [vmem:[%s10 + $0x30] sm:$0xff]
        %v3934 = vld [vmem:[%s10 + $0x38] sm:$0xff]
        %v3935 = vld [vmem:[%s10 + $0x40] sm:$0xff]
        %v3936 = vld [vmem:[%s10 + $0x48] sm:$0xff]
        %v3937 = vld [vmem:[%s10 + $0x50] sm:$0xff]
        %v3938 = vld [vmem:[%s10 + $0x58] sm:$0xff]
        %v3939 = vld [vmem:[%s10 + $0x60] sm:$0xff]
        %v3940 = vld [vmem:[%s10 + $0x68] sm:$0xff]
        %v3941 = vld [vmem:[%s10 + $0x70] sm:$0xff]
        %v3942 = vld [vmem:[%s10 + $0x78] sm:$0xff]
        %v3943 = vld [vmem:[%s10 + $0x80] sm:$0xff]
        %v3944 = vld [vmem:[%s10 + $0x88] sm:$0xff]
        %v3945 = vld [vmem:[%s10 + $0x90] sm:$0xff]
        %v3946 = vld [vmem:[%s10 + $0x98] sm:$0xff]
        %v3947 = vld [vmem:[%s10 + $0xa0] sm:$0xff]
        %v3948 = vld [vmem:[%s10 + $0xa8] sm:$0xff]
        %v3949 = vld [vmem:[%s10 + $0xb0] sm:$0xff]
        %v3950 = vld [vmem:[%s10 + $0xb8] sm:$0xff]
        %v3951 = vld [vmem:[%s10 + $0xc0] sm:$0xff]
        %v3952 = vld [vmem:[%s10 + $0xc8] sm:$0xff]
        %v3953 = vld [vmem:[%s10 + $0xd0] sm:$0xff]
        %v3954 = vld [vmem:[%s10 + $0xd8] sm:$0xff]
        %v3955 = vld [vmem:[%s10 + $0xe0] sm:$0xff]
        %v3956 = vld [vmem:[%s10 + $0xe8] sm:$0xff]
        %v3957 = vld [vmem:[%s10 + $0xf0] sm:$0xff]
        %v3958 = vld [vmem:[%s10 + $0xf8] sm:$0xff]
        %v3959 = vld [vmem:[%s10 + $0x100] sm:$0xff]
        %v3960 = vld [vmem:[%s10 + $0x108] sm:$0xff]
        %v3961 = vld [vmem:[%s10 + $0x110] sm:$0xff]
        %v3962 = vld [vmem:[%s10 + $0x118] sm:$0xff]
        %v3963 = vld [vmem:[%s10 + $0x120] sm:$0xff]
        %v3964 = vld [vmem:[%s10 + $0x128] sm:$0xff]
        %v3965 = vld [vmem:[%s10 + $0x130] sm:$0xff]
        %v3966 = vld [vmem:[%s10 + $0x138] sm:$0xff]
        %v3967 = vld [vmem:[%s10 + $0x140] sm:$0xff]
        %v3968 = vld [vmem:[%s10 + $0x148] sm:$0xff]
        %v3969 = vld [vmem:[%s10 + $0x150] sm:$0xff]
        %v3970 = vld [vmem:[%s10 + $0x158] sm:$0xff]
        %v3971 = vld [vmem:[%s10 + $0x160] sm:$0xff]
        %v3972 = vld [vmem:[%s10 + $0x168] sm:$0xff]
        %v3973 = vld [vmem:[%s10 + $0x170] sm:$0xff]
        %v3974 = vld [vmem:[%s10 + $0x178] sm:$0xff]
        %v3975 = vld [vmem:[%s10 + $0x180] sm:$0xff]
        %v3976 = vld [vmem:[%s10 + $0x188] sm:$0xff]
        %v3977 = vld [vmem:[%s10 + $0x190] sm:$0xff]
        %v3978 = vld [vmem:[%s10 + $0x198] sm:$0xff]
        %v3979 = vld [vmem:[%s10 + $0x1a0] sm:$0xff]
        %v3980 = vld [vmem:[%s10 + $0x1a8] sm:$0xff]
        %v3981 = vld [vmem:[%s10 + $0x1b0] sm:$0xff]
        %v3982 = vld [vmem:[%s10 + $0x1b8] sm:$0xff]
        %v3983 = vld [vmem:[%s10 + $0x1c0] sm:$0xff]
        %v3984 = vld [vmem:[%s10 + $0x1c8] sm:$0xff]
        %v3985 = vld [vmem:[%s10 + $0x1d0] sm:$0xff]
        %v3986 = vld [vmem:[%s10 + $0x1d8] sm:$0xff]
        %v3987 = vld [vmem:[%s10 + $0x1e0] sm:$0xff]
        %v3988 = vld [vmem:[%s10 + $0x1e8] sm:$0xff]
        %v3989 = vld [vmem:[%s10 + $0x1f0] sm:$0xff]
        %v3990 = vld [vmem:[%s10 + $0x1f8] sm:$0xff]
        %v3991 = vld [vmem:[%s10 + $0x200] sm:$0xff]
        %v3992 = vld [vmem:[%s10 + $0x208] sm:$0xff]
        %v3993 = vld [vmem:[%s10 + $0x210] sm:$0xff]
        %v3994 = vld [vmem:[%s10 + $0x218] sm:$0xff]
        %v3995 = vld [vmem:[%s10 + $0x220] sm:$0xff]
        %v3996 = vld [vmem:[%s10 + $0x228] sm:$0xff]
        %v3997 = vld [vmem:[%s10 + $0x230] sm:$0xff]
        %v3998 = vld [vmem:[%s10 + $0x238] sm:$0xff]
        %v3999 = vld [vmem:[%s10 + $0x240] sm:$0xff]
        %v4000 = vld [vmem:[%s10 + $0x248] sm:$0xff]
        %v4001 = vld [vmem:[%s10 + $0x250] sm:$0xff]
        %v4002 = vld [vmem:[%s10 + $0x258] sm:$0xff]
        %v4003 = vld [vmem:[%s10 + $0x260] sm:$0xff]
        %v4004 = vld [vmem:[%s10 + $0x268] sm:$0xff]
        %v4005 = vld [vmem:[%s10 + $0x270] sm:$0xff]
        %v4006 = vld [vmem:[%s10 + $0x278] sm:$0xff]
        %v4007 = vld [vmem:[%s10 + $0x280] sm:$0xff]
        %v4008 = vld [vmem:[%s10 + $0x288] sm:$0xff]
        %v4009 = vld [vmem:[%s10 + $0x290] sm:$0xff]
        %v4010 = vld [vmem:[%s10 + $0x298] sm:$0xff]
        %v4011 = vld [vmem:[%s10 + $0x2a0] sm:$0xff]
        %v4012 = vld [vmem:[%s10 + $0x2a8] sm:$0xff]
        %v4013 = vld [vmem:[%s10 + $0x2b0] sm:$0xff]
        %v4014 = vld [vmem:[%s10 + $0x2b8] sm:$0xff]
        %v4015 = vld [vmem:[%s10 + $0x2c0] sm:$0xff]
        %v4016 = vld [vmem:[%s10 + $0x2c8] sm:$0xff]
        %v4017 = vld [vmem:[%s10 + $0x2d0] sm:$0xff]
        %v4018 = vld [vmem:[%s10 + $0x2d8] sm:$0xff]
        %v4019 = vld [vmem:[%s10 + $0x2e0] sm:$0xff]
        %v4020 = vld [vmem:[%s10 + $0x2e8] sm:$0xff]
        %v4021 = vld [vmem:[%s10 + $0x2f0] sm:$0xff]
        %v4022 = vld [vmem:[%s10 + $0x2f8] sm:$0xff]
        %v4023 = vld [vmem:[%s10 + $0x300] sm:$0xff]
        %v4024 = vld [vmem:[%s10 + $0x308] sm:$0xff]
        %v4025 = vld [vmem:[%s10 + $0x310] sm:$0xff]
        %v4026 = vld [vmem:[%s10 + $0x318] sm:$0xff]
        %v4027 = vld [vmem:[%s10 + $0x320] sm:$0xff]
        %v4028 = vld [vmem:[%s10 + $0x328] sm:$0xff]
        %v4029 = vld [vmem:[%s10 + $0x330] sm:$0xff]
        %v4030 = vld [vmem:[%s10 + $0x338] sm:$0xff]
        %v4031 = vld [vmem:[%s10 + $0x340] sm:$0xff]
        %v4032 = vld [vmem:[%s10 + $0x348] sm:$0xff]
        %v4033 = vld [vmem:[%s10 + $0x350] sm:$0xff]
        %v4034 = vld [vmem:[%s10 + $0x358] sm:$0xff]
        %v4035 = vld [vmem:[%s10 + $0x360] sm:$0xff]
        %v4036 = vld [vmem:[%s10 + $0x368] sm:$0xff]
        %v4037 = vld [vmem:[%s10 + $0x370] sm:$0xff]
        %v4038 = vld [vmem:[%s10 + $0x378] sm:$0xff]
        %v4039 = vld [vmem:[%s10 + $0x380] sm:$0xff]
        %v4040 = vld [vmem:[%s10 + $0x388] sm:$0xff]
        %v4041 = vld [vmem:[%s10 + $0x390] sm:$0xff]
        %v4042 = vld [vmem:[%s10 + $0x398] sm:$0xff]
        %v4043 = vld [vmem:[%s10 + $0x3a0] sm:$0xff]
        %v4044 = vld [vmem:[%s10 + $0x3a8] sm:$0xff]
        %v4045 = vld [vmem:[%s10 + $0x3b0] sm:$0xff]
        %v4046 = vld [vmem:[%s10 + $0x3b8] sm:$0xff]
        %v4047 = vld [vmem:[%s10 + $0x3c0] sm:$0xff]
        %v4048 = vld [vmem:[%s10 + $0x3c8] sm:$0xff]
        %v4049 = vld [vmem:[%s10 + $0x3d0] sm:$0xff]
        %v4050 = vld [vmem:[%s10 + $0x3d8] sm:$0xff]
        %v4051 = vld [vmem:[%s10 + $0x3e0] sm:$0xff]
        %v4052 = vld [vmem:[%s10 + $0x3e8] sm:$0xff]
        %v4053 = vld [vmem:[%s10 + $0x3f0] sm:$0xff]
        %v4054 = vld [vmem:[%s10 + $0x3f8] sm:$0xff]
        %v4055 = vld [vmem:[%s11] sm:$0x1]
        %v4057 = vlaneseq
        %v4058 = vshrl.u32 %v4057, 7
        %v4059 = vsub.s32 0, %v4058
        %v4060 = vrot.slane %v3926, %v4059
        %v4061 = vlaneseq
        %v4062 = vshrl.u32 %v4061, 7
        %v4063 = vsub.s32 1, %v4062
        %v4064 = vrot.slane %v3926, %v4063
        %v4065 = vlaneseq
        %v4066 = vshrl.u32 %v4065, 7
        %v4067 = vsub.s32 2, %v4066
        %v4068 = vrot.slane %v3926, %v4067
        %v4069 = vlaneseq
        %v4070 = vshrl.u32 %v4069, 7
        %v4071 = vsub.s32 3, %v4070
        %v4072 = vrot.slane %v3926, %v4071
        %v4073 = vlaneseq
        %v4074 = vshrl.u32 %v4073, 7
        %v4075 = vsub.s32 4, %v4074
        %v4076 = vrot.slane %v3926, %v4075
        %v4077 = vlaneseq
        %v4078 = vshrl.u32 %v4077, 7
        %v4079 = vsub.s32 5, %v4078
        %v4080 = vrot.slane %v3926, %v4079
        %v4081 = vlaneseq
        %v4082 = vshrl.u32 %v4081, 7
        %v4083 = vsub.s32 6, %v4082
        %v4084 = vrot.slane %v3926, %v4083
        %v4085 = vlaneseq
        %v4086 = vshrl.u32 %v4085, 7
        %v4087 = vsub.s32 7, %v4086
        %v4088 = vrot.slane %v3926, %v4087
        %4097 = vmatprep.subr.mxu0 0.0
        %4098 = vmatpush1.msra.mxu0 %v3927
        %4099 = vmatprep.subr.mxu0 0.0
        %4100 = vmatpush1.msra.mxu0 %v3928
        %4101 = vmatprep.subr.mxu0 0.0
        %4102 = vmatpush1.msra.mxu0 %v3929
        %4103 = vmatprep.subr.mxu0 0.0
        %4104 = vmatpush1.msra.mxu0 %v3930
        %4105 = vmatprep.subr.mxu0 0.0
        %4106 = vmatpush1.msra.mxu0 %v3931
        %4107 = vmatprep.subr.mxu0 0.0
        %4108 = vmatpush1.msra.mxu0 %v3932
        %4109 = vmatprep.subr.mxu0 0.0
        %4110 = vmatpush1.msra.mxu0 %v3933
        %4111 = vmatprep.subr.mxu0 0.0
        %4112 = vmatpush1.msra.mxu0 %v3934
        %4113 = vmatprep.subr.mxu0 0.0
        %4114 = vmatpush1.msra.mxu0 %v3935
        %4115 = vmatprep.subr.mxu0 0.0
        %4116 = vmatpush1.msra.mxu0 %v3936
        %4117 = vmatprep.subr.mxu0 0.0
        %4118 = vmatpush1.msra.mxu0 %v3937
        %4119 = vmatprep.subr.mxu0 0.0
        %4120 = vmatpush1.msra.mxu0 %v3938
        %4121 = vmatprep.subr.mxu0 0.0
        %4122 = vmatpush1.msra.mxu0 %v3939
        %4123 = vmatprep.subr.mxu0 0.0
        %4124 = vmatpush1.msra.mxu0 %v3940
        %4125 = vmatprep.subr.mxu0 0.0
        %4126 = vmatpush1.msra.mxu0 %v3941
        %4127 = vmatprep.subr.mxu0 0.0
        %4128 = vmatpush1.msra.mxu0 %v3942
        %4129 = vmatprep.subr.mxu0 0.0
        %4130 = vmatpush1.msra.mxu0 %v3943
        %4131 = vmatprep.subr.mxu0 0.0
        %4132 = vmatpush1.msra.mxu0 %v3944
        %4133 = vmatprep.subr.mxu0 0.0
        %4134 = vmatpush1.msra.mxu0 %v3945
        %4135 = vmatprep.subr.mxu0 0.0
        %4136 = vmatpush1.msra.mxu0 %v3946
        %4137 = vmatprep.subr.mxu0 0.0
        %4138 = vmatpush1.msra.mxu0 %v3947
        %4139 = vmatprep.subr.mxu0 0.0
        %4140 = vmatpush1.msra.mxu0 %v3948
        %4141 = vmatprep.subr.mxu0 0.0
        %4142 = vmatpush1.msra.mxu0 %v3949
        %4143 = vmatprep.subr.mxu0 0.0
        %4144 = vmatpush1.msra.mxu0 %v3950
        %4145 = vmatprep.subr.mxu0 0.0
        %4146 = vmatpush1.msra.mxu0 %v3951
        %4147 = vmatprep.subr.mxu0 0.0
        %4148 = vmatpush1.msra.mxu0 %v3952
        %4149 = vmatprep.subr.mxu0 0.0
        %4150 = vmatpush1.msra.mxu0 %v3953
        %4151 = vmatprep.subr.mxu0 0.0
        %4152 = vmatpush1.msra.mxu0 %v3954
        %4153 = vmatprep.subr.mxu0 0.0
        %4154 = vmatpush1.msra.mxu0 %v3955
        %4155 = vmatprep.subr.mxu0 0.0
        %4156 = vmatpush1.msra.mxu0 %v3956
        %4157 = vmatprep.subr.mxu0 0.0
        %4158 = vmatpush1.msra.mxu0 %v3957
        %4159 = vmatprep.subr.mxu0 0.0
        %4160 = vmatpush1.msra.mxu0 %v3958
        %4161 = vmatprep.mubr.f32.mxu0 %v4064
        %4162 = vmatmul.mubr.f32.gmra.mrb[0].mxu0 %v4060
        %v4163 = vpop.f32.mrb[0].mxu0
        %v4164 = vadd.f32 %v4055, %v4163
        %v4165 = vpop.f32.mrb[0].mxu0
        %4166 = vdwg.mxu0
        %4167 = vmatprep.subr.mxu0 0.0
        %4168 = vmatpush1.msra.mxu0 %v3959
        %4169 = vmatprep.subr.mxu0 0.0
        %4170 = vmatpush1.msra.mxu0 %v3960
        %4171 = vmatprep.subr.mxu0 0.0
        %4172 = vmatpush1.msra.mxu0 %v3961
        %4173 = vmatprep.subr.mxu0 0.0
        %4174 = vmatpush1.msra.mxu0 %v3962
        %4175 = vmatprep.subr.mxu0 0.0
        %4176 = vmatpush1.msra.mxu0 %v3963
        %4177 = vmatprep.subr.mxu0 0.0
        %4178 = vmatpush1.msra.mxu0 %v3964
        %4179 = vmatprep.subr.mxu0 0.0
        %4180 = vmatpush1.msra.mxu0 %v3965
        %4181 = vmatprep.subr.mxu0 0.0
        %4182 = vmatpush1.msra.mxu0 %v3966
        %4183 = vmatprep.subr.mxu0 0.0
        %4184 = vmatpush1.msra.mxu0 %v3967
        %4185 = vmatprep.subr.mxu0 0.0
        %4186 = vmatpush1.msra.mxu0 %v3968
        %4187 = vmatprep.subr.mxu0 0.0
        %4188 = vmatpush1.msra.mxu0 %v3969
        %4189 = vmatprep.subr.mxu0 0.0
        %4190 = vmatpush1.msra.mxu0 %v3970
        %4191 = vmatprep.subr.mxu0 0.0
        %4192 = vmatpush1.msra.mxu0 %v3971
        %4193 = vmatprep.subr.mxu0 0.0
        %4194 = vmatpush1.msra.mxu0 %v3972
        %4195 = vmatprep.subr.mxu0 0.0
        %4196 = vmatpush1.msra.mxu0 %v3973
        %4197 = vmatprep.subr.mxu0 0.0
        %4198 = vmatpush1.msra.mxu0 %v3974
        %4199 = vmatprep.subr.mxu0 0.0
        %4200 = vmatpush1.msra.mxu0 %v3975
        %4201 = vmatprep.subr.mxu0 0.0
        %4202 = vmatpush1.msra.mxu0 %v3976
        %4203 = vmatprep.subr.mxu0 0.0
        %4204 = vmatpush1.msra.mxu0 %v3977
        %4205 = vmatprep.subr.mxu0 0.0
        %4206 = vmatpush1.msra.mxu0 %v3978
        %4207 = vmatprep.subr.mxu0 0.0
        %4208 = vmatpush1.msra.mxu0 %v3979
        %4209 = vmatprep.subr.mxu0 0.0
        %4210 = vmatpush1.msra.mxu0 %v3980
        %4211 = vmatprep.subr.mxu0 0.0
        %4212 = vmatpush1.msra.mxu0 %v3981
        %4213 = vmatprep.subr.mxu0 0.0
        %4214 = vmatpush1.msra.mxu0 %v3982
        %4215 = vmatprep.subr.mxu0 0.0
        %4216 = vmatpush1.msra.mxu0 %v3983
        %4217 = vmatprep.subr.mxu0 0.0
        %4218 = vmatpush1.msra.mxu0 %v3984
        %4219 = vmatprep.subr.mxu0 0.0
        %4220 = vmatpush1.msra.mxu0 %v3985
        %4221 = vmatprep.subr.mxu0 0.0
        %4222 = vmatpush1.msra.mxu0 %v3986
        %4223 = vmatprep.subr.mxu0 0.0
        %4224 = vmatpush1.msra.mxu0 %v3987
        %4225 = vmatprep.subr.mxu0 0.0
        %4226 = vmatpush1.msra.mxu0 %v3988
        %4227 = vmatprep.subr.mxu0 0.0
        %4228 = vmatpush1.msra.mxu0 %v3989
        %4229 = vmatprep.subr.mxu0 0.0
        %4230 = vmatpush1.msra.mxu0 %v3990
        %4231 = vmatprep.mubr.f32.mxu0 %v4072
        %4232 = vmatmul.mubr.f32.gmra.mrb[0].mxu0 %v4068
        %v4233 = vpop.f32.mrb[0].mxu0
        %v4234 = vadd.f32 %v4164, %v4233
        %v4235 = vpop.f32.mrb[0].mxu0
        %4236 = vdwg.mxu0
        %4237 = vmatprep.subr.mxu0 0.0
        %4238 = vmatpush1.msra.mxu0 %v3991
        %4239 = vmatprep.subr.mxu0 0.0
        %4240 = vmatpush1.msra.mxu0 %v3992
        %4241 = vmatprep.subr.mxu0 0.0
        %4242 = vmatpush1.msra.mxu0 %v3993
        %4243 = vmatprep.subr.mxu0 0.0
        %4244 = vmatpush1.msra.mxu0 %v3994
        %4245 = vmatprep.subr.mxu0 0.0
        %4246 = vmatpush1.msra.mxu0 %v3995
        %4247 = vmatprep.subr.mxu0 0.0
        %4248 = vmatpush1.msra.mxu0 %v3996
        %4249 = vmatprep.subr.mxu0 0.0
        %4250 = vmatpush1.msra.mxu0 %v3997
        %4251 = vmatprep.subr.mxu0 0.0
        %4252 = vmatpush1.msra.mxu0 %v3998
        %4253 = vmatprep.subr.mxu0 0.0
        %4254 = vmatpush1.msra.mxu0 %v3999
        %4255 = vmatprep.subr.mxu0 0.0
        %4256 = vmatpush1.msra.mxu0 %v4000
        %4257 = vmatprep.subr.mxu0 0.0
        %4258 = vmatpush1.msra.mxu0 %v4001
        %4259 = vmatprep.subr.mxu0 0.0
        %4260 = vmatpush1.msra.mxu0 %v4002
        %4261 = vmatprep.subr.mxu0 0.0
        %4262 = vmatpush1.msra.mxu0 %v4003
        %4263 = vmatprep.subr.mxu0 0.0
        %4264 = vmatpush1.msra.mxu0 %v4004
        %4265 = vmatprep.subr.mxu0 0.0
        %4266 = vmatpush1.msra.mxu0 %v4005
        %4267 = vmatprep.subr.mxu0 0.0
        %4268 = vmatpush1.msra.mxu0 %v4006
        %4269 = vmatprep.subr.mxu0 0.0
        %4270 = vmatpush1.msra.mxu0 %v4007
        %4271 = vmatprep.subr.mxu0 0.0
        %4272 = vmatpush1.msra.mxu0 %v4008
        %4273 = vmatprep.subr.mxu0 0.0
        %4274 = vmatpush1.msra.mxu0 %v4009
        %4275 = vmatprep.subr.mxu0 0.0
        %4276 = vmatpush1.msra.mxu0 %v4010
        %4277 = vmatprep.subr.mxu0 0.0
        %4278 = vmatpush1.msra.mxu0 %v4011
        %4279 = vmatprep.subr.mxu0 0.0
        %4280 = vmatpush1.msra.mxu0 %v4012
        %4281 = vmatprep.subr.mxu0 0.0
        %4282 = vmatpush1.msra.mxu0 %v4013
        %4283 = vmatprep.subr.mxu0 0.0
        %4284 = vmatpush1.msra.mxu0 %v4014
        %4285 = vmatprep.subr.mxu0 0.0
        %4286 = vmatpush1.msra.mxu0 %v4015
        %4287 = vmatprep.subr.mxu0 0.0
        %4288 = vmatpush1.msra.mxu0 %v4016
        %4289 = vmatprep.subr.mxu0 0.0
        %4290 = vmatpush1.msra.mxu0 %v4017
        %4291 = vmatprep.subr.mxu0 0.0
        %4292 = vmatpush1.msra.mxu0 %v4018
        %4293 = vmatprep.subr.mxu0 0.0
        %4294 = vmatpush1.msra.mxu0 %v4019
        %4295 = vmatprep.subr.mxu0 0.0
        %4296 = vmatpush1.msra.mxu0 %v4020
        %4297 = vmatprep.subr.mxu0 0.0
        %4298 = vmatpush1.msra.mxu0 %v4021
        %4299 = vmatprep.subr.mxu0 0.0
        %4300 = vmatpush1.msra.mxu0 %v4022
        %4301 = vmatprep.mubr.f32.mxu0 %v4080
        %4302 = vmatmul.mubr.f32.gmra.mrb[0].mxu0 %v4076
        %v4303 = vpop.f32.mrb[0].mxu0
        %v4304 = vadd.f32 %v4234, %v4303
        %v4305 = vpop.f32.mrb[0].mxu0
        %4306 = vdwg.mxu0
        %4307 = vmatprep.subr.mxu0 0.0
        %4308 = vmatpush1.msra.mxu0 %v4023
        %4309 = vmatprep.subr.mxu0 0.0
        %4310 = vmatpush1.msra.mxu0 %v4024
        %4311 = vmatprep.subr.mxu0 0.0
        %4312 = vmatpush1.msra.mxu0 %v4025
        %4313 = vmatprep.subr.mxu0 0.0
        %4314 = vmatpush1.msra.mxu0 %v4026
        %4315 = vmatprep.subr.mxu0 0.0
        %4316 = vmatpush1.msra.mxu0 %v4027
        %4317 = vmatprep.subr.mxu0 0.0
        %4318 = vmatpush1.msra.mxu0 %v4028
        %4319 = vmatprep.subr.mxu0 0.0
        %4320 = vmatpush1.msra.mxu0 %v4029
        %4321 = vmatprep.subr.mxu0 0.0
        %4322 = vmatpush1.msra.mxu0 %v4030
        %4323 = vmatprep.subr.mxu0 0.0
        %4324 = vmatpush1.msra.mxu0 %v4031
        %4325 = vmatprep.subr.mxu0 0.0
        %4326 = vmatpush1.msra.mxu0 %v4032
        %4327 = vmatprep.subr.mxu0 0.0
        %4328 = vmatpush1.msra.mxu0 %v4033
        %4329 = vmatprep.subr.mxu0 0.0
        %4330 = vmatpush1.msra.mxu0 %v4034
        %4331 = vmatprep.subr.mxu0 0.0
        %4332 = vmatpush1.msra.mxu0 %v4035
        %4333 = vmatprep.subr.mxu0 0.0
        %4334 = vmatpush1.msra.mxu0 %v4036
        %4335 = vmatprep.subr.mxu0 0.0
        %4336 = vmatpush1.msra.mxu0 %v4037
        %4337 = vmatprep.subr.mxu0 0.0
        %4338 = vmatpush1.msra.mxu0 %v4038
        %4339 = vmatprep.subr.mxu0 0.0
        %4340 = vmatpush1.msra.mxu0 %v4039
        %4341 = vmatprep.subr.mxu0 0.0
        %4342 = vmatpush1.msra.mxu0 %v4040
        %4343 = vmatprep.subr.mxu0 0.0
        %4344 = vmatpush1.msra.mxu0 %v4041
        %4345 = vmatprep.subr.mxu0 0.0
        %4346 = vmatpush1.msra.mxu0 %v4042
        %4347 = vmatprep.subr.mxu0 0.0
        %4348 = vmatpush1.msra.mxu0 %v4043
        %4349 = vmatprep.subr.mxu0 0.0
        %4350 = vmatpush1.msra.mxu0 %v4044
        %4351 = vmatprep.subr.mxu0 0.0
        %4352 = vmatpush1.msra.mxu0 %v4045
        %4353 = vmatprep.subr.mxu0 0.0
        %4354 = vmatpush1.msra.mxu0 %v4046
        %4355 = vmatprep.subr.mxu0 0.0
        %4356 = vmatpush1.msra.mxu0 %v4047
        %4357 = vmatprep.subr.mxu0 0.0
        %4358 = vmatpush1.msra.mxu0 %v4048
        %4359 = vmatprep.subr.mxu0 0.0
        %4360 = vmatpush1.msra.mxu0 %v4049
        %4361 = vmatprep.subr.mxu0 0.0
        %4362 = vmatpush1.msra.mxu0 %v4050
        %4363 = vmatprep.subr.mxu0 0.0
        %4364 = vmatpush1.msra.mxu0 %v4051
        %4365 = vmatprep.subr.mxu0 0.0
        %4366 = vmatpush1.msra.mxu0 %v4052
        %4367 = vmatprep.subr.mxu0 0.0
        %4368 = vmatpush1.msra.mxu0 %v4053
        %4369 = vmatprep.subr.mxu0 0.0
        %4370 = vmatpush1.msra.mxu0 %v4054
        %4371 = vmatprep.mubr.f32.mxu0 %v4088
        %4372 = vmatmul.mubr.f32.gmra.mrb[0].mxu0 %v4084
        %v4373 = vpop.f32.mrb[0].mxu0
        %v4374 = vadd.f32 %v4304, %v4373
        %v4375 = vpop.f32.mrb[0].mxu0
        %4376 = vdwg.mxu0
        %v4377 = vmax.f32 %v4374, 0.0
        %v4378 = vld [vmem:[%s12] sm:$0xff]
        %v4379 = vld [vmem:[%s12 + $0x8] sm:$0xff]
        %v4380 = vld [vmem:[%s12 + $0x10] sm:$0xff]
        %v4381 = vld [vmem:[%s12 + $0x18] sm:$0xff]
        %v4382 = vld [vmem:[%s12 + $0x20] sm:$0xff]
        %v4383 = vld [vmem:[%s12 + $0x28] sm:$0xff]
        %v4384 = vld [vmem:[%s12 + $0x30] sm:$0xff]
        %v4385 = vld [vmem:[%s12 + $0x38] sm:$0xff]
        %v4386 = vld [vmem:[%s12 + $0x40] sm:$0xff]
        %v4387 = vld [vmem:[%s12 + $0x48] sm:$0xff]
        %v4388 = vld [vmem:[%s12 + $0x50] sm:$0xff]
        %v4389 = vld [vmem:[%s12 + $0x58] sm:$0xff]
        %v4390 = vld [vmem:[%s12 + $0x60] sm:$0xff]
        %v4391 = vld [vmem:[%s12 + $0x68] sm:$0xff]
        %v4392 = vld [vmem:[%s12 + $0x70] sm:$0xff]
        %v4393 = vld [vmem:[%s12 + $0x78] sm:$0xff]
        %v4394 = vld [vmem:[%s13] sm:$0x1]
        %4395 = vmatprep.subr.mxu0 0.0
        %4396 = vmatpush1.msra.mxu0 %v4378
        %4397 = vmatprep.subr.mxu0 0.0
        %4398 = vmatpush1.msra.mxu0 %v4379
        %4399 = vmatprep.subr.mxu0 0.0
        %4400 = vmatpush1.msra.mxu0 %v4380
        %4401 = vmatprep.subr.mxu0 0.0
        %4402 = vmatpush1.msra.mxu0 %v4381
        %4403 = vmatprep.subr.mxu0 0.0
        %4404 = vmatpush1.msra.mxu0 %v4382
        %4405 = vmatprep.subr.mxu0 0.0
        %4406 = vmatpush1.msra.mxu0 %v4383
        %4407 = vmatprep.subr.mxu0 0.0
        %4408 = vmatpush1.msra.mxu0 %v4384
        %4409 = vmatprep.subr.mxu0 0.0
        %4410 = vmatpush1.msra.mxu0 %v4385
        %4411 = vmatprep.subr.mxu0 0.0
        %4412 = vmatpush1.msra.mxu0 %v4386
        %4413 = vmatprep.subr.mxu0 0.0
        %4414 = vmatpush1.msra.mxu0 %v4387
        %4415 = vmatprep.subr.mxu0 0.0
        %4416 = vmatpush1.msra.mxu0 %v4388
        %4417 = vmatprep.subr.mxu0 0.0
        %4418 = vmatpush1.msra.mxu0 %v4389
        %4419 = vmatprep.subr.mxu0 0.0
        %4420 = vmatpush1.msra.mxu0 %v4390
        %4421 = vmatprep.subr.mxu0 0.0
        %4422 = vmatpush1.msra.mxu0 %v4391
        %4423 = vmatprep.subr.mxu0 0.0
        %4424 = vmatpush1.msra.mxu0 %v4392
        %4425 = vmatprep.subr.mxu0 0.0
        %4426 = vmatpush1.msra.mxu0 %v4393
        %4427 = vmatprep.subr.mxu0 0.0
        %4428 = vmatpush1.msra.mxu0 0.0
        %4429 = vmatprep.subr.mxu0 0.0
        %4430 = vmatpush1.msra.mxu0 0.0
        %4431 = vmatprep.subr.mxu0 0.0
        %4432 = vmatpush1.msra.mxu0 0.0
        %4433 = vmatprep.subr.mxu0 0.0
        %4434 = vmatpush1.msra.mxu0 0.0
        %4435 = vmatprep.subr.mxu0 0.0
        %4436 = vmatpush1.msra.mxu0 0.0
        %4437 = vmatprep.subr.mxu0 0.0
        %4438 = vmatpush1.msra.mxu0 0.0
        %4439 = vmatprep.subr.mxu0 0.0
        %4440 = vmatpush1.msra.mxu0 0.0
        %4441 = vmatprep.subr.mxu0 0.0
        %4442 = vmatpush1.msra.mxu0 0.0
        %4443 = vmatprep.subr.mxu0 0.0
        %4444 = vmatpush1.msra.mxu0 0.0
        %4445 = vmatprep.subr.mxu0 0.0
        %4446 = vmatpush1.msra.mxu0 0.0
        %4447 = vmatprep.subr.mxu0 0.0
        %4448 = vmatpush1.msra.mxu0 0.0
        %4449 = vmatprep.subr.mxu0 0.0
        %4450 = vmatpush1.msra.mxu0 0.0
        %4451 = vmatprep.subr.mxu0 0.0
        %4452 = vmatpush1.msra.mxu0 0.0
        %4453 = vmatprep.subr.mxu0 0.0
        %4454 = vmatpush1.msra.mxu0 0.0
        %4455 = vmatprep.subr.mxu0 0.0
        %4456 = vmatpush1.msra.mxu0 0.0
        %4457 = vmatprep.subr.mxu0 0.0
        %4458 = vmatpush1.msra.mxu0 0.0
        %4459 = vmatprep.mubr.f32.mxu0 0.0
        %4460 = vmatmul.mubr.f32.gmra.mrb[0].mxu0 %v4377
        %v4461 = vpop.f32.mrb[0].mxu0
        %v4462 = vadd.f32 %v4394, %v4461
        %v4463 = vpop.f32.mrb[0].mxu0
        %4464 = vdwg.mxu0
        %vm4465 = vcmask 8192
        %4466 = vst.msk [vmem:[%s459] sm:$0x1] %vm4465, %v4462
        %s4467 = sand.u32 %s335, 1
        %s4468 = scalar_lea.sflag [#allocation9], %s4467
        %s4469 = sand.u32 %s335, 1
        %s4470 = scalar_lea.vmem [#allocation8], %s4469
        // Predicated region
        $region77: #{tiny_convnet_forward.1} parent=75 // pred_check
          %p4471 = pneg %p345
        $region78: #{tiny_convnet_forward.1} parent=75 // pred_check_branch
          %4473 = sbr.rel (%p4471) target = $region80
        $region79: #{tiny_convnet_forward.1} parent=75 // pred_region
          %s4475 = ssub.s32 16, 16
          %4476 = vsyncadd %s4468, %s4475
          %s4477 = smul.addr %s28, 16
          %s4478 = scalar_lea.hbm %s14, %s4477
          %s4480 = sshll.u32 %s4470, 4
          %s4481 = int_to_ptr.vmem [resolvable:$true] %s4480
          %4483 = dma.vmem_to_hbm [thread:$0]  %s4481, 16, %s4478, %s4468
        $region80: #{tiny_convnet_forward.1} parent=75 // pred_fallthru
          _
      $region76: #{tiny_convnet_forward.1} parent=5 // pred_fallthru
        _
      %p4484 = scmp.le.s32.totalorder 2, %s23
      // Predicated region
      $region81: #{tiny_convnet_forward.1} parent=5 // pred_check
        %p4485 = pneg %p4484
      $region82: #{tiny_convnet_forward.1} parent=5 // pred_check_branch
        %4487 = sbr.rel (%p4485) target = $region84
      $region83: #{tiny_convnet_forward.1} parent=5 // pred_region
        %s4488 = ssub.s32 %s23, 2
        // Predicated region
        $region85: #{tiny_convnet_forward.1} parent=83 // pred_check
          %p4489 = pneg %p351
        $region86: #{tiny_convnet_forward.1} parent=83 // pred_check_branch
          %4491 = sbr.rel (%p4489) target = $region88
        $region87: #{tiny_convnet_forward.1} parent=83 // pred_region
          %s4492 = sand.u32 %s336, 1
          %s4493 = scalar_lea.sflag [#allocation9], %s4492
          %s4494 = sand.u32 %s336, 1
          %s4495 = scalar_lea.vmem [#allocation8], %s4494
          %4496 = dma.done %s4493, 16
        $region88: #{tiny_convnet_forward.1} parent=83 // pred_fallthru
          _
      $region84: #{tiny_convnet_forward.1} parent=5 // pred_fallthru
        _
    $region6: #{tiny_convnet_forward.1} parent=1 // loop_footer
      %s27 = sadd.s32 1, %s23
    $region7: #{tiny_convnet_forward.1} parent=1 // loop_footer_branch
      %22 = sbr.rel target = $region3
    $region8: #{tiny_convnet_forward.1} parent=1 // loop_exit
      _
    %4497 = vsyncpa [#allocation9], 1
    %s4498 = scalar_lea.sflag [#allocation9], 1
    %4499 = vsyncpa %s4498, 1

</llo_original>
